<compile_context>
chip_gen: v6e
topology: v6e:2x2x1
jax: 0.10.0
libtpu: 0.0.40
codegen_flags: <defaults>
</compile_context>

<pallas_src>
import functools

import jax
import jax.numpy as jnp
from jax.experimental import pallas as pl
from jax.experimental.pallas import tpu as pltpu

# 48 MiB: raises the default scoped-VMEM on v5e/v6e while leaving headroom
# below v7x's 64 MiB physical VMEM per TensorCore.
_COMPILER_PARAMS = pltpu.CompilerParams(vmem_limit_bytes=48 * 1024 * 1024)


# ----------------------------- Pallas kernels -----------------------------

def _matmul_bn_kernel(p_ref, w_ref, s_ref, b_ref, o_ref, *, relu):
    # p: (M, K) bf16  w: (K, OC) bf16  s,b: (1, OC) f32  o: (M, OC)
    acc = jnp.dot(p_ref[...], w_ref[...], preferred_element_type=jnp.float32)
    y = acc * s_ref[...] + b_ref[...]
    if relu:
        y = jnp.maximum(y, 0.0)
    o_ref[...] = y.astype(o_ref.dtype)


def _matmul_bn_add_relu_kernel(p_ref, w_ref, s_ref, b_ref, r_ref, o_ref):
    # conv3 + bn3 + residual add + relu of a (non-fused) bottleneck block
    acc = jnp.dot(p_ref[...], w_ref[...], preferred_element_type=jnp.float32)
    y = acc * s_ref[...] + b_ref[...] + r_ref[...].astype(jnp.float32)
    o_ref[...] = jnp.maximum(y, 0.0).astype(o_ref.dtype)


def _max9_kernel(x_ref, o_ref):
    # x: (9, R, L) lane-dense -> elementwise max over the 9 shifted pool views
    o_ref[...] = jnp.max(x_ref[...], axis=0)


def _head_kernel(f_ref, w_ref, b_ref, o_ref):
    # f: (N, HW, C) bf16, C lane-dense  w: (C, 120) f32  b: (1, 120)  o: (N, 120)
    pooled = jnp.mean(f_ref[...].astype(jnp.float32), axis=1)      # avg pool
    logits = jnp.dot(pooled, w_ref[...],
                     preferred_element_type=jnp.float32) + b_ref[...]
    m = jnp.max(logits, axis=-1, keepdims=True)                    # log_softmax
    z = logits - m
    lse = jnp.log(jnp.sum(jnp.exp(z), axis=-1, keepdims=True))
    o_ref[...] = z - lse


def _bottleneck_kernel(x_ref, m_ref, w1_ref, s1_ref, b1_ref,
                       w2_ref, s2_ref, b2_ref, w3_ref, s3_ref, b3_ref,
                       o_ref, t1_ref, acc_ref, *, wp2, guard):
    # Fused identity bottleneck (stride 1, no downsample).
    # x: (Mp, C4) bf16 in padded-flattened NHWC layout (border rows are zero)
    # m: (Mp, 1) f32 mask, 1 on interior rows / 0 on the spatial-padding rows
    # w1: (C4, P)  w2: (9, P, P) per-tap  w3: (P, C4)   scale/shift: (1, *) f32
    mp = x_ref.shape[0]
    x = x_ref[...]
    mask = m_ref[...]

    # conv1 (1x1) + bn1 + relu; re-zero the padding rows
    t1 = jnp.dot(x, w1_ref[...], preferred_element_type=jnp.float32)
    t1 = jnp.maximum(t1 * s1_ref[...] + b1_ref[...], 0.0) * mask

    # Stage t1 into a guarded VMEM buffer so the 9 row-shifted reads of the
    # 3x3 conv are always in bounds; guard rows = 0 (== conv zero padding).
    t1_ref[...] = jnp.zeros_like(t1_ref)
    t1_ref[pl.ds(guard, mp), :] = t1

    # conv2 (3x3, stride 1, pad 1) as 9 row-offset matmuls, accumulated in f32
    acc_ref[...] = jnp.zeros_like(acc_ref)
    for k in range(9):
        di, dj = k // 3, k % 3
        off = (di - 1) * wp2 + (dj - 1)
        a = t1_ref[pl.ds(guard + off, mp), :].astype(jnp.bfloat16)
        acc_ref[...] += jnp.dot(a, w2_ref[k], preferred_element_type=jnp.float32)
    t2 = jnp.maximum(acc_ref[...] * s2_ref[...] + b2_ref[...], 0.0) * mask

    # conv3 (1x1) + bn3 + residual add + relu; keep border rows exactly zero
    y = jnp.dot(t2.astype(jnp.bfloat16), w3_ref[...],
                preferred_element_type=jnp.float32)
    y = y * s3_ref[...] + b3_ref[...] + x.astype(jnp.float32)
    o_ref[...] = (jnp.maximum(y, 0.0) * mask).astype(o_ref.dtype)


# ----------------------------- pallas_call glue -----------------------------

def _full_spec(shape):
    nd = len(shape)
    return pl.BlockSpec(shape, lambda i, _nd=nd: (0,) * _nd)


def _call_full(kernel, out_shape, *args, cost=None):
    return pl.pallas_call(
        kernel,
        out_shape=out_shape,
        grid=(1,),
        in_specs=[_full_spec(a.shape) for a in args],
        out_specs=_full_spec(out_shape.shape),
        compiler_params=_COMPILER_PARAMS,
        cost_estimate=cost,
    )(*args)


def _matmul_bn(p, w, s, b, *, relu, out_dtype=jnp.bfloat16):
    m, k = p.shape
    oc = w.shape[1]
    cost = pl.CostEstimate(flops=2 * m * k * oc, transcendentals=0,
                           bytes_accessed=2 * (m * k + k * oc + m * oc))
    return _call_full(functools.partial(_matmul_bn_kernel, relu=relu),
                      jax.ShapeDtypeStruct((m, oc), out_dtype),
                      p, w, s, b, cost=cost)


def _im2col_nhwc(x, kh, kw, stride, pad):
    # x: (N, H, W, C) -> (N*OH*OW, kh*kw*C), K ordered (tap, c)
    n, h, w, c = x.shape
    oh = (h + 2 * pad - kh) // stride + 1
    ow = (w + 2 * pad - kw) // stride + 1
    if pad > 0:
        x = jnp.pad(x, ((0, 0), (pad, pad), (pad, pad), (0, 0)))
    cols = [x[:, i:i + stride * oh:stride, j:j + stride * ow:stride, :]
            for i in range(kh) for j in range(kw)]
    patches = jnp.concatenate(cols, axis=-1)
    return patches.reshape(n * oh * ow, kh * kw * c), oh, ow


# ----------------------------- layer wrappers -----------------------------

@jax.jit
def stem_pool(x, stem_w, stem_s, stem_b):
    # x: (N, 3, 64, 64) f32 NCHW -> padded-flattened (N*18*18, 64) bf16
    n = x.shape[0]
    x = jnp.transpose(x, (0, 2, 3, 1)).astype(jnp.bfloat16)   # one NHWC transpose
    patches, oh, ow = _im2col_nhwc(x, 7, 7, 2, 3)              # (N*32*32, 147)
    patches = jnp.pad(patches, ((0, 0), (0, stem_w.shape[0] - patches.shape[1])))
    y = _matmul_bn(patches, stem_w, stem_s, stem_b, relu=True)
    y = y.reshape(n, oh, ow, 64)

    # 3x3 / stride 2 / pad 1 max pool; activations are post-ReLU (>= 0) so
    # zero padding is equivalent to -inf padding.
    ph, pw = oh // 2, ow // 2
    yp = jnp.pad(y, ((0, 0), (1, 1), (1, 1), (0, 0)))
    views = [yp[:, i:i + 2 * ph:2, j:j + 2 * pw:2, :]
             for i in range(3) for j in range(3)]
    stacked = jnp.stack(views, axis=0).reshape(9, n * ph, pw * 64)   # lane-dense
    cost = pl.CostEstimate(flops=9 * n * ph * pw * 64, transcendentals=0,
                           bytes_accessed=2 * (stacked.size + n * ph * pw * 64))
    pooled = _call_full(_max9_kernel,
                        jax.ShapeDtypeStruct((n * ph, pw * 64), jnp.bfloat16),
                        stacked, cost=cost)
    pooled = pooled.reshape(n, ph, pw, 64)
    return jnp.pad(pooled, ((0, 0), (1, 1), (1, 1), (0, 0))).reshape(
        n * (ph + 2) * (pw + 2), 64)


@functools.partial(jax.jit, static_argnames=("h", "w", "stride"))
def first_block(xp, blk, *, h, w, stride):
    # First block of a stage (has downsample branch, possibly stride 2).
    c_in = xp.shape[1]
    n = xp.shape[0] // ((h + 2) * (w + 2))
    planes = blk["w1"].shape[1]
    c4 = blk["w3"].shape[1]
    x = xp.reshape(n, h + 2, w + 2, c_in)[:, 1:h + 1, 1:w + 1, :]

    # conv1 (1x1) + bn1 + relu
    t1 = _matmul_bn(x.reshape(n * h * w, c_in),
                    blk["w1"], blk["s1"], blk["b1"], relu=True)
    # conv2 (3x3, stride, pad 1) + bn2 + relu via NHWC im2col
    patches, oh, ow = _im2col_nhwc(t1.reshape(n, h, w, planes), 3, 3, stride, 1)
    t2 = _matmul_bn(patches, blk["w2"], blk["s2"], blk["b2"], relu=True)
    # downsample branch: conv (1x1, stride) + bn
    xs = x[:, ::stride, ::stride, :].reshape(n * oh * ow, c_in)
    idn = _matmul_bn(xs, blk["wd"], blk["sd"], blk["bd"], relu=False)
    # conv3 (1x1) + bn3 + residual add + relu
    m = n * oh * ow
    cost = pl.CostEstimate(flops=2 * m * planes * c4, transcendentals=0,
                           bytes_accessed=2 * (m * planes + planes * c4 + 2 * m * c4))
    out = _call_full(_matmul_bn_add_relu_kernel,
                     jax.ShapeDtypeStruct((m, c4), jnp.bfloat16),
                     t2, blk["w3"], blk["s3"], blk["b3"], idn, cost=cost)

    # Re-pad to the (N*(OH+2)*(OW+2), C) layout used by the fused blocks.
    out = out.reshape(n, oh, ow, c4)
    xp_new = jnp.pad(out, ((0, 0), (1, 1), (1, 1), (0, 0))).reshape(
        n * (oh + 2) * (ow + 2), c4)
    mask = jnp.pad(jnp.ones((n, oh, ow, 1), jnp.float32),
                   ((0, 0), (1, 1), (1, 1), (0, 0))).reshape(
        n * (oh + 2) * (ow + 2), 1)
    return xp_new, mask


@functools.partial(jax.jit, static_argnames=("w",))
def fused_block(xp, mask, blk, *, w):
    # Whole identity bottleneck block as one pallas_call (VMEM-resident temps).
    mp, c4 = xp.shape
    p = blk["w1"].shape[1]
    wp2 = w + 2
    guard = wp2 + 1
    cost = pl.CostEstimate(
        flops=2 * mp * p * (2 * c4 + 9 * p),
        transcendentals=0,
        bytes_accessed=2 * (2 * mp * c4 + 2 * c4 * p + 9 * p * p) + 4 * mp)
    kernel = functools.partial(_bottleneck_kernel, wp2=wp2, guard=guard)
    args = (xp, mask, blk["w1"], blk["s1"], blk["b1"],
            blk["w2"], blk["s2"], blk["b2"],
            blk["w3"], blk["s3"], blk["b3"])
    return pl.pallas_call(
        kernel,
        out_shape=jax.ShapeDtypeStruct((mp, c4), jnp.bfloat16),
        grid=(1,),
        in_specs=[_full_spec(a.shape) for a in args],
        out_specs=_full_spec((mp, c4)),
        scratch_shapes=[pltpu.VMEM((mp + 2 * guard, p), jnp.float32),
                        pltpu.VMEM((mp, p), jnp.float32)],
        compiler_params=_COMPILER_PARAMS,
        cost_estimate=cost,
    )(*args)


@functools.partial(jax.jit, static_argnames=("h", "w"))
def head(xp, fc_w, fc_b, *, h, w):
    # adaptive avg pool (1,1) + Linear(2048,120) + LogSoftmax, all in one kernel
    c = xp.shape[1]
    n = xp.shape[0] // ((h + 2) * (w + 2))
    feat = xp.reshape(n, h + 2, w + 2, c)[:, 1:h + 1, 1:w + 1, :]
    feat = feat.reshape(n, h * w, c)
    nclass = fc_w.shape[1]
    cost = pl.CostEstimate(flops=2 * n * c * nclass + n * h * w * c,
                           transcendentals=2 * n * nclass,
                           bytes_accessed=2 * feat.size + 4 * (fc_w.size + n * nclass))
    return _call_full(_head_kernel,
                      jax.ShapeDtypeStruct((n, nclass), jnp.float32),
                      feat, fc_w, fc_b, cost=cost)


# ----------------------------- parameters -----------------------------

def _conv_weight(key, oc, ic, kh, kw):
    fan_in = ic * kh * kw
    return (jax.random.normal(key, (oc, ic, kh, kw), jnp.float32)
            / jnp.sqrt(float(fan_in)))


def _bn_scale_shift(key, c):
    k1, k2, k3, k4 = jax.random.split(key, 4)
    gamma = 1.0 + 0.1 * jax.random.normal(k1, (c,), jnp.float32)
    beta = 0.1 * jax.random.normal(k2, (c,), jnp.float32)
    mean = 0.1 * jax.random.normal(k3, (c,), jnp.float32)
    var = 1.0 + 0.1 * jax.random.uniform(k4, (c,), jnp.float32)
    scale = gamma * jax.lax.rsqrt(var + 1e-5)
    shift = beta - mean * scale
    return scale.reshape(1, c), shift.reshape(1, c)


def _fold_1x1(w):           # (OC, IC, 1, 1) -> (IC, OC) bf16
    return jnp.transpose(w[:, :, 0, 0]).astype(jnp.bfloat16)


def _fold_kxk(w):           # (OC, IC, KH, KW) -> (KH*KW*IC, OC) bf16, tap-major
    oc, ic, kh, kw = w.shape
    return jnp.transpose(w, (2, 3, 1, 0)).reshape(kh * kw * ic, oc).astype(jnp.bfloat16)


def _fold_3x3_taps(w):      # (OC, IC, 3, 3) -> (9, IC, OC) bf16
    oc, ic, _, _ = w.shape
    return jnp.transpose(w, (2, 3, 1, 0)).reshape(9, ic, oc).astype(jnp.bfloat16)


def init_params(key):
    counter = [0]

    def nk():
        counter[0] += 1
        return jax.random.fold_in(key, counter[0])

    stem_w = _fold_kxk(_conv_weight(nk(), 64, 3, 7, 7))
    stem_w = jnp.pad(stem_w, ((0, 256 - stem_w.shape[0]), (0, 0)))   # K 147 -> 256
    stem_s, stem_b = _bn_scale_shift(nk(), 64)

    stages = []
    inplanes = 64
    for planes, nblocks, stride in ((64, 3, 1), (128, 8, 2), (256, 36, 2), (512, 3, 2)):
        c4 = planes * 4
        s1, b1 = _bn_scale_shift(nk(), planes)
        s2, b2 = _bn_scale_shift(nk(), planes)
        s3, b3 = _bn_scale_shift(nk(), c4)
        sd, bd = _bn_scale_shift(nk(), c4)
        first = {
            "w1": _fold_1x1(_conv_weight(nk(), planes, inplanes, 1, 1)),
            "s1": s1, "b1": b1,
            "w2": _fold_kxk(_conv_weight(nk(), planes, planes, 3, 3)),
            "s2": s2, "b2": b2,
            "w3": _fold_1x1(_conv_weight(nk(), c4, planes, 1, 1)),
            "s3": s3, "b3": b3,
            "wd": _fold_1x1(_conv_weight(nk(), c4, inplanes, 1, 1)),
            "sd": sd, "bd": bd,
        }
        rest = []
        for _ in range(nblocks - 1):
            r1, q1 = _bn_scale_shift(nk(), planes)
            r2, q2 = _bn_scale_shift(nk(), planes)
            r3, q3 = _bn_scale_shift(nk(), c4)
            rest.append({
                "w1": _fold_1x1(_conv_weight(nk(), planes, c4, 1, 1)),
                "s1": r1, "b1": q1,
                "w2": _fold_3x3_taps(_conv_weight(nk(), planes, planes, 3, 3)),
                "s2": r2, "b2": q2,
                "w3": _fold_1x1(_conv_weight(nk(), c4, planes, 1, 1)),
                "s3": r3, "b3": q3,
            })
        stages.append({"stride": stride, "first": first, "rest": rest})
        inplanes = c4

    fc_w = (jax.random.normal(nk(), (120, 2048), jnp.float32) / jnp.sqrt(2048.0)).T
    fc_b = (0.01 * jax.random.normal(nk(), (120,), jnp.float32)).reshape(1, 120)
    return {"stem_w": stem_w, "stem_s": stem_s, "stem_b": stem_b,
            "stages": stages, "fc_w": fc_w, "fc_b": fc_b}


# ----------------------------- forward pass -----------------------------

def music_genre_resnet152_forward(params, x):
    # TODO(synk): BatchNorm is inference-mode (running stats folded); train-mode
    # batch statistics of the default nn.Module training flag are not reproduced.
    xp = stem_pool(x, params["stem_w"], params["stem_s"], params["stem_b"])
    h = w = 16
    for stage in params["stages"]:
        stride = stage["stride"]
        xp, mask = first_block(xp, stage["first"], h=h, w=w, stride=stride)
        h //= stride
        w //= stride
        for blk in stage["rest"]:
            xp = fused_block(xp, mask, blk, w=w)
    return head(xp, params["fc_w"], params["fc_b"], h=h, w=w)


# ----------------------------- main -----------------------------

if __name__ == "__main__":
    key = jax.random.PRNGKey(0)
    pkey, xkey = jax.random.split(key)
    params = init_params(pkey)
    x = jax.random.normal(xkey, (2, 3, 64, 64), jnp.float32)   # NCHW, like PyTorch

    out = music_genre_resnet152_forward(params, x)
    out = jax.block_until_ready(out)

    assert out.shape == (2, 120)
    assert bool(jnp.all(jnp.isfinite(out)))
    # rows of a log-softmax must exponentiate-sum to 1
    assert bool(jnp.allclose(jnp.sum(jnp.exp(out), axis=1), 1.0, atol=1e-3))
    print("KERNEL_OK")
</pallas_src>

<mosaic_0001>
module attributes {stable_mosaic.version = 11 : i64} {
  func.func @_matmul_bn_kernel(%arg0: i32, %arg1: memref<2048x256xbf16, #tpu.memory_space<vmem>>, %arg2: memref<256x64xbf16, #tpu.memory_space<vmem>>, %arg3: memref<1x64xf32, #tpu.memory_space<vmem>>, %arg4: memref<1x64xf32, #tpu.memory_space<vmem>>, %arg5: memref<2048x64xbf16, #tpu.memory_space<vmem>>) attributes {dimension_semantics = [#tpu.dimension_semantics<arbitrary>], iteration_bounds = array<i64: 1>, scalar_prefetch = 0 : i64, scratch_operands = 0 : i64, tpu.core_type = #tpu.core_type<tc>, window_params = [{pipeline_mode = #tpu.pipeline_mode<synchronous>, transform_indices = @transform_0, window_bounds = array<i64: 2048, 256>}, {pipeline_mode = #tpu.pipeline_mode<synchronous>, transform_indices = @transform_1, window_bounds = array<i64: 256, 64>}, {pipeline_mode = #tpu.pipeline_mode<synchronous>, transform_indices = @transform_2, window_bounds = array<i64: 1, 64>}, {pipeline_mode = #tpu.pipeline_mode<synchronous>, transform_indices = @transform_3, window_bounds = array<i64: 1, 64>}, {pipeline_mode = #tpu.pipeline_mode<synchronous>, transform_indices = @transform_4, window_bounds = array<i64: 2048, 64>}]} {
    %c0 = arith.constant 0 : index
    %c0_0 = arith.constant 0 : index
    %0 = vector.load %arg1[%c0, %c0_0] : memref<2048x256xbf16, #tpu.memory_space<vmem>>, vector<2048x256xbf16>
    %c0_1 = arith.constant 0 : index
    %c0_2 = arith.constant 0 : index
    %1 = vector.load %arg2[%c0_1, %c0_2] : memref<256x64xbf16, #tpu.memory_space<vmem>>, vector<256x64xbf16>
    %cst = arith.constant dense<0.000000e+00> : vector<2048x64xf32>
    %2 = tpu.matmul %0, %1, %cst {dimension_numbers = #tpu.dot_dimension_numbers<[1], [0], [0], [1], [0, 0, 1, 1], [], []>} : vector<2048x256xbf16>, vector<256x64xbf16>, vector<2048x64xf32> -> vector<2048x64xf32>
    %c0_3 = arith.constant 0 : index
    %c0_4 = arith.constant 0 : index
    %3 = vector.load %arg3[%c0_3, %c0_4] : memref<1x64xf32, #tpu.memory_space<vmem>>, vector<1x64xf32>
    %4 = vector.broadcast %3 : vector<1x64xf32> to vector<2048x64xf32>
    %5 = arith.mulf %2, %4 : vector<2048x64xf32>
    %c0_5 = arith.constant 0 : index
    %c0_6 = arith.constant 0 : index
    %6 = vector.load %arg4[%c0_5, %c0_6] : memref<1x64xf32, #tpu.memory_space<vmem>>, vector<1x64xf32>
    %7 = vector.broadcast %6 : vector<1x64xf32> to vector<2048x64xf32>
    %8 = arith.addf %5, %7 : vector<2048x64xf32>
    %cst_7 = arith.constant 0.000000e+00 : f32
    %9 = vector.broadcast %cst_7 : f32 to vector<2048x64xf32>
    %10 = arith.maximumf %8, %9 : vector<2048x64xf32>
    %11 = arith.truncf %10 : vector<2048x64xf32> to vector<2048x64xbf16>
    %c0_8 = arith.constant 0 : index
    %c0_9 = arith.constant 0 : index
    %12 = vector.load %arg5[%c0_8, %c0_9] : memref<2048x64xbf16, #tpu.memory_space<vmem>>, vector<2048x64xbf16>
    tpu.vector_store %arg5[%c0_8, %c0_9], %11 {strides = array<i32>} : memref<2048x64xbf16, #tpu.memory_space<vmem>>, vector<2048x64xbf16>,
    return
  }
  func.func @transform_0(%arg0: i32) -> (i32, i32) {
    %c0_i32 = arith.constant 0 : i32
    %c0_i32_0 = arith.constant 0 : i32
    %c0_i32_1 = arith.constant 0 : i32
    return %c0_i32, %c0_i32_0 : i32, i32
  }
  func.func @transform_1(%arg0: i32) -> (i32, i32) {
    %c0_i32 = arith.constant 0 : i32
    %c0_i32_0 = arith.constant 0 : i32
    %c0_i32_1 = arith.constant 0 : i32
    return %c0_i32, %c0_i32_0 : i32, i32
  }
  func.func @transform_2(%arg0: i32) -> (i32, i32) {
    %c0_i32 = arith.constant 0 : i32
    %c0_i32_0 = arith.constant 0 : i32
    %c0_i32_1 = arith.constant 0 : i32
    return %c0_i32, %c0_i32_0 : i32, i32
  }
  func.func @transform_3(%arg0: i32) -> (i32, i32) {
    %c0_i32 = arith.constant 0 : i32
    %c0_i32_0 = arith.constant 0 : i32
    %c0_i32_1 = arith.constant 0 : i32
    return %c0_i32, %c0_i32_0 : i32, i32
  }
  func.func @transform_4(%arg0: i32) -> (i32, i32) {
    %c0_i32 = arith.constant 0 : i32
    %c0_i32_0 = arith.constant 0 : i32
    %c0_i32_1 = arith.constant 0 : i32
    return %c0_i32, %c0_i32_0 : i32, i32
  }
}

module attributes {stable_mosaic.version = 11 : i64} {
  func.func @_max9_kernel(%arg0: i32, %arg1: memref<9x32x1024xbf16, #tpu.memory_space<vmem>>, %arg2: memref<32x1024xbf16, #tpu.memory_space<vmem>>) attributes {dimension_semantics = [#tpu.dimension_semantics<arbitrary>], iteration_bounds = array<i64: 1>, scalar_prefetch = 0 : i64, scratch_operands = 0 : i64, tpu.core_type = #tpu.core_type<tc>, window_params = [{pipeline_mode = #tpu.pipeline_mode<synchronous>, transform_indices = @transform_0, window_bounds = array<i64: 9, 32, 1024>}, {pipeline_mode = #tpu.pipeline_mode<synchronous>, transform_indices = @transform_1, window_bounds = array<i64: 32, 1024>}]} {
    %c0 = arith.constant 0 : index
    %c0_0 = arith.constant 0 : index
    %c0_1 = arith.constant 0 : index
    %0 = vector.load %arg1[%c0, %c0_0, %c0_1] : memref<9x32x1024xbf16, #tpu.memory_space<vmem>>, vector<9x32x1024xbf16>
    %cst = arith.constant dense<0xFF80> : vector<32x1024xbf16>
    %1 = vector.multi_reduction <maximumf>, %0, %cst [0] : vector<9x32x1024xbf16> to vector<32x1024xbf16>
    %c0_2 = arith.constant 0 : index
    %c0_3 = arith.constant 0 : index
    %2 = vector.load %arg2[%c0_2, %c0_3] : memref<32x1024xbf16, #tpu.memory_space<vmem>>, vector<32x1024xbf16>
    tpu.vector_store %arg2[%c0_2, %c0_3], %1 {strides = array<i32>} : memref<32x1024xbf16, #tpu.memory_space<vmem>>, vector<32x1024xbf16>,
    return
  }
  func.func @transform_0(%arg0: i32) -> (i32, i32, i32) {
    %c0_i32 = arith.constant 0 : i32
    %c0_i32_0 = arith.constant 0 : i32
    %c0_i32_1 = arith.constant 0 : i32
    %c0_i32_2 = arith.constant 0 : i32
    return %c0_i32, %c0_i32_0, %c0_i32_1 : i32, i32, i32
  }
  func.func @transform_1(%arg0: i32) -> (i32, i32) {
    %c0_i32 = arith.constant 0 : i32
    %c0_i32_0 = arith.constant 0 : i32
    %c0_i32_1 = arith.constant 0 : i32
    return %c0_i32, %c0_i32_0 : i32, i32
  }
}

</mosaic_0001>

<llo_original>
// kernel: stem_pool.2
$region0: #{stem_pool.2}
  #allocation0 [shape = 'u32[]', space=smem, size = 0x4, offset = 0x4, fixed_abs, tag = 'smem constant byte address 0x4 - core index']
  #allocation1 [shape = 'u32[144,128]{1,0:T(1,128)}', space=vmem, size = 0x12000, scoped, tag = 'internal scratch']
  %s0 = inlined_call_operand.vmem [shape: bf16[2048,256], index: 0, kind: input, shape index: {}]
  %s1 = inlined_call_operand.vmem [shape: bf16[256,64], index: 1, kind: input, shape index: {}]
  %s2 = inlined_call_operand.vmem [shape: f32[1,64], index: 2, kind: input, shape index: {}]
  %s3 = inlined_call_operand.vmem [shape: f32[1,64], index: 3, kind: input, shape index: {}]
  %s4 = inlined_call_operand.vmem [shape: bf16[2048,64], index: 4, kind: output, shape index: {}]
  %s5 = sld [smem:[#allocation0]]
  $region26: #{stem_pool.2} parent=0
    _
  %s7 = ssub.s32 1, %s5
  %s8 = scalar_select 0, %s7, %s5
  // Predicated region
  $region2: #{stem_pool.2} parent=0 // pred_check
    _
  $region3: #{stem_pool.2} parent=0 // pred_check_branch
    %10 = sbr.rel (0) target = $region5
  $region4: #{stem_pool.2} parent=0 // pred_region
    _
  $region5: #{stem_pool.2} parent=0 // pred_fallthru
    _
  // Predicated region
  $region6: #{stem_pool.2} parent=0 // pred_check
    _
  $region7: #{stem_pool.2} parent=0 // pred_check_branch
    %12 = sbr.rel (0) target = $region9
  $region8: #{stem_pool.2} parent=0 // pred_region
    _
  $region9: #{stem_pool.2} parent=0 // pred_fallthru
    _
  // Predicated region
  $region10: #{stem_pool.2} parent=0 // pred_check
    _
  $region11: #{stem_pool.2} parent=0 // pred_check_branch
    %14 = sbr.rel (0) target = $region13
  $region12: #{stem_pool.2} parent=0 // pred_region
    _
  $region13: #{stem_pool.2} parent=0 // pred_fallthru
    _
  // Predicated region
  $region14: #{stem_pool.2} parent=0 // pred_check
    _
  $region15: #{stem_pool.2} parent=0 // pred_check_branch
    %16 = sbr.rel (0) target = $region17
  $region16: #{stem_pool.2} parent=0 // pred_region
    _
  $region17: #{stem_pool.2} parent=0 // pred_fallthru
    _
  %v18 = vld [vmem:[%s0] sm:$0xff]
  %v19 = vld [vmem:[%s0 + $0x8] sm:$0xff]
  %v20 = vld [vmem:[%s0 + $0x10] sm:$0xff]
  %v21 = vld [vmem:[%s0 + $0x18] sm:$0xff]
  %v22 = vld [vmem:[%s0 + $0x20] sm:$0xff]
  %v23 = vld [vmem:[%s0 + $0x28] sm:$0xff]
  %v24 = vld [vmem:[%s0 + $0x30] sm:$0xff]
  %v25 = vld [vmem:[%s0 + $0x38] sm:$0xff]
  %v26 = vld [vmem:[%s0 + $0x40] sm:$0xff]
  %v27 = vld [vmem:[%s0 + $0x48] sm:$0xff]
  %v28 = vld [vmem:[%s0 + $0x50] sm:$0xff]
  %v29 = vld [vmem:[%s0 + $0x58] sm:$0xff]
  %v30 = vld [vmem:[%s0 + $0x60] sm:$0xff]
  %v31 = vld [vmem:[%s0 + $0x68] sm:$0xff]
  %v32 = vld [vmem:[%s0 + $0x70] sm:$0xff]
  %v33 = vld [vmem:[%s0 + $0x78] sm:$0xff]
  %v34 = vld [vmem:[%s0 + $0x80] sm:$0xff]
  %v35 = vld [vmem:[%s0 + $0x88] sm:$0xff]
  %v36 = vld [vmem:[%s0 + $0x90] sm:$0xff]
  %v37 = vld [vmem:[%s0 + $0x98] sm:$0xff]
  %v38 = vld [vmem:[%s0 + $0xa0] sm:$0xff]
  %v39 = vld [vmem:[%s0 + $0xa8] sm:$0xff]
  %v40 = vld [vmem:[%s0 + $0xb0] sm:$0xff]
  %v41 = vld [vmem:[%s0 + $0xb8] sm:$0xff]
  %v42 = vld [vmem:[%s0 + $0xc0] sm:$0xff]
  %v43 = vld [vmem:[%s0 + $0xc8] sm:$0xff]
  %v44 = vld [vmem:[%s0 + $0xd0] sm:$0xff]
  %v45 = vld [vmem:[%s0 + $0xd8] sm:$0xff]
  %v46 = vld [vmem:[%s0 + $0xe0] sm:$0xff]
  %v47 = vld [vmem:[%s0 + $0xe8] sm:$0xff]
  %v48 = vld [vmem:[%s0 + $0xf0] sm:$0xff]
  %v49 = vld [vmem:[%s0 + $0xf8] sm:$0xff]
  %v50 = vld [vmem:[%s0 + $0x100] sm:$0xff]
  %v51 = vld [vmem:[%s0 + $0x108] sm:$0xff]
  %v52 = vld [vmem:[%s0 + $0x110] sm:$0xff]
  %v53 = vld [vmem:[%s0 + $0x118] sm:$0xff]
  %v54 = vld [vmem:[%s0 + $0x120] sm:$0xff]
  %v55 = vld [vmem:[%s0 + $0x128] sm:$0xff]
  %v56 = vld [vmem:[%s0 + $0x130] sm:$0xff]
  %v57 = vld [vmem:[%s0 + $0x138] sm:$0xff]
  %v58 = vld [vmem:[%s0 + $0x140] sm:$0xff]
  %v59 = vld [vmem:[%s0 + $0x148] sm:$0xff]
  %v60 = vld [vmem:[%s0 + $0x150] sm:$0xff]
  %v61 = vld [vmem:[%s0 + $0x158] sm:$0xff]
  %v62 = vld [vmem:[%s0 + $0x160] sm:$0xff]
  %v63 = vld [vmem:[%s0 + $0x168] sm:$0xff]
  %v64 = vld [vmem:[%s0 + $0x170] sm:$0xff]
  %v65 = vld [vmem:[%s0 + $0x178] sm:$0xff]
  %v66 = vld [vmem:[%s0 + $0x180] sm:$0xff]
  %v67 = vld [vmem:[%s0 + $0x188] sm:$0xff]
  %v68 = vld [vmem:[%s0 + $0x190] sm:$0xff]
  %v69 = vld [vmem:[%s0 + $0x198] sm:$0xff]
  %v70 = vld [vmem:[%s0 + $0x1a0] sm:$0xff]
  %v71 = vld [vmem:[%s0 + $0x1a8] sm:$0xff]
  %v72 = vld [vmem:[%s0 + $0x1b0] sm:$0xff]
  %v73 = vld [vmem:[%s0 + $0x1b8] sm:$0xff]
  %v74 = vld [vmem:[%s0 + $0x1c0] sm:$0xff]
  %v75 = vld [vmem:[%s0 + $0x1c8] sm:$0xff]
  %v76 = vld [vmem:[%s0 + $0x1d0] sm:$0xff]
  %v77 = vld [vmem:[%s0 + $0x1d8] sm:$0xff]
  %v78 = vld [vmem:[%s0 + $0x1e0] sm:$0xff]
  %v79 = vld [vmem:[%s0 + $0x1e8] sm:$0xff]
  %v80 = vld [vmem:[%s0 + $0x1f0] sm:$0xff]
  %v81 = vld [vmem:[%s0 + $0x1f8] sm:$0xff]
  %v82 = vld [vmem:[%s0 + $0x200] sm:$0xff]
  %v83 = vld [vmem:[%s0 + $0x208] sm:$0xff]
  %v84 = vld [vmem:[%s0 + $0x210] sm:$0xff]
  %v85 = vld [vmem:[%s0 + $0x218] sm:$0xff]
  %v86 = vld [vmem:[%s0 + $0x220] sm:$0xff]
  %v87 = vld [vmem:[%s0 + $0x228] sm:$0xff]
  %v88 = vld [vmem:[%s0 + $0x230] sm:$0xff]
  %v89 = vld [vmem:[%s0 + $0x238] sm:$0xff]
  %v90 = vld [vmem:[%s0 + $0x240] sm:$0xff]
  %v91 = vld [vmem:[%s0 + $0x248] sm:$0xff]
  %v92 = vld [vmem:[%s0 + $0x250] sm:$0xff]
  %v93 = vld [vmem:[%s0 + $0x258] sm:$0xff]
  %v94 = vld [vmem:[%s0 + $0x260] sm:$0xff]
  %v95 = vld [vmem:[%s0 + $0x268] sm:$0xff]
  %v96 = vld [vmem:[%s0 + $0x270] sm:$0xff]
  %v97 = vld [vmem:[%s0 + $0x278] sm:$0xff]
  %v98 = vld [vmem:[%s0 + $0x280] sm:$0xff]
  %v99 = vld [vmem:[%s0 + $0x288] sm:$0xff]
  %v100 = vld [vmem:[%s0 + $0x290] sm:$0xff]
  %v101 = vld [vmem:[%s0 + $0x298] sm:$0xff]
  %v102 = vld [vmem:[%s0 + $0x2a0] sm:$0xff]
  %v103 = vld [vmem:[%s0 + $0x2a8] sm:$0xff]
  %v104 = vld [vmem:[%s0 + $0x2b0] sm:$0xff]
  %v105 = vld [vmem:[%s0 + $0x2b8] sm:$0xff]
  %v106 = vld [vmem:[%s0 + $0x2c0] sm:$0xff]
  %v107 = vld [vmem:[%s0 + $0x2c8] sm:$0xff]
  %v108 = vld [vmem:[%s0 + $0x2d0] sm:$0xff]
  %v109 = vld [vmem:[%s0 + $0x2d8] sm:$0xff]
  %v110 = vld [vmem:[%s0 + $0x2e0] sm:$0xff]
  %v111 = vld [vmem:[%s0 + $0x2e8] sm:$0xff]
  %v112 = vld [vmem:[%s0 + $0x2f0] sm:$0xff]
  %v113 = vld [vmem:[%s0 + $0x2f8] sm:$0xff]
  %v114 = vld [vmem:[%s0 + $0x300] sm:$0xff]
  %v115 = vld [vmem:[%s0 + $0x308] sm:$0xff]
  %v116 = vld [vmem:[%s0 + $0x310] sm:$0xff]
  %v117 = vld [vmem:[%s0 + $0x318] sm:$0xff]
  %v118 = vld [vmem:[%s0 + $0x320] sm:$0xff]
  %v119 = vld [vmem:[%s0 + $0x328] sm:$0xff]
  %v120 = vld [vmem:[%s0 + $0x330] sm:$0xff]
  %v121 = vld [vmem:[%s0 + $0x338] sm:$0xff]
  %v122 = vld [vmem:[%s0 + $0x340] sm:$0xff]
  %v123 = vld [vmem:[%s0 + $0x348] sm:$0xff]
  %v124 = vld [vmem:[%s0 + $0x350] sm:$0xff]
  %v125 = vld [vmem:[%s0 + $0x358] sm:$0xff]
  %v126 = vld [vmem:[%s0 + $0x360] sm:$0xff]
  %v127 = vld [vmem:[%s0 + $0x368] sm:$0xff]
  %v128 = vld [vmem:[%s0 + $0x370] sm:$0xff]
  %v129 = vld [vmem:[%s0 + $0x378] sm:$0xff]
  %v130 = vld [vmem:[%s0 + $0x380] sm:$0xff]
  %v131 = vld [vmem:[%s0 + $0x388] sm:$0xff]
  %v132 = vld [vmem:[%s0 + $0x390] sm:$0xff]
  %v133 = vld [vmem:[%s0 + $0x398] sm:$0xff]
  %v134 = vld [vmem:[%s0 + $0x3a0] sm:$0xff]
  %v135 = vld [vmem:[%s0 + $0x3a8] sm:$0xff]
  %v136 = vld [vmem:[%s0 + $0x3b0] sm:$0xff]
  %v137 = vld [vmem:[%s0 + $0x3b8] sm:$0xff]
  %v138 = vld [vmem:[%s0 + $0x3c0] sm:$0xff]
  %v139 = vld [vmem:[%s0 + $0x3c8] sm:$0xff]
  %v140 = vld [vmem:[%s0 + $0x3d0] sm:$0xff]
  %v141 = vld [vmem:[%s0 + $0x3d8] sm:$0xff]
  %v142 = vld [vmem:[%s0 + $0x3e0] sm:$0xff]
  %v143 = vld [vmem:[%s0 + $0x3e8] sm:$0xff]
  %v144 = vld [vmem:[%s0 + $0x3f0] sm:$0xff]
  %v145 = vld [vmem:[%s0 + $0x3f8] sm:$0xff]
  %v146 = vld [vmem:[%s0 + $0x400] sm:$0xff]
  %v147 = vld [vmem:[%s0 + $0x408] sm:$0xff]
  %v148 = vld [vmem:[%s0 + $0x410] sm:$0xff]
  %v149 = vld [vmem:[%s0 + $0x418] sm:$0xff]
  %v150 = vld [vmem:[%s0 + $0x420] sm:$0xff]
  %v151 = vld [vmem:[%s0 + $0x428] sm:$0xff]
  %v152 = vld [vmem:[%s0 + $0x430] sm:$0xff]
  %v153 = vld [vmem:[%s0 + $0x438] sm:$0xff]
  %v154 = vld [vmem:[%s0 + $0x440] sm:$0xff]
  %v155 = vld [vmem:[%s0 + $0x448] sm:$0xff]
  %v156 = vld [vmem:[%s0 + $0x450] sm:$0xff]
  %v157 = vld [vmem:[%s0 + $0x458] sm:$0xff]
  %v158 = vld [vmem:[%s0 + $0x460] sm:$0xff]
  %v159 = vld [vmem:[%s0 + $0x468] sm:$0xff]
  %v160 = vld [vmem:[%s0 + $0x470] sm:$0xff]
  %v161 = vld [vmem:[%s0 + $0x478] sm:$0xff]
  %v162 = vld [vmem:[%s0 + $0x480] sm:$0xff]
  %v163 = vld [vmem:[%s0 + $0x488] sm:$0xff]
  %v164 = vld [vmem:[%s0 + $0x490] sm:$0xff]
  %v165 = vld [vmem:[%s0 + $0x498] sm:$0xff]
  %v166 = vld [vmem:[%s0 + $0x4a0] sm:$0xff]
  %v167 = vld [vmem:[%s0 + $0x4a8] sm:$0xff]
  %v168 = vld [vmem:[%s0 + $0x4b0] sm:$0xff]
  %v169 = vld [vmem:[%s0 + $0x4b8] sm:$0xff]
  %v170 = vld [vmem:[%s0 + $0x4c0] sm:$0xff]
  %v171 = vld [vmem:[%s0 + $0x4c8] sm:$0xff]
  %v172 = vld [vmem:[%s0 + $0x4d0] sm:$0xff]
  %v173 = vld [vmem:[%s0 + $0x4d8] sm:$0xff]
  %v174 = vld [vmem:[%s0 + $0x4e0] sm:$0xff]
  %v175 = vld [vmem:[%s0 + $0x4e8] sm:$0xff]
  %v176 = vld [vmem:[%s0 + $0x4f0] sm:$0xff]
  %v177 = vld [vmem:[%s0 + $0x4f8] sm:$0xff]
  %v178 = vld [vmem:[%s0 + $0x500] sm:$0xff]
  %v179 = vld [vmem:[%s0 + $0x508] sm:$0xff]
  %v180 = vld [vmem:[%s0 + $0x510] sm:$0xff]
  %v181 = vld [vmem:[%s0 + $0x518] sm:$0xff]
  %v182 = vld [vmem:[%s0 + $0x520] sm:$0xff]
  %v183 = vld [vmem:[%s0 + $0x528] sm:$0xff]
  %v184 = vld [vmem:[%s0 + $0x530] sm:$0xff]
  %v185 = vld [vmem:[%s0 + $0x538] sm:$0xff]
  %v186 = vld [vmem:[%s0 + $0x540] sm:$0xff]
  %v187 = vld [vmem:[%s0 + $0x548] sm:$0xff]
  %v188 = vld [vmem:[%s0 + $0x550] sm:$0xff]
  %v189 = vld [vmem:[%s0 + $0x558] sm:$0xff]
  %v190 = vld [vmem:[%s0 + $0x560] sm:$0xff]
  %v191 = vld [vmem:[%s0 + $0x568] sm:$0xff]
  %v192 = vld [vmem:[%s0 + $0x570] sm:$0xff]
  %v193 = vld [vmem:[%s0 + $0x578] sm:$0xff]
  %v194 = vld [vmem:[%s0 + $0x580] sm:$0xff]
  %v195 = vld [vmem:[%s0 + $0x588] sm:$0xff]
  %v196 = vld [vmem:[%s0 + $0x590] sm:$0xff]
  %v197 = vld [vmem:[%s0 + $0x598] sm:$0xff]
  %v198 = vld [vmem:[%s0 + $0x5a0] sm:$0xff]
  %v199 = vld [vmem:[%s0 + $0x5a8] sm:$0xff]
  %v200 = vld [vmem:[%s0 + $0x5b0] sm:$0xff]
  %v201 = vld [vmem:[%s0 + $0x5b8] sm:$0xff]
  %v202 = vld [vmem:[%s0 + $0x5c0] sm:$0xff]
  %v203 = vld [vmem:[%s0 + $0x5c8] sm:$0xff]
  %v204 = vld [vmem:[%s0 + $0x5d0] sm:$0xff]
  %v205 = vld [vmem:[%s0 + $0x5d8] sm:$0xff]
  %v206 = vld [vmem:[%s0 + $0x5e0] sm:$0xff]
  %v207 = vld [vmem:[%s0 + $0x5e8] sm:$0xff]
  %v208 = vld [vmem:[%s0 + $0x5f0] sm:$0xff]
  %v209 = vld [vmem:[%s0 + $0x5f8] sm:$0xff]
  %v210 = vld [vmem:[%s0 + $0x600] sm:$0xff]
  %v211 = vld [vmem:[%s0 + $0x608] sm:$0xff]
  %v212 = vld [vmem:[%s0 + $0x610] sm:$0xff]
  %v213 = vld [vmem:[%s0 + $0x618] sm:$0xff]
  %v214 = vld [vmem:[%s0 + $0x620] sm:$0xff]
  %v215 = vld [vmem:[%s0 + $0x628] sm:$0xff]
  %v216 = vld [vmem:[%s0 + $0x630] sm:$0xff]
  %v217 = vld [vmem:[%s0 + $0x638] sm:$0xff]
  %v218 = vld [vmem:[%s0 + $0x640] sm:$0xff]
  %v219 = vld [vmem:[%s0 + $0x648] sm:$0xff]
  %v220 = vld [vmem:[%s0 + $0x650] sm:$0xff]
  %v221 = vld [vmem:[%s0 + $0x658] sm:$0xff]
  %v222 = vld [vmem:[%s0 + $0x660] sm:$0xff]
  %v223 = vld [vmem:[%s0 + $0x668] sm:$0xff]
  %v224 = vld [vmem:[%s0 + $0x670] sm:$0xff]
  %v225 = vld [vmem:[%s0 + $0x678] sm:$0xff]
  %v226 = vld [vmem:[%s0 + $0x680] sm:$0xff]
  %v227 = vld [vmem:[%s0 + $0x688] sm:$0xff]
  %v228 = vld [vmem:[%s0 + $0x690] sm:$0xff]
  %v229 = vld [vmem:[%s0 + $0x698] sm:$0xff]
  %v230 = vld [vmem:[%s0 + $0x6a0] sm:$0xff]
  %v231 = vld [vmem:[%s0 + $0x6a8] sm:$0xff]
  %v232 = vld [vmem:[%s0 + $0x6b0] sm:$0xff]
  %v233 = vld [vmem:[%s0 + $0x6b8] sm:$0xff]
  %v234 = vld [vmem:[%s0 + $0x6c0] sm:$0xff]
  %v235 = vld [vmem:[%s0 + $0x6c8] sm:$0xff]
  %v236 = vld [vmem:[%s0 + $0x6d0] sm:$0xff]
  %v237 = vld [vmem:[%s0 + $0x6d8] sm:$0xff]
  %v238 = vld [vmem:[%s0 + $0x6e0] sm:$0xff]
  %v239 = vld [vmem:[%s0 + $0x6e8] sm:$0xff]
  %v240 = vld [vmem:[%s0 + $0x6f0] sm:$0xff]
  %v241 = vld [vmem:[%s0 + $0x6f8] sm:$0xff]
  %v242 = vld [vmem:[%s0 + $0x700] sm:$0xff]
  %v243 = vld [vmem:[%s0 + $0x708] sm:$0xff]
  %v244 = vld [vmem:[%s0 + $0x710] sm:$0xff]
  %v245 = vld [vmem:[%s0 + $0x718] sm:$0xff]
  %v246 = vld [vmem:[%s0 + $0x720] sm:$0xff]
  %v247 = vld [vmem:[%s0 + $0x728] sm:$0xff]
  %v248 = vld [vmem:[%s0 + $0x730] sm:$0xff]
  %v249 = vld [vmem:[%s0 + $0x738] sm:$0xff]
  %v250 = vld [vmem:[%s0 + $0x740] sm:$0xff]
  %v251 = vld [vmem:[%s0 + $0x748] sm:$0xff]
  %v252 = vld [vmem:[%s0 + $0x750] sm:$0xff]
  %v253 = vld [vmem:[%s0 + $0x758] sm:$0xff]
  %v254 = vld [vmem:[%s0 + $0x760] sm:$0xff]
  %v255 = vld [vmem:[%s0 + $0x768] sm:$0xff]
  %v256 = vld [vmem:[%s0 + $0x770] sm:$0xff]
  %v257 = vld [vmem:[%s0 + $0x778] sm:$0xff]
  %v258 = vld [vmem:[%s0 + $0x780] sm:$0xff]
  %v259 = vld [vmem:[%s0 + $0x788] sm:$0xff]
  %v260 = vld [vmem:[%s0 + $0x790] sm:$0xff]
  %v261 = vld [vmem:[%s0 + $0x798] sm:$0xff]
  %v262 = vld [vmem:[%s0 + $0x7a0] sm:$0xff]
  %v263 = vld [vmem:[%s0 + $0x7a8] sm:$0xff]
  %v264 = vld [vmem:[%s0 + $0x7b0] sm:$0xff]
  %v265 = vld [vmem:[%s0 + $0x7b8] sm:$0xff]
  %v266 = vld [vmem:[%s0 + $0x7c0] sm:$0xff]
  %v267 = vld [vmem:[%s0 + $0x7c8] sm:$0xff]
  %v268 = vld [vmem:[%s0 + $0x7d0] sm:$0xff]
  %v269 = vld [vmem:[%s0 + $0x7d8] sm:$0xff]
  %v270 = vld [vmem:[%s0 + $0x7e0] sm:$0xff]
  %v271 = vld [vmem:[%s0 + $0x7e8] sm:$0xff]
  %v272 = vld [vmem:[%s0 + $0x7f0] sm:$0xff]
  %v273 = vld [vmem:[%s0 + $0x7f8] sm:$0xff]
  %v274 = vld [vmem:[%s1] sm:$0xf]
  %v275 = vld [vmem:[%s1 + $0x4] sm:$0xf]
  %v276 = vld [vmem:[%s1 + $0x8] sm:$0xf]
  %v277 = vld [vmem:[%s1 + $0xc] sm:$0xf]
  %v278 = vld [vmem:[%s1 + $0x10] sm:$0xf]
  %v279 = vld [vmem:[%s1 + $0x14] sm:$0xf]
  %v280 = vld [vmem:[%s1 + $0x18] sm:$0xf]
  %v281 = vld [vmem:[%s1 + $0x1c] sm:$0xf]
  %v282 = vld [vmem:[%s1 + $0x20] sm:$0xf]
  %v283 = vld [vmem:[%s1 + $0x24] sm:$0xf]
  %v284 = vld [vmem:[%s1 + $0x28] sm:$0xf]
  %v285 = vld [vmem:[%s1 + $0x2c] sm:$0xf]
  %v286 = vld [vmem:[%s1 + $0x30] sm:$0xf]
  %v287 = vld [vmem:[%s1 + $0x34] sm:$0xf]
  %v288 = vld [vmem:[%s1 + $0x38] sm:$0xf]
  %v289 = vld [vmem:[%s1 + $0x3c] sm:$0xf]
  %v290 = vld [vmem:[%s1 + $0x40] sm:$0xf]
  %v291 = vld [vmem:[%s1 + $0x44] sm:$0xf]
  %v292 = vld [vmem:[%s1 + $0x48] sm:$0xf]
  %v293 = vld [vmem:[%s1 + $0x4c] sm:$0xf]
  %v294 = vld [vmem:[%s1 + $0x50] sm:$0xf]
  %v295 = vld [vmem:[%s1 + $0x54] sm:$0xf]
  %v296 = vld [vmem:[%s1 + $0x58] sm:$0xf]
  %v297 = vld [vmem:[%s1 + $0x5c] sm:$0xf]
  %v298 = vld [vmem:[%s1 + $0x60] sm:$0xf]
  %v299 = vld [vmem:[%s1 + $0x64] sm:$0xf]
  %v300 = vld [vmem:[%s1 + $0x68] sm:$0xf]
  %v301 = vld [vmem:[%s1 + $0x6c] sm:$0xf]
  %v302 = vld [vmem:[%s1 + $0x70] sm:$0xf]
  %v303 = vld [vmem:[%s1 + $0x74] sm:$0xf]
  %v304 = vld [vmem:[%s1 + $0x78] sm:$0xf]
  %v305 = vld [vmem:[%s1 + $0x7c] sm:$0xf]
  %v562 = vunpack.c.l.b16 %v18
  %v563 = vunpack.c.h.b16 %v18
  %v564 = vunpack.c.l.b16 %v19
  %v565 = vunpack.c.h.b16 %v19
  %v566 = vunpack.c.l.b16 %v20
  %v567 = vunpack.c.h.b16 %v20
  %v568 = vunpack.c.l.b16 %v21
  %v569 = vunpack.c.h.b16 %v21
  %v570 = vunpack.c.l.b16 %v22
  %v571 = vunpack.c.h.b16 %v22
  %v572 = vunpack.c.l.b16 %v23
  %v573 = vunpack.c.h.b16 %v23
  %v574 = vunpack.c.l.b16 %v24
  %v575 = vunpack.c.h.b16 %v24
  %v576 = vunpack.c.l.b16 %v25
  %v577 = vunpack.c.h.b16 %v25
  %v578 = vunpack.c.l.b16 %v26
  %v579 = vunpack.c.h.b16 %v26
  %v580 = vunpack.c.l.b16 %v27
  %v581 = vunpack.c.h.b16 %v27
  %v582 = vunpack.c.l.b16 %v28
  %v583 = vunpack.c.h.b16 %v28
  %v584 = vunpack.c.l.b16 %v29
  %v585 = vunpack.c.h.b16 %v29
  %v586 = vunpack.c.l.b16 %v30
  %v587 = vunpack.c.h.b16 %v30
  %v588 = vunpack.c.l.b16 %v31
  %v589 = vunpack.c.h.b16 %v31
  %v590 = vunpack.c.l.b16 %v32
  %v591 = vunpack.c.h.b16 %v32
  %v592 = vunpack.c.l.b16 %v33
  %v593 = vunpack.c.h.b16 %v33
  %v594 = vunpack.c.l.b16 %v34
  %v595 = vunpack.c.h.b16 %v34
  %v596 = vunpack.c.l.b16 %v35
  %v597 = vunpack.c.h.b16 %v35
  %v598 = vunpack.c.l.b16 %v36
  %v599 = vunpack.c.h.b16 %v36
  %v600 = vunpack.c.l.b16 %v37
  %v601 = vunpack.c.h.b16 %v37
  %v602 = vunpack.c.l.b16 %v38
  %v603 = vunpack.c.h.b16 %v38
  %v604 = vunpack.c.l.b16 %v39
  %v605 = vunpack.c.h.b16 %v39
  %v606 = vunpack.c.l.b16 %v40
  %v607 = vunpack.c.h.b16 %v40
  %v608 = vunpack.c.l.b16 %v41
  %v609 = vunpack.c.h.b16 %v41
  %v610 = vunpack.c.l.b16 %v42
  %v611 = vunpack.c.h.b16 %v42
  %v612 = vunpack.c.l.b16 %v43
  %v613 = vunpack.c.h.b16 %v43
  %v614 = vunpack.c.l.b16 %v44
  %v615 = vunpack.c.h.b16 %v44
  %v616 = vunpack.c.l.b16 %v45
  %v617 = vunpack.c.h.b16 %v45
  %v618 = vunpack.c.l.b16 %v46
  %v619 = vunpack.c.h.b16 %v46
  %v620 = vunpack.c.l.b16 %v47
  %v621 = vunpack.c.h.b16 %v47
  %v622 = vunpack.c.l.b16 %v48
  %v623 = vunpack.c.h.b16 %v48
  %v624 = vunpack.c.l.b16 %v49
  %v625 = vunpack.c.h.b16 %v49
  %v626 = vunpack.c.l.b16 %v50
  %v627 = vunpack.c.h.b16 %v50
  %v628 = vunpack.c.l.b16 %v51
  %v629 = vunpack.c.h.b16 %v51
  %v630 = vunpack.c.l.b16 %v52
  %v631 = vunpack.c.h.b16 %v52
  %v632 = vunpack.c.l.b16 %v53
  %v633 = vunpack.c.h.b16 %v53
  %v634 = vunpack.c.l.b16 %v54
  %v635 = vunpack.c.h.b16 %v54
  %v636 = vunpack.c.l.b16 %v55
  %v637 = vunpack.c.h.b16 %v55
  %v638 = vunpack.c.l.b16 %v56
  %v639 = vunpack.c.h.b16 %v56
  %v640 = vunpack.c.l.b16 %v57
  %v641 = vunpack.c.h.b16 %v57
  %v642 = vunpack.c.l.b16 %v58
  %v643 = vunpack.c.h.b16 %v58
  %v644 = vunpack.c.l.b16 %v59
  %v645 = vunpack.c.h.b16 %v59
  %v646 = vunpack.c.l.b16 %v60
  %v647 = vunpack.c.h.b16 %v60
  %v648 = vunpack.c.l.b16 %v61
  %v649 = vunpack.c.h.b16 %v61
  %v650 = vunpack.c.l.b16 %v62
  %v651 = vunpack.c.h.b16 %v62
  %v652 = vunpack.c.l.b16 %v63
  %v653 = vunpack.c.h.b16 %v63
  %v654 = vunpack.c.l.b16 %v64
  %v655 = vunpack.c.h.b16 %v64
  %v656 = vunpack.c.l.b16 %v65
  %v657 = vunpack.c.h.b16 %v65
  %v658 = vunpack.c.l.b16 %v66
  %v659 = vunpack.c.h.b16 %v66
  %v660 = vunpack.c.l.b16 %v67
  %v661 = vunpack.c.h.b16 %v67
  %v662 = vunpack.c.l.b16 %v68
  %v663 = vunpack.c.h.b16 %v68
  %v664 = vunpack.c.l.b16 %v69
  %v665 = vunpack.c.h.b16 %v69
  %v666 = vunpack.c.l.b16 %v70
  %v667 = vunpack.c.h.b16 %v70
  %v668 = vunpack.c.l.b16 %v71
  %v669 = vunpack.c.h.b16 %v71
  %v670 = vunpack.c.l.b16 %v72
  %v671 = vunpack.c.h.b16 %v72
  %v672 = vunpack.c.l.b16 %v73
  %v673 = vunpack.c.h.b16 %v73
  %v674 = vunpack.c.l.b16 %v74
  %v675 = vunpack.c.h.b16 %v74
  %v676 = vunpack.c.l.b16 %v75
  %v677 = vunpack.c.h.b16 %v75
  %v678 = vunpack.c.l.b16 %v76
  %v679 = vunpack.c.h.b16 %v76
  %v680 = vunpack.c.l.b16 %v77
  %v681 = vunpack.c.h.b16 %v77
  %v682 = vunpack.c.l.b16 %v78
  %v683 = vunpack.c.h.b16 %v78
  %v684 = vunpack.c.l.b16 %v79
  %v685 = vunpack.c.h.b16 %v79
  %v686 = vunpack.c.l.b16 %v80
  %v687 = vunpack.c.h.b16 %v80
  %v688 = vunpack.c.l.b16 %v81
  %v689 = vunpack.c.h.b16 %v81
  %v690 = vunpack.c.l.b16 %v82
  %v691 = vunpack.c.h.b16 %v82
  %v692 = vunpack.c.l.b16 %v83
  %v693 = vunpack.c.h.b16 %v83
  %v694 = vunpack.c.l.b16 %v84
  %v695 = vunpack.c.h.b16 %v84
  %v696 = vunpack.c.l.b16 %v85
  %v697 = vunpack.c.h.b16 %v85
  %v698 = vunpack.c.l.b16 %v86
  %v699 = vunpack.c.h.b16 %v86
  %v700 = vunpack.c.l.b16 %v87
  %v701 = vunpack.c.h.b16 %v87
  %v702 = vunpack.c.l.b16 %v88
  %v703 = vunpack.c.h.b16 %v88
  %v704 = vunpack.c.l.b16 %v89
  %v705 = vunpack.c.h.b16 %v89
  %v706 = vunpack.c.l.b16 %v90
  %v707 = vunpack.c.h.b16 %v90
  %v708 = vunpack.c.l.b16 %v91
  %v709 = vunpack.c.h.b16 %v91
  %v710 = vunpack.c.l.b16 %v92
  %v711 = vunpack.c.h.b16 %v92
  %v712 = vunpack.c.l.b16 %v93
  %v713 = vunpack.c.h.b16 %v93
  %v714 = vunpack.c.l.b16 %v94
  %v715 = vunpack.c.h.b16 %v94
  %v716 = vunpack.c.l.b16 %v95
  %v717 = vunpack.c.h.b16 %v95
  %v718 = vunpack.c.l.b16 %v96
  %v719 = vunpack.c.h.b16 %v96
  %v720 = vunpack.c.l.b16 %v97
  %v721 = vunpack.c.h.b16 %v97
  %v722 = vunpack.c.l.b16 %v98
  %v723 = vunpack.c.h.b16 %v98
  %v724 = vunpack.c.l.b16 %v99
  %v725 = vunpack.c.h.b16 %v99
  %v726 = vunpack.c.l.b16 %v100
  %v727 = vunpack.c.h.b16 %v100
  %v728 = vunpack.c.l.b16 %v101
  %v729 = vunpack.c.h.b16 %v101
  %v730 = vunpack.c.l.b16 %v102
  %v731 = vunpack.c.h.b16 %v102
  %v732 = vunpack.c.l.b16 %v103
  %v733 = vunpack.c.h.b16 %v103
  %v734 = vunpack.c.l.b16 %v104
  %v735 = vunpack.c.h.b16 %v104
  %v736 = vunpack.c.l.b16 %v105
  %v737 = vunpack.c.h.b16 %v105
  %v738 = vunpack.c.l.b16 %v106
  %v739 = vunpack.c.h.b16 %v106
  %v740 = vunpack.c.l.b16 %v107
  %v741 = vunpack.c.h.b16 %v107
  %v742 = vunpack.c.l.b16 %v108
  %v743 = vunpack.c.h.b16 %v108
  %v744 = vunpack.c.l.b16 %v109
  %v745 = vunpack.c.h.b16 %v109
  %v746 = vunpack.c.l.b16 %v110
  %v747 = vunpack.c.h.b16 %v110
  %v748 = vunpack.c.l.b16 %v111
  %v749 = vunpack.c.h.b16 %v111
  %v750 = vunpack.c.l.b16 %v112
  %v751 = vunpack.c.h.b16 %v112
  %v752 = vunpack.c.l.b16 %v113
  %v753 = vunpack.c.h.b16 %v113
  %v754 = vunpack.c.l.b16 %v114
  %v755 = vunpack.c.h.b16 %v114
  %v756 = vunpack.c.l.b16 %v115
  %v757 = vunpack.c.h.b16 %v115
  %v758 = vunpack.c.l.b16 %v116
  %v759 = vunpack.c.h.b16 %v116
  %v760 = vunpack.c.l.b16 %v117
  %v761 = vunpack.c.h.b16 %v117
  %v762 = vunpack.c.l.b16 %v118
  %v763 = vunpack.c.h.b16 %v118
  %v764 = vunpack.c.l.b16 %v119
  %v765 = vunpack.c.h.b16 %v119
  %v766 = vunpack.c.l.b16 %v120
  %v767 = vunpack.c.h.b16 %v120
  %v768 = vunpack.c.l.b16 %v121
  %v769 = vunpack.c.h.b16 %v121
  %v770 = vunpack.c.l.b16 %v122
  %v771 = vunpack.c.h.b16 %v122
  %v772 = vunpack.c.l.b16 %v123
  %v773 = vunpack.c.h.b16 %v123
  %v774 = vunpack.c.l.b16 %v124
  %v775 = vunpack.c.h.b16 %v124
  %v776 = vunpack.c.l.b16 %v125
  %v777 = vunpack.c.h.b16 %v125
  %v778 = vunpack.c.l.b16 %v126
  %v779 = vunpack.c.h.b16 %v126
  %v780 = vunpack.c.l.b16 %v127
  %v781 = vunpack.c.h.b16 %v127
  %v782 = vunpack.c.l.b16 %v128
  %v783 = vunpack.c.h.b16 %v128
  %v784 = vunpack.c.l.b16 %v129
  %v785 = vunpack.c.h.b16 %v129
  %v786 = vunpack.c.l.b16 %v130
  %v787 = vunpack.c.h.b16 %v130
  %v788 = vunpack.c.l.b16 %v131
  %v789 = vunpack.c.h.b16 %v131
  %v790 = vunpack.c.l.b16 %v132
  %v791 = vunpack.c.h.b16 %v132
  %v792 = vunpack.c.l.b16 %v133
  %v793 = vunpack.c.h.b16 %v133
  %v794 = vunpack.c.l.b16 %v134
  %v795 = vunpack.c.h.b16 %v134
  %v796 = vunpack.c.l.b16 %v135
  %v797 = vunpack.c.h.b16 %v135
  %v798 = vunpack.c.l.b16 %v136
  %v799 = vunpack.c.h.b16 %v136
  %v800 = vunpack.c.l.b16 %v137
  %v801 = vunpack.c.h.b16 %v137
  %v802 = vunpack.c.l.b16 %v138
  %v803 = vunpack.c.h.b16 %v138
  %v804 = vunpack.c.l.b16 %v139
  %v805 = vunpack.c.h.b16 %v139
  %v806 = vunpack.c.l.b16 %v140
  %v807 = vunpack.c.h.b16 %v140
  %v808 = vunpack.c.l.b16 %v141
  %v809 = vunpack.c.h.b16 %v141
  %v810 = vunpack.c.l.b16 %v142
  %v811 = vunpack.c.h.b16 %v142
  %v812 = vunpack.c.l.b16 %v143
  %v813 = vunpack.c.h.b16 %v143
  %v814 = vunpack.c.l.b16 %v144
  %v815 = vunpack.c.h.b16 %v144
  %v816 = vunpack.c.l.b16 %v145
  %v817 = vunpack.c.h.b16 %v145
  %v818 = vunpack.c.l.b16 %v146
  %v819 = vunpack.c.h.b16 %v146
  %v820 = vunpack.c.l.b16 %v147
  %v821 = vunpack.c.h.b16 %v147
  %v822 = vunpack.c.l.b16 %v148
  %v823 = vunpack.c.h.b16 %v148
  %v824 = vunpack.c.l.b16 %v149
  %v825 = vunpack.c.h.b16 %v149
  %v826 = vunpack.c.l.b16 %v150
  %v827 = vunpack.c.h.b16 %v150
  %v828 = vunpack.c.l.b16 %v151
  %v829 = vunpack.c.h.b16 %v151
  %v830 = vunpack.c.l.b16 %v152
  %v831 = vunpack.c.h.b16 %v152
  %v832 = vunpack.c.l.b16 %v153
  %v833 = vunpack.c.h.b16 %v153
  %v834 = vunpack.c.l.b16 %v154
  %v835 = vunpack.c.h.b16 %v154
  %v836 = vunpack.c.l.b16 %v155
  %v837 = vunpack.c.h.b16 %v155
  %v838 = vunpack.c.l.b16 %v156
  %v839 = vunpack.c.h.b16 %v156
  %v840 = vunpack.c.l.b16 %v157
  %v841 = vunpack.c.h.b16 %v157
  %v842 = vunpack.c.l.b16 %v158
  %v843 = vunpack.c.h.b16 %v158
  %v844 = vunpack.c.l.b16 %v159
  %v845 = vunpack.c.h.b16 %v159
  %v846 = vunpack.c.l.b16 %v160
  %v847 = vunpack.c.h.b16 %v160
  %v848 = vunpack.c.l.b16 %v161
  %v849 = vunpack.c.h.b16 %v161
  %v850 = vunpack.c.l.b16 %v162
  %v851 = vunpack.c.h.b16 %v162
  %v852 = vunpack.c.l.b16 %v163
  %v853 = vunpack.c.h.b16 %v163
  %v854 = vunpack.c.l.b16 %v164
  %v855 = vunpack.c.h.b16 %v164
  %v856 = vunpack.c.l.b16 %v165
  %v857 = vunpack.c.h.b16 %v165
  %v858 = vunpack.c.l.b16 %v166
  %v859 = vunpack.c.h.b16 %v166
  %v860 = vunpack.c.l.b16 %v167
  %v861 = vunpack.c.h.b16 %v167
  %v862 = vunpack.c.l.b16 %v168
  %v863 = vunpack.c.h.b16 %v168
  %v864 = vunpack.c.l.b16 %v169
  %v865 = vunpack.c.h.b16 %v169
  %v866 = vunpack.c.l.b16 %v170
  %v867 = vunpack.c.h.b16 %v170
  %v868 = vunpack.c.l.b16 %v171
  %v869 = vunpack.c.h.b16 %v171
  %v870 = vunpack.c.l.b16 %v172
  %v871 = vunpack.c.h.b16 %v172
  %v872 = vunpack.c.l.b16 %v173
  %v873 = vunpack.c.h.b16 %v173
  %v874 = vunpack.c.l.b16 %v174
  %v875 = vunpack.c.h.b16 %v174
  %v876 = vunpack.c.l.b16 %v175
  %v877 = vunpack.c.h.b16 %v175
  %v878 = vunpack.c.l.b16 %v176
  %v879 = vunpack.c.h.b16 %v176
  %v880 = vunpack.c.l.b16 %v177
  %v881 = vunpack.c.h.b16 %v177
  %v882 = vunpack.c.l.b16 %v178
  %v883 = vunpack.c.h.b16 %v178
  %v884 = vunpack.c.l.b16 %v179
  %v885 = vunpack.c.h.b16 %v179
  %v886 = vunpack.c.l.b16 %v180
  %v887 = vunpack.c.h.b16 %v180
  %v888 = vunpack.c.l.b16 %v181
  %v889 = vunpack.c.h.b16 %v181
  %v890 = vunpack.c.l.b16 %v182
  %v891 = vunpack.c.h.b16 %v182
  %v892 = vunpack.c.l.b16 %v183
  %v893 = vunpack.c.h.b16 %v183
  %v894 = vunpack.c.l.b16 %v184
  %v895 = vunpack.c.h.b16 %v184
  %v896 = vunpack.c.l.b16 %v185
  %v897 = vunpack.c.h.b16 %v185
  %v898 = vunpack.c.l.b16 %v186
  %v899 = vunpack.c.h.b16 %v186
  %v900 = vunpack.c.l.b16 %v187
  %v901 = vunpack.c.h.b16 %v187
  %v902 = vunpack.c.l.b16 %v188
  %v903 = vunpack.c.h.b16 %v188
  %v904 = vunpack.c.l.b16 %v189
  %v905 = vunpack.c.h.b16 %v189
  %v906 = vunpack.c.l.b16 %v190
  %v907 = vunpack.c.h.b16 %v190
  %v908 = vunpack.c.l.b16 %v191
  %v909 = vunpack.c.h.b16 %v191
  %v910 = vunpack.c.l.b16 %v192
  %v911 = vunpack.c.h.b16 %v192
  %v912 = vunpack.c.l.b16 %v193
  %v913 = vunpack.c.h.b16 %v193
  %v914 = vunpack.c.l.b16 %v194
  %v915 = vunpack.c.h.b16 %v194
  %v916 = vunpack.c.l.b16 %v195
  %v917 = vunpack.c.h.b16 %v195
  %v918 = vunpack.c.l.b16 %v196
  %v919 = vunpack.c.h.b16 %v196
  %v920 = vunpack.c.l.b16 %v197
  %v921 = vunpack.c.h.b16 %v197
  %v922 = vunpack.c.l.b16 %v198
  %v923 = vunpack.c.h.b16 %v198
  %v924 = vunpack.c.l.b16 %v199
  %v925 = vunpack.c.h.b16 %v199
  %v926 = vunpack.c.l.b16 %v200
  %v927 = vunpack.c.h.b16 %v200
  %v928 = vunpack.c.l.b16 %v201
  %v929 = vunpack.c.h.b16 %v201
  %v930 = vunpack.c.l.b16 %v202
  %v931 = vunpack.c.h.b16 %v202
  %v932 = vunpack.c.l.b16 %v203
  %v933 = vunpack.c.h.b16 %v203
  %v934 = vunpack.c.l.b16 %v204
  %v935 = vunpack.c.h.b16 %v204
  %v936 = vunpack.c.l.b16 %v205
  %v937 = vunpack.c.h.b16 %v205
  %v938 = vunpack.c.l.b16 %v206
  %v939 = vunpack.c.h.b16 %v206
  %v940 = vunpack.c.l.b16 %v207
  %v941 = vunpack.c.h.b16 %v207
  %v942 = vunpack.c.l.b16 %v208
  %v943 = vunpack.c.h.b16 %v208
  %v944 = vunpack.c.l.b16 %v209
  %v945 = vunpack.c.h.b16 %v209
  %v946 = vunpack.c.l.b16 %v210
  %v947 = vunpack.c.h.b16 %v210
  %v948 = vunpack.c.l.b16 %v211
  %v949 = vunpack.c.h.b16 %v211
  %v950 = vunpack.c.l.b16 %v212
  %v951 = vunpack.c.h.b16 %v212
  %v952 = vunpack.c.l.b16 %v213
  %v953 = vunpack.c.h.b16 %v213
  %v954 = vunpack.c.l.b16 %v214
  %v955 = vunpack.c.h.b16 %v214
  %v956 = vunpack.c.l.b16 %v215
  %v957 = vunpack.c.h.b16 %v215
  %v958 = vunpack.c.l.b16 %v216
  %v959 = vunpack.c.h.b16 %v216
  %v960 = vunpack.c.l.b16 %v217
  %v961 = vunpack.c.h.b16 %v217
  %v962 = vunpack.c.l.b16 %v218
  %v963 = vunpack.c.h.b16 %v218
  %v964 = vunpack.c.l.b16 %v219
  %v965 = vunpack.c.h.b16 %v219
  %v966 = vunpack.c.l.b16 %v220
  %v967 = vunpack.c.h.b16 %v220
  %v968 = vunpack.c.l.b16 %v221
  %v969 = vunpack.c.h.b16 %v221
  %v970 = vunpack.c.l.b16 %v222
  %v971 = vunpack.c.h.b16 %v222
  %v972 = vunpack.c.l.b16 %v223
  %v973 = vunpack.c.h.b16 %v223
  %v974 = vunpack.c.l.b16 %v224
  %v975 = vunpack.c.h.b16 %v224
  %v976 = vunpack.c.l.b16 %v225
  %v977 = vunpack.c.h.b16 %v225
  %v978 = vunpack.c.l.b16 %v226
  %v979 = vunpack.c.h.b16 %v226
  %v980 = vunpack.c.l.b16 %v227
  %v981 = vunpack.c.h.b16 %v227
  %v982 = vunpack.c.l.b16 %v228
  %v983 = vunpack.c.h.b16 %v228
  %v984 = vunpack.c.l.b16 %v229
  %v985 = vunpack.c.h.b16 %v229
  %v986 = vunpack.c.l.b16 %v230
  %v987 = vunpack.c.h.b16 %v230
  %v988 = vunpack.c.l.b16 %v231
  %v989 = vunpack.c.h.b16 %v231
  %v990 = vunpack.c.l.b16 %v232
  %v991 = vunpack.c.h.b16 %v232
  %v992 = vunpack.c.l.b16 %v233
  %v993 = vunpack.c.h.b16 %v233
  %v994 = vunpack.c.l.b16 %v234
  %v995 = vunpack.c.h.b16 %v234
  %v996 = vunpack.c.l.b16 %v235
  %v997 = vunpack.c.h.b16 %v235
  %v998 = vunpack.c.l.b16 %v236
  %v999 = vunpack.c.h.b16 %v236
  %v1000 = vunpack.c.l.b16 %v237
  %v1001 = vunpack.c.h.b16 %v237
  %v1002 = vunpack.c.l.b16 %v238
  %v1003 = vunpack.c.h.b16 %v238
  %v1004 = vunpack.c.l.b16 %v239
  %v1005 = vunpack.c.h.b16 %v239
  %v1006 = vunpack.c.l.b16 %v240
  %v1007 = vunpack.c.h.b16 %v240
  %v1008 = vunpack.c.l.b16 %v241
  %v1009 = vunpack.c.h.b16 %v241
  %v1010 = vunpack.c.l.b16 %v242
  %v1011 = vunpack.c.h.b16 %v242
  %v1012 = vunpack.c.l.b16 %v243
  %v1013 = vunpack.c.h.b16 %v243
  %v1014 = vunpack.c.l.b16 %v244
  %v1015 = vunpack.c.h.b16 %v244
  %v1016 = vunpack.c.l.b16 %v245
  %v1017 = vunpack.c.h.b16 %v245
  %v1018 = vunpack.c.l.b16 %v246
  %v1019 = vunpack.c.h.b16 %v246
  %v1020 = vunpack.c.l.b16 %v247
  %v1021 = vunpack.c.h.b16 %v247
  %v1022 = vunpack.c.l.b16 %v248
  %v1023 = vunpack.c.h.b16 %v248
  %v1024 = vunpack.c.l.b16 %v249
  %v1025 = vunpack.c.h.b16 %v249
  %v1026 = vunpack.c.l.b16 %v250
  %v1027 = vunpack.c.h.b16 %v250
  %v1028 = vunpack.c.l.b16 %v251
  %v1029 = vunpack.c.h.b16 %v251
  %v1030 = vunpack.c.l.b16 %v252
  %v1031 = vunpack.c.h.b16 %v252
  %v1032 = vunpack.c.l.b16 %v253
  %v1033 = vunpack.c.h.b16 %v253
  %v1034 = vunpack.c.l.b16 %v254
  %v1035 = vunpack.c.h.b16 %v254
  %v1036 = vunpack.c.l.b16 %v255
  %v1037 = vunpack.c.h.b16 %v255
  %v1038 = vunpack.c.l.b16 %v256
  %v1039 = vunpack.c.h.b16 %v256
  %v1040 = vunpack.c.l.b16 %v257
  %v1041 = vunpack.c.h.b16 %v257
  %v1042 = vunpack.c.l.b16 %v258
  %v1043 = vunpack.c.h.b16 %v258
  %v1044 = vunpack.c.l.b16 %v259
  %v1045 = vunpack.c.h.b16 %v259
  %v1046 = vunpack.c.l.b16 %v260
  %v1047 = vunpack.c.h.b16 %v260
  %v1048 = vunpack.c.l.b16 %v261
  %v1049 = vunpack.c.h.b16 %v261
  %v1050 = vunpack.c.l.b16 %v262
  %v1051 = vunpack.c.h.b16 %v262
  %v1052 = vunpack.c.l.b16 %v263
  %v1053 = vunpack.c.h.b16 %v263
  %v1054 = vunpack.c.l.b16 %v264
  %v1055 = vunpack.c.h.b16 %v264
  %v1056 = vunpack.c.l.b16 %v265
  %v1057 = vunpack.c.h.b16 %v265
  %v1058 = vunpack.c.l.b16 %v266
  %v1059 = vunpack.c.h.b16 %v266
  %v1060 = vunpack.c.l.b16 %v267
  %v1061 = vunpack.c.h.b16 %v267
  %v1062 = vunpack.c.l.b16 %v268
  %v1063 = vunpack.c.h.b16 %v268
  %v1064 = vunpack.c.l.b16 %v269
  %v1065 = vunpack.c.h.b16 %v269
  %v1066 = vunpack.c.l.b16 %v270
  %v1067 = vunpack.c.h.b16 %v270
  %v1068 = vunpack.c.l.b16 %v271
  %v1069 = vunpack.c.h.b16 %v271
  %v1070 = vunpack.c.l.b16 %v272
  %v1071 = vunpack.c.h.b16 %v272
  %v1072 = vunpack.c.l.b16 %v273
  %v1073 = vunpack.c.h.b16 %v273
  %v1074 = vpack.c.b16 %v564, %v562
  %v1075 = vpack.c.b16 %v565, %v563
  %v1076 = vpack.c.b16 %v568, %v566
  %v1077 = vpack.c.b16 %v569, %v567
  %v1078 = vpack.c.b16 %v572, %v570
  %v1079 = vpack.c.b16 %v573, %v571
  %v1080 = vpack.c.b16 %v576, %v574
  %v1081 = vpack.c.b16 %v577, %v575
  %v1082 = vpack.c.b16 %v580, %v578
  %v1083 = vpack.c.b16 %v581, %v579
  %v1084 = vpack.c.b16 %v584, %v582
  %v1085 = vpack.c.b16 %v585, %v583
  %v1086 = vpack.c.b16 %v588, %v586
  %v1087 = vpack.c.b16 %v589, %v587
  %v1088 = vpack.c.b16 %v592, %v590
  %v1089 = vpack.c.b16 %v593, %v591
  %v1090 = vpack.c.b16 %v596, %v594
  %v1091 = vpack.c.b16 %v597, %v595
  %v1092 = vpack.c.b16 %v600, %v598
  %v1093 = vpack.c.b16 %v601, %v599
  %v1094 = vpack.c.b16 %v604, %v602
  %v1095 = vpack.c.b16 %v605, %v603
  %v1096 = vpack.c.b16 %v608, %v606
  %v1097 = vpack.c.b16 %v609, %v607
  %v1098 = vpack.c.b16 %v612, %v610
  %v1099 = vpack.c.b16 %v613, %v611
  %v1100 = vpack.c.b16 %v616, %v614
  %v1101 = vpack.c.b16 %v617, %v615
  %v1102 = vpack.c.b16 %v620, %v618
  %v1103 = vpack.c.b16 %v621, %v619
  %v1104 = vpack.c.b16 %v624, %v622
  %v1105 = vpack.c.b16 %v625, %v623
  %v1106 = vpack.c.b16 %v628, %v626
  %v1107 = vpack.c.b16 %v629, %v627
  %v1108 = vpack.c.b16 %v632, %v630
  %v1109 = vpack.c.b16 %v633, %v631
  %v1110 = vpack.c.b16 %v636, %v634
  %v1111 = vpack.c.b16 %v637, %v635
  %v1112 = vpack.c.b16 %v640, %v638
  %v1113 = vpack.c.b16 %v641, %v639
  %v1114 = vpack.c.b16 %v644, %v642
  %v1115 = vpack.c.b16 %v645, %v643
  %v1116 = vpack.c.b16 %v648, %v646
  %v1117 = vpack.c.b16 %v649, %v647
  %v1118 = vpack.c.b16 %v652, %v650
  %v1119 = vpack.c.b16 %v653, %v651
  %v1120 = vpack.c.b16 %v656, %v654
  %v1121 = vpack.c.b16 %v657, %v655
  %v1122 = vpack.c.b16 %v660, %v658
  %v1123 = vpack.c.b16 %v661, %v659
  %v1124 = vpack.c.b16 %v664, %v662
  %v1125 = vpack.c.b16 %v665, %v663
  %v1126 = vpack.c.b16 %v668, %v666
  %v1127 = vpack.c.b16 %v669, %v667
  %v1128 = vpack.c.b16 %v672, %v670
  %v1129 = vpack.c.b16 %v673, %v671
  %v1130 = vpack.c.b16 %v676, %v674
  %v1131 = vpack.c.b16 %v677, %v675
  %v1132 = vpack.c.b16 %v680, %v678
  %v1133 = vpack.c.b16 %v681, %v679
  %v1134 = vpack.c.b16 %v684, %v682
  %v1135 = vpack.c.b16 %v685, %v683
  %v1136 = vpack.c.b16 %v688, %v686
  %v1137 = vpack.c.b16 %v689, %v687
  %v1138 = vpack.c.b16 %v692, %v690
  %v1139 = vpack.c.b16 %v693, %v691
  %v1140 = vpack.c.b16 %v696, %v694
  %v1141 = vpack.c.b16 %v697, %v695
  %v1142 = vpack.c.b16 %v700, %v698
  %v1143 = vpack.c.b16 %v701, %v699
  %v1144 = vpack.c.b16 %v704, %v702
  %v1145 = vpack.c.b16 %v705, %v703
  %v1146 = vpack.c.b16 %v708, %v706
  %v1147 = vpack.c.b16 %v709, %v707
  %v1148 = vpack.c.b16 %v712, %v710
  %v1149 = vpack.c.b16 %v713, %v711
  %v1150 = vpack.c.b16 %v716, %v714
  %v1151 = vpack.c.b16 %v717, %v715
  %v1152 = vpack.c.b16 %v720, %v718
  %v1153 = vpack.c.b16 %v721, %v719
  %v1154 = vpack.c.b16 %v724, %v722
  %v1155 = vpack.c.b16 %v725, %v723
  %v1156 = vpack.c.b16 %v728, %v726
  %v1157 = vpack.c.b16 %v729, %v727
  %v1158 = vpack.c.b16 %v732, %v730
  %v1159 = vpack.c.b16 %v733, %v731
  %v1160 = vpack.c.b16 %v736, %v734
  %v1161 = vpack.c.b16 %v737, %v735
  %v1162 = vpack.c.b16 %v740, %v738
  %v1163 = vpack.c.b16 %v741, %v739
  %v1164 = vpack.c.b16 %v744, %v742
  %v1165 = vpack.c.b16 %v745, %v743
  %v1166 = vpack.c.b16 %v748, %v746
  %v1167 = vpack.c.b16 %v749, %v747
  %v1168 = vpack.c.b16 %v752, %v750
  %v1169 = vpack.c.b16 %v753, %v751
  %v1170 = vpack.c.b16 %v756, %v754
  %v1171 = vpack.c.b16 %v757, %v755
  %v1172 = vpack.c.b16 %v760, %v758
  %v1173 = vpack.c.b16 %v761, %v759
  %v1174 = vpack.c.b16 %v764, %v762
  %v1175 = vpack.c.b16 %v765, %v763
  %v1176 = vpack.c.b16 %v768, %v766
  %v1177 = vpack.c.b16 %v769, %v767
  %v1178 = vpack.c.b16 %v772, %v770
  %v1179 = vpack.c.b16 %v773, %v771
  %v1180 = vpack.c.b16 %v776, %v774
  %v1181 = vpack.c.b16 %v777, %v775
  %v1182 = vpack.c.b16 %v780, %v778
  %v1183 = vpack.c.b16 %v781, %v779
  %v1184 = vpack.c.b16 %v784, %v782
  %v1185 = vpack.c.b16 %v785, %v783
  %v1186 = vpack.c.b16 %v788, %v786
  %v1187 = vpack.c.b16 %v789, %v787
  %v1188 = vpack.c.b16 %v792, %v790
  %v1189 = vpack.c.b16 %v793, %v791
  %v1190 = vpack.c.b16 %v796, %v794
  %v1191 = vpack.c.b16 %v797, %v795
  %v1192 = vpack.c.b16 %v800, %v798
  %v1193 = vpack.c.b16 %v801, %v799
  %v1194 = vpack.c.b16 %v804, %v802
  %v1195 = vpack.c.b16 %v805, %v803
  %v1196 = vpack.c.b16 %v808, %v806
  %v1197 = vpack.c.b16 %v809, %v807
  %v1198 = vpack.c.b16 %v812, %v810
  %v1199 = vpack.c.b16 %v813, %v811
  %v1200 = vpack.c.b16 %v816, %v814
  %v1201 = vpack.c.b16 %v817, %v815
  %v1202 = vpack.c.b16 %v820, %v818
  %v1203 = vpack.c.b16 %v821, %v819
  %v1204 = vpack.c.b16 %v824, %v822
  %v1205 = vpack.c.b16 %v825, %v823
  %v1206 = vpack.c.b16 %v828, %v826
  %v1207 = vpack.c.b16 %v829, %v827
  %v1208 = vpack.c.b16 %v832, %v830
  %v1209 = vpack.c.b16 %v833, %v831
  %v1210 = vpack.c.b16 %v836, %v834
  %v1211 = vpack.c.b16 %v837, %v835
  %v1212 = vpack.c.b16 %v840, %v838
  %v1213 = vpack.c.b16 %v841, %v839
  %v1214 = vpack.c.b16 %v844, %v842
  %v1215 = vpack.c.b16 %v845, %v843
  %v1216 = vpack.c.b16 %v848, %v846
  %v1217 = vpack.c.b16 %v849, %v847
  %v1218 = vpack.c.b16 %v852, %v850
  %v1219 = vpack.c.b16 %v853, %v851
  %v1220 = vpack.c.b16 %v856, %v854
  %v1221 = vpack.c.b16 %v857, %v855
  %v1222 = vpack.c.b16 %v860, %v858
  %v1223 = vpack.c.b16 %v861, %v859
  %v1224 = vpack.c.b16 %v864, %v862
  %v1225 = vpack.c.b16 %v865, %v863
  %v1226 = vpack.c.b16 %v868, %v866
  %v1227 = vpack.c.b16 %v869, %v867
  %v1228 = vpack.c.b16 %v872, %v870
  %v1229 = vpack.c.b16 %v873, %v871
  %v1230 = vpack.c.b16 %v876, %v874
  %v1231 = vpack.c.b16 %v877, %v875
  %v1232 = vpack.c.b16 %v880, %v878
  %v1233 = vpack.c.b16 %v881, %v879
  %v1234 = vpack.c.b16 %v884, %v882
  %v1235 = vpack.c.b16 %v885, %v883
  %v1236 = vpack.c.b16 %v888, %v886
  %v1237 = vpack.c.b16 %v889, %v887
  %v1238 = vpack.c.b16 %v892, %v890
  %v1239 = vpack.c.b16 %v893, %v891
  %v1240 = vpack.c.b16 %v896, %v894
  %v1241 = vpack.c.b16 %v897, %v895
  %v1242 = vpack.c.b16 %v900, %v898
  %v1243 = vpack.c.b16 %v901, %v899
  %v1244 = vpack.c.b16 %v904, %v902
  %v1245 = vpack.c.b16 %v905, %v903
  %v1246 = vpack.c.b16 %v908, %v906
  %v1247 = vpack.c.b16 %v909, %v907
  %v1248 = vpack.c.b16 %v912, %v910
  %v1249 = vpack.c.b16 %v913, %v911
  %v1250 = vpack.c.b16 %v916, %v914
  %v1251 = vpack.c.b16 %v917, %v915
  %v1252 = vpack.c.b16 %v920, %v918
  %v1253 = vpack.c.b16 %v921, %v919
  %v1254 = vpack.c.b16 %v924, %v922
  %v1255 = vpack.c.b16 %v925, %v923
  %v1256 = vpack.c.b16 %v928, %v926
  %v1257 = vpack.c.b16 %v929, %v927
  %v1258 = vpack.c.b16 %v932, %v930
  %v1259 = vpack.c.b16 %v933, %v931
  %v1260 = vpack.c.b16 %v936, %v934
  %v1261 = vpack.c.b16 %v937, %v935
  %v1262 = vpack.c.b16 %v940, %v938
  %v1263 = vpack.c.b16 %v941, %v939
  %v1264 = vpack.c.b16 %v944, %v942
  %v1265 = vpack.c.b16 %v945, %v943
  %v1266 = vpack.c.b16 %v948, %v946
  %v1267 = vpack.c.b16 %v949, %v947
  %v1268 = vpack.c.b16 %v952, %v950
  %v1269 = vpack.c.b16 %v953, %v951
  %v1270 = vpack.c.b16 %v956, %v954
  %v1271 = vpack.c.b16 %v957, %v955
  %v1272 = vpack.c.b16 %v960, %v958
  %v1273 = vpack.c.b16 %v961, %v959
  %v1274 = vpack.c.b16 %v964, %v962
  %v1275 = vpack.c.b16 %v965, %v963
  %v1276 = vpack.c.b16 %v968, %v966
  %v1277 = vpack.c.b16 %v969, %v967
  %v1278 = vpack.c.b16 %v972, %v970
  %v1279 = vpack.c.b16 %v973, %v971
  %v1280 = vpack.c.b16 %v976, %v974
  %v1281 = vpack.c.b16 %v977, %v975
  %v1282 = vpack.c.b16 %v980, %v978
  %v1283 = vpack.c.b16 %v981, %v979
  %v1284 = vpack.c.b16 %v984, %v982
  %v1285 = vpack.c.b16 %v985, %v983
  %v1286 = vpack.c.b16 %v988, %v986
  %v1287 = vpack.c.b16 %v989, %v987
  %v1288 = vpack.c.b16 %v992, %v990
  %v1289 = vpack.c.b16 %v993, %v991
  %v1290 = vpack.c.b16 %v996, %v994
  %v1291 = vpack.c.b16 %v997, %v995
  %v1292 = vpack.c.b16 %v1000, %v998
  %v1293 = vpack.c.b16 %v1001, %v999
  %v1294 = vpack.c.b16 %v1004, %v1002
  %v1295 = vpack.c.b16 %v1005, %v1003
  %v1296 = vpack.c.b16 %v1008, %v1006
  %v1297 = vpack.c.b16 %v1009, %v1007
  %v1298 = vpack.c.b16 %v1012, %v1010
  %v1299 = vpack.c.b16 %v1013, %v1011
  %v1300 = vpack.c.b16 %v1016, %v1014
  %v1301 = vpack.c.b16 %v1017, %v1015
  %v1302 = vpack.c.b16 %v1020, %v1018
  %v1303 = vpack.c.b16 %v1021, %v1019
  %v1304 = vpack.c.b16 %v1024, %v1022
  %v1305 = vpack.c.b16 %v1025, %v1023
  %v1306 = vpack.c.b16 %v1028, %v1026
  %v1307 = vpack.c.b16 %v1029, %v1027
  %v1308 = vpack.c.b16 %v1032, %v1030
  %v1309 = vpack.c.b16 %v1033, %v1031
  %v1310 = vpack.c.b16 %v1036, %v1034
  %v1311 = vpack.c.b16 %v1037, %v1035
  %v1312 = vpack.c.b16 %v1040, %v1038
  %v1313 = vpack.c.b16 %v1041, %v1039
  %v1314 = vpack.c.b16 %v1044, %v1042
  %v1315 = vpack.c.b16 %v1045, %v1043
  %v1316 = vpack.c.b16 %v1048, %v1046
  %v1317 = vpack.c.b16 %v1049, %v1047
  %v1318 = vpack.c.b16 %v1052, %v1050
  %v1319 = vpack.c.b16 %v1053, %v1051
  %v1320 = vpack.c.b16 %v1056, %v1054
  %v1321 = vpack.c.b16 %v1057, %v1055
  %v1322 = vpack.c.b16 %v1060, %v1058
  %v1323 = vpack.c.b16 %v1061, %v1059
  %v1324 = vpack.c.b16 %v1064, %v1062
  %v1325 = vpack.c.b16 %v1065, %v1063
  %v1326 = vpack.c.b16 %v1068, %v1066
  %v1327 = vpack.c.b16 %v1069, %v1067
  %v1328 = vpack.c.b16 %v1072, %v1070
  %v1329 = vpack.c.b16 %v1073, %v1071
  %v1618 = vunpack.c.l.b16 %v274
  %v1619 = vunpack.c.l.b16 %v275
  %v1620 = vunpack.c.l.b16 %v276
  %v1621 = vunpack.c.l.b16 %v277
  %v1622 = vunpack.c.l.b16 %v278
  %v1623 = vunpack.c.l.b16 %v279
  %v1624 = vunpack.c.l.b16 %v280
  %v1625 = vunpack.c.l.b16 %v281
  %v1626 = vunpack.c.l.b16 %v282
  %v1627 = vunpack.c.l.b16 %v283
  %v1628 = vunpack.c.l.b16 %v284
  %v1629 = vunpack.c.l.b16 %v285
  %v1630 = vunpack.c.l.b16 %v286
  %v1631 = vunpack.c.l.b16 %v287
  %v1632 = vunpack.c.l.b16 %v288
  %v1633 = vunpack.c.l.b16 %v289
  %v1634 = vunpack.c.l.b16 %v290
  %v1635 = vunpack.c.l.b16 %v291
  %v1636 = vunpack.c.l.b16 %v292
  %v1637 = vunpack.c.l.b16 %v293
  %v1638 = vunpack.c.l.b16 %v294
  %v1639 = vunpack.c.l.b16 %v295
  %v1640 = vunpack.c.l.b16 %v296
  %v1641 = vunpack.c.l.b16 %v297
  %v1642 = vunpack.c.l.b16 %v298
  %v1643 = vunpack.c.l.b16 %v299
  %v1644 = vunpack.c.l.b16 %v300
  %v1645 = vunpack.c.l.b16 %v301
  %v1646 = vunpack.c.l.b16 %v302
  %v1647 = vunpack.c.l.b16 %v303
  %v1648 = vunpack.c.l.b16 %v304
  %v1649 = vunpack.c.l.b16 %v305
  %v1650 = vpack.c.b16 %v1619, %v1618
  %v1651 = vpack.c.b16 %v1621, %v1620
  %v1652 = vpack.c.b16 %v1623, %v1622
  %v1653 = vpack.c.b16 %v1625, %v1624
  %v1654 = vpack.c.b16 %v1627, %v1626
  %v1655 = vpack.c.b16 %v1629, %v1628
  %v1656 = vpack.c.b16 %v1631, %v1630
  %v1657 = vpack.c.b16 %v1633, %v1632
  %v1658 = vpack.c.b16 %v1635, %v1634
  %v1659 = vpack.c.b16 %v1637, %v1636
  %v1660 = vpack.c.b16 %v1639, %v1638
  %v1661 = vpack.c.b16 %v1641, %v1640
  %v1662 = vpack.c.b16 %v1643, %v1642
  %v1663 = vpack.c.b16 %v1645, %v1644
  %v1664 = vpack.c.b16 %v1647, %v1646
  %v1665 = vpack.c.b16 %v1649, %v1648
  %1682 = vmatprep.subr.bf16.mxu0 0
  %1683 = vmatpush1.bf16.msra.mxu0 %v1657
  %1684 = vmatprep.subr.bf16.mxu0 0
  %1685 = vmatpush1.bf16.msra.mxu0 %v1656
  %1686 = vmatprep.subr.bf16.mxu0 0
  %1687 = vmatpush1.bf16.msra.mxu0 %v1655
  %1688 = vmatprep.subr.bf16.mxu0 0
  %1689 = vmatpush1.bf16.msra.mxu0 %v1654
  %1690 = vmatprep.subr.bf16.mxu0 0
  %1691 = vmatpush1.bf16.msra.mxu0 %v1653
  %1692 = vmatprep.subr.bf16.mxu0 0
  %1693 = vmatpush1.bf16.msra.mxu0 %v1652
  %1694 = vmatprep.subr.bf16.mxu0 0
  %1695 = vmatpush1.bf16.msra.mxu0 %v1651
  %1696 = vmatprep.subr.bf16.mxu0 0
  %1697 = vmatpush1.bf16.msra.mxu0 %v1650
  %1698 = vmatprep.subr.bf16.mxu0 0
  %1699 = vmatpush2.bf16.msra.mxu0 %v1665
  %1700 = vmatprep.subr.bf16.mxu0 0
  %1701 = vmatpush2.bf16.msra.mxu0 %v1664
  %1702 = vmatprep.subr.bf16.mxu0 0
  %1703 = vmatpush2.bf16.msra.mxu0 %v1663
  %1704 = vmatprep.subr.bf16.mxu0 0
  %1705 = vmatpush2.bf16.msra.mxu0 %v1662
  %1706 = vmatprep.subr.bf16.mxu0 0
  %1707 = vmatpush2.bf16.msra.mxu0 %v1661
  %1708 = vmatprep.subr.bf16.mxu0 0
  %1709 = vmatpush2.bf16.msra.mxu0 %v1660
  %1710 = vmatprep.subr.bf16.mxu0 0
  %1711 = vmatpush2.bf16.msra.mxu0 %v1659
  %1712 = vmatprep.subr.bf16.mxu0 0
  %1713 = vmatpush2.bf16.msra.mxu0 %v1658
  %1714 = vmatprep.mubr.bf16.mxu0 %v1075
  %1715 = vmatmul.mubr.bf16.gmra.mxu0 %v1074
  %v1716 = vpop.f32.mrf.mxu0
  %v1717 = vadd.f32 0.0, %v1716
  %v1718 = vpop.f32.mrf.mxu0
  %v1719 = vpop.f32.mrf.mxu0
  %v1720 = vadd.f32 0.0, %v1719
  %v1721 = vpop.f32.mrf.mxu0
  %1722 = vmatprep.mubr.bf16.mxu0 %v1077
  %1723 = vmatmul.mubr.bf16.gmra.mxu0 %v1076
  %v1724 = vpop.f32.mrf.mxu0
  %v1725 = vadd.f32 0.0, %v1724
  %v1726 = vpop.f32.mrf.mxu0
  %v1727 = vpop.f32.mrf.mxu0
  %v1728 = vadd.f32 0.0, %v1727
  %v1729 = vpop.f32.mrf.mxu0
  %1730 = vmatprep.mubr.bf16.mxu0 %v1079
  %1731 = vmatmul.mubr.bf16.gmra.mxu0 %v1078
  %v1732 = vpop.f32.mrf.mxu0
  %v1733 = vadd.f32 0.0, %v1732
  %v1734 = vpop.f32.mrf.mxu0
  %v1735 = vpop.f32.mrf.mxu0
  %v1736 = vadd.f32 0.0, %v1735
  %v1737 = vpop.f32.mrf.mxu0
  %1738 = vmatprep.mubr.bf16.mxu0 %v1081
  %1739 = vmatmul.mubr.bf16.gmra.mxu0 %v1080
  %v1740 = vpop.f32.mrf.mxu0
  %v1741 = vadd.f32 0.0, %v1740
  %v1742 = vpop.f32.mrf.mxu0
  %v1743 = vpop.f32.mrf.mxu0
  %v1744 = vadd.f32 0.0, %v1743
  %v1745 = vpop.f32.mrf.mxu0
  %1746 = vmatprep.mubr.bf16.mxu0 %v1083
  %1747 = vmatmul.mubr.bf16.gmra.mxu0 %v1082
  %v1748 = vpop.f32.mrf.mxu0
  %v1749 = vadd.f32 0.0, %v1748
  %v1750 = vpop.f32.mrf.mxu0
  %v1751 = vpop.f32.mrf.mxu0
  %v1752 = vadd.f32 0.0, %v1751
  %v1753 = vpop.f32.mrf.mxu0
  %1754 = vmatprep.mubr.bf16.mxu0 %v1085
  %1755 = vmatmul.mubr.bf16.gmra.mxu0 %v1084
  %v1756 = vpop.f32.mrf.mxu0
  %v1757 = vadd.f32 0.0, %v1756
  %v1758 = vpop.f32.mrf.mxu0
  %v1759 = vpop.f32.mrf.mxu0
  %v1760 = vadd.f32 0.0, %v1759
  %v1761 = vpop.f32.mrf.mxu0
  %1762 = vmatprep.mubr.bf16.mxu0 %v1087
  %1763 = vmatmul.mubr.bf16.gmra.mxu0 %v1086
  %v1764 = vpop.f32.mrf.mxu0
  %v1765 = vadd.f32 0.0, %v1764
  %v1766 = vpop.f32.mrf.mxu0
  %v1767 = vpop.f32.mrf.mxu0
  %v1768 = vadd.f32 0.0, %v1767
  %v1769 = vpop.f32.mrf.mxu0
  %1770 = vmatprep.mubr.bf16.mxu0 %v1089
  %1771 = vmatmul.mubr.bf16.gmra.mxu0 %v1088
  %v1772 = vpop.f32.mrf.mxu0
  %v1773 = vadd.f32 0.0, %v1772
  %v1774 = vpop.f32.mrf.mxu0
  %v1775 = vpop.f32.mrf.mxu0
  %v1776 = vadd.f32 0.0, %v1775
  %v1777 = vpop.f32.mrf.mxu0
  %1778 = vmatprep.mubr.bf16.mxu0 %v1091
  %1779 = vmatmul.mubr.bf16.gmra.mxu0 %v1090
  %v1780 = vpop.f32.mrf.mxu0
  %v1781 = vadd.f32 0.0, %v1780
  %v1782 = vpop.f32.mrf.mxu0
  %v1783 = vpop.f32.mrf.mxu0
  %v1784 = vadd.f32 0.0, %v1783
  %v1785 = vpop.f32.mrf.mxu0
  %1786 = vmatprep.mubr.bf16.mxu0 %v1093
  %1787 = vmatmul.mubr.bf16.gmra.mxu0 %v1092
  %v1788 = vpop.f32.mrf.mxu0
  %v1789 = vadd.f32 0.0, %v1788
  %v1790 = vpop.f32.mrf.mxu0
  %v1791 = vpop.f32.mrf.mxu0
  %v1792 = vadd.f32 0.0, %v1791
  %v1793 = vpop.f32.mrf.mxu0
  %1794 = vmatprep.mubr.bf16.mxu0 %v1095
  %1795 = vmatmul.mubr.bf16.gmra.mxu0 %v1094
  %v1796 = vpop.f32.mrf.mxu0
  %v1797 = vadd.f32 0.0, %v1796
  %v1798 = vpop.f32.mrf.mxu0
  %v1799 = vpop.f32.mrf.mxu0
  %v1800 = vadd.f32 0.0, %v1799
  %v1801 = vpop.f32.mrf.mxu0
  %1802 = vmatprep.mubr.bf16.mxu0 %v1097
  %1803 = vmatmul.mubr.bf16.gmra.mxu0 %v1096
  %v1804 = vpop.f32.mrf.mxu0
  %v1805 = vadd.f32 0.0, %v1804
  %v1806 = vpop.f32.mrf.mxu0
  %v1807 = vpop.f32.mrf.mxu0
  %v1808 = vadd.f32 0.0, %v1807
  %v1809 = vpop.f32.mrf.mxu0
  %1810 = vmatprep.mubr.bf16.mxu0 %v1099
  %1811 = vmatmul.mubr.bf16.gmra.mxu0 %v1098
  %v1812 = vpop.f32.mrf.mxu0
  %v1813 = vadd.f32 0.0, %v1812
  %v1814 = vpop.f32.mrf.mxu0
  %v1815 = vpop.f32.mrf.mxu0
  %v1816 = vadd.f32 0.0, %v1815
  %v1817 = vpop.f32.mrf.mxu0
  %1818 = vmatprep.mubr.bf16.mxu0 %v1101
  %1819 = vmatmul.mubr.bf16.gmra.mxu0 %v1100
  %v1820 = vpop.f32.mrf.mxu0
  %v1821 = vadd.f32 0.0, %v1820
  %v1822 = vpop.f32.mrf.mxu0
  %v1823 = vpop.f32.mrf.mxu0
  %v1824 = vadd.f32 0.0, %v1823
  %v1825 = vpop.f32.mrf.mxu0
  %1826 = vmatprep.mubr.bf16.mxu0 %v1103
  %1827 = vmatmul.mubr.bf16.gmra.mxu0 %v1102
  %v1828 = vpop.f32.mrf.mxu0
  %v1829 = vadd.f32 0.0, %v1828
  %v1830 = vpop.f32.mrf.mxu0
  %v1831 = vpop.f32.mrf.mxu0
  %v1832 = vadd.f32 0.0, %v1831
  %v1833 = vpop.f32.mrf.mxu0
  %1834 = vmatprep.mubr.bf16.mxu0 %v1105
  %1835 = vmatmul.mubr.bf16.gmra.mxu0 %v1104
  %v1836 = vpop.f32.mrf.mxu0
  %v1837 = vadd.f32 0.0, %v1836
  %v1838 = vpop.f32.mrf.mxu0
  %v1839 = vpop.f32.mrf.mxu0
  %v1840 = vadd.f32 0.0, %v1839
  %v1841 = vpop.f32.mrf.mxu0
  %1842 = vmatprep.mubr.bf16.mxu0 %v1107
  %1843 = vmatmul.mubr.bf16.gmra.mxu0 %v1106
  %v1844 = vpop.f32.mrf.mxu0
  %v1845 = vadd.f32 0.0, %v1844
  %v1846 = vpop.f32.mrf.mxu0
  %v1847 = vpop.f32.mrf.mxu0
  %v1848 = vadd.f32 0.0, %v1847
  %v1849 = vpop.f32.mrf.mxu0
  %1850 = vmatprep.mubr.bf16.mxu0 %v1109
  %1851 = vmatmul.mubr.bf16.gmra.mxu0 %v1108
  %v1852 = vpop.f32.mrf.mxu0
  %v1853 = vadd.f32 0.0, %v1852
  %v1854 = vpop.f32.mrf.mxu0
  %v1855 = vpop.f32.mrf.mxu0
  %v1856 = vadd.f32 0.0, %v1855
  %v1857 = vpop.f32.mrf.mxu0
  %1858 = vmatprep.mubr.bf16.mxu0 %v1111
  %1859 = vmatmul.mubr.bf16.gmra.mxu0 %v1110
  %v1860 = vpop.f32.mrf.mxu0
  %v1861 = vadd.f32 0.0, %v1860
  %v1862 = vpop.f32.mrf.mxu0
  %v1863 = vpop.f32.mrf.mxu0
  %v1864 = vadd.f32 0.0, %v1863
  %v1865 = vpop.f32.mrf.mxu0
  %1866 = vmatprep.mubr.bf16.mxu0 %v1113
  %1867 = vmatmul.mubr.bf16.gmra.mxu0 %v1112
  %v1868 = vpop.f32.mrf.mxu0
  %v1869 = vadd.f32 0.0, %v1868
  %v1870 = vpop.f32.mrf.mxu0
  %v1871 = vpop.f32.mrf.mxu0
  %v1872 = vadd.f32 0.0, %v1871
  %v1873 = vpop.f32.mrf.mxu0
  %1874 = vmatprep.mubr.bf16.mxu0 %v1115
  %1875 = vmatmul.mubr.bf16.gmra.mxu0 %v1114
  %v1876 = vpop.f32.mrf.mxu0
  %v1877 = vadd.f32 0.0, %v1876
  %v1878 = vpop.f32.mrf.mxu0
  %v1879 = vpop.f32.mrf.mxu0
  %v1880 = vadd.f32 0.0, %v1879
  %v1881 = vpop.f32.mrf.mxu0
  %1882 = vmatprep.mubr.bf16.mxu0 %v1117
  %1883 = vmatmul.mubr.bf16.gmra.mxu0 %v1116
  %v1884 = vpop.f32.mrf.mxu0
  %v1885 = vadd.f32 0.0, %v1884
  %v1886 = vpop.f32.mrf.mxu0
  %v1887 = vpop.f32.mrf.mxu0
  %v1888 = vadd.f32 0.0, %v1887
  %v1889 = vpop.f32.mrf.mxu0
  %1890 = vmatprep.mubr.bf16.mxu0 %v1119
  %1891 = vmatmul.mubr.bf16.gmra.mxu0 %v1118
  %v1892 = vpop.f32.mrf.mxu0
  %v1893 = vadd.f32 0.0, %v1892
  %v1894 = vpop.f32.mrf.mxu0
  %v1895 = vpop.f32.mrf.mxu0
  %v1896 = vadd.f32 0.0, %v1895
  %v1897 = vpop.f32.mrf.mxu0
  %1898 = vmatprep.mubr.bf16.mxu0 %v1121
  %1899 = vmatmul.mubr.bf16.gmra.mxu0 %v1120
  %v1900 = vpop.f32.mrf.mxu0
  %v1901 = vadd.f32 0.0, %v1900
  %v1902 = vpop.f32.mrf.mxu0
  %v1903 = vpop.f32.mrf.mxu0
  %v1904 = vadd.f32 0.0, %v1903
  %v1905 = vpop.f32.mrf.mxu0
  %1906 = vmatprep.mubr.bf16.mxu0 %v1123
  %1907 = vmatmul.mubr.bf16.gmra.mxu0 %v1122
  %v1908 = vpop.f32.mrf.mxu0
  %v1909 = vadd.f32 0.0, %v1908
  %v1910 = vpop.f32.mrf.mxu0
  %v1911 = vpop.f32.mrf.mxu0
  %v1912 = vadd.f32 0.0, %v1911
  %v1913 = vpop.f32.mrf.mxu0
  %1914 = vmatprep.mubr.bf16.mxu0 %v1125
  %1915 = vmatmul.mubr.bf16.gmra.mxu0 %v1124
  %v1916 = vpop.f32.mrf.mxu0
  %v1917 = vadd.f32 0.0, %v1916
  %v1918 = vpop.f32.mrf.mxu0
  %v1919 = vpop.f32.mrf.mxu0
  %v1920 = vadd.f32 0.0, %v1919
  %v1921 = vpop.f32.mrf.mxu0
  %1922 = vmatprep.mubr.bf16.mxu0 %v1127
  %1923 = vmatmul.mubr.bf16.gmra.mxu0 %v1126
  %v1924 = vpop.f32.mrf.mxu0
  %v1925 = vadd.f32 0.0, %v1924
  %v1926 = vpop.f32.mrf.mxu0
  %v1927 = vpop.f32.mrf.mxu0
  %v1928 = vadd.f32 0.0, %v1927
  %v1929 = vpop.f32.mrf.mxu0
  %1930 = vmatprep.mubr.bf16.mxu0 %v1129
  %1931 = vmatmul.mubr.bf16.gmra.mxu0 %v1128
  %v1932 = vpop.f32.mrf.mxu0
  %v1933 = vadd.f32 0.0, %v1932
  %v1934 = vpop.f32.mrf.mxu0
  %v1935 = vpop.f32.mrf.mxu0
  %v1936 = vadd.f32 0.0, %v1935
  %v1937 = vpop.f32.mrf.mxu0
  %1938 = vmatprep.mubr.bf16.mxu0 %v1131
  %1939 = vmatmul.mubr.bf16.gmra.mxu0 %v1130
  %v1940 = vpop.f32.mrf.mxu0
  %v1941 = vadd.f32 0.0, %v1940
  %v1942 = vpop.f32.mrf.mxu0
  %v1943 = vpop.f32.mrf.mxu0
  %v1944 = vadd.f32 0.0, %v1943
  %v1945 = vpop.f32.mrf.mxu0
  %1946 = vmatprep.mubr.bf16.mxu0 %v1133
  %1947 = vmatmul.mubr.bf16.gmra.mxu0 %v1132
  %v1948 = vpop.f32.mrf.mxu0
  %v1949 = vadd.f32 0.0, %v1948
  %v1950 = vpop.f32.mrf.mxu0
  %v1951 = vpop.f32.mrf.mxu0
  %v1952 = vadd.f32 0.0, %v1951
  %v1953 = vpop.f32.mrf.mxu0
  %1954 = vmatprep.mubr.bf16.mxu0 %v1135
  %1955 = vmatmul.mubr.bf16.gmra.mxu0 %v1134
  %v1956 = vpop.f32.mrf.mxu0
  %v1957 = vadd.f32 0.0, %v1956
  %v1958 = vpop.f32.mrf.mxu0
  %v1959 = vpop.f32.mrf.mxu0
  %v1960 = vadd.f32 0.0, %v1959
  %v1961 = vpop.f32.mrf.mxu0
  %1962 = vmatprep.mubr.bf16.mxu0 %v1137
  %1963 = vmatmul.mubr.bf16.gmra.mxu0 %v1136
  %v1964 = vpop.f32.mrf.mxu0
  %v1965 = vadd.f32 0.0, %v1964
  %v1966 = vpop.f32.mrf.mxu0
  %v1967 = vpop.f32.mrf.mxu0
  %v1968 = vadd.f32 0.0, %v1967
  %v1969 = vpop.f32.mrf.mxu0
  %1970 = vmatprep.mubr.bf16.mxu0 %v1139
  %1971 = vmatmul.mubr.bf16.gmra.mxu0 %v1138
  %v1972 = vpop.f32.mrf.mxu0
  %v1973 = vadd.f32 0.0, %v1972
  %v1974 = vpop.f32.mrf.mxu0
  %v1975 = vpop.f32.mrf.mxu0
  %v1976 = vadd.f32 0.0, %v1975
  %v1977 = vpop.f32.mrf.mxu0
  %1978 = vmatprep.mubr.bf16.mxu0 %v1141
  %1979 = vmatmul.mubr.bf16.gmra.mxu0 %v1140
  %v1980 = vpop.f32.mrf.mxu0
  %v1981 = vadd.f32 0.0, %v1980
  %v1982 = vpop.f32.mrf.mxu0
  %v1983 = vpop.f32.mrf.mxu0
  %v1984 = vadd.f32 0.0, %v1983
  %v1985 = vpop.f32.mrf.mxu0
  %1986 = vmatprep.mubr.bf16.mxu0 %v1143
  %1987 = vmatmul.mubr.bf16.gmra.mxu0 %v1142
  %v1988 = vpop.f32.mrf.mxu0
  %v1989 = vadd.f32 0.0, %v1988
  %v1990 = vpop.f32.mrf.mxu0
  %v1991 = vpop.f32.mrf.mxu0
  %v1992 = vadd.f32 0.0, %v1991
  %v1993 = vpop.f32.mrf.mxu0
  %1994 = vmatprep.mubr.bf16.mxu0 %v1145
  %1995 = vmatmul.mubr.bf16.gmra.mxu0 %v1144
  %v1996 = vpop.f32.mrf.mxu0
  %v1997 = vadd.f32 0.0, %v1996
  %v1998 = vpop.f32.mrf.mxu0
  %v1999 = vpop.f32.mrf.mxu0
  %v2000 = vadd.f32 0.0, %v1999
  %v2001 = vpop.f32.mrf.mxu0
  %2002 = vmatprep.mubr.bf16.mxu0 %v1147
  %2003 = vmatmul.mubr.bf16.gmra.mxu0 %v1146
  %v2004 = vpop.f32.mrf.mxu0
  %v2005 = vadd.f32 0.0, %v2004
  %v2006 = vpop.f32.mrf.mxu0
  %v2007 = vpop.f32.mrf.mxu0
  %v2008 = vadd.f32 0.0, %v2007
  %v2009 = vpop.f32.mrf.mxu0
  %2010 = vmatprep.mubr.bf16.mxu0 %v1149
  %2011 = vmatmul.mubr.bf16.gmra.mxu0 %v1148
  %v2012 = vpop.f32.mrf.mxu0
  %v2013 = vadd.f32 0.0, %v2012
  %v2014 = vpop.f32.mrf.mxu0
  %v2015 = vpop.f32.mrf.mxu0
  %v2016 = vadd.f32 0.0, %v2015
  %v2017 = vpop.f32.mrf.mxu0
  %2018 = vmatprep.mubr.bf16.mxu0 %v1151
  %2019 = vmatmul.mubr.bf16.gmra.mxu0 %v1150
  %v2020 = vpop.f32.mrf.mxu0
  %v2021 = vadd.f32 0.0, %v2020
  %v2022 = vpop.f32.mrf.mxu0
  %v2023 = vpop.f32.mrf.mxu0
  %v2024 = vadd.f32 0.0, %v2023
  %v2025 = vpop.f32.mrf.mxu0
  %2026 = vmatprep.mubr.bf16.mxu0 %v1153
  %2027 = vmatmul.mubr.bf16.gmra.mxu0 %v1152
  %v2028 = vpop.f32.mrf.mxu0
  %v2029 = vadd.f32 0.0, %v2028
  %v2030 = vpop.f32.mrf.mxu0
  %v2031 = vpop.f32.mrf.mxu0
  %v2032 = vadd.f32 0.0, %v2031
  %v2033 = vpop.f32.mrf.mxu0
  %2034 = vmatprep.mubr.bf16.mxu0 %v1155
  %2035 = vmatmul.mubr.bf16.gmra.mxu0 %v1154
  %v2036 = vpop.f32.mrf.mxu0
  %v2037 = vadd.f32 0.0, %v2036
  %v2038 = vpop.f32.mrf.mxu0
  %v2039 = vpop.f32.mrf.mxu0
  %v2040 = vadd.f32 0.0, %v2039
  %v2041 = vpop.f32.mrf.mxu0
  %2042 = vmatprep.mubr.bf16.mxu0 %v1157
  %2043 = vmatmul.mubr.bf16.gmra.mxu0 %v1156
  %v2044 = vpop.f32.mrf.mxu0
  %v2045 = vadd.f32 0.0, %v2044
  %v2046 = vpop.f32.mrf.mxu0
  %v2047 = vpop.f32.mrf.mxu0
  %v2048 = vadd.f32 0.0, %v2047
  %v2049 = vpop.f32.mrf.mxu0
  %2050 = vmatprep.mubr.bf16.mxu0 %v1159
  %2051 = vmatmul.mubr.bf16.gmra.mxu0 %v1158
  %v2052 = vpop.f32.mrf.mxu0
  %v2053 = vadd.f32 0.0, %v2052
  %v2054 = vpop.f32.mrf.mxu0
  %v2055 = vpop.f32.mrf.mxu0
  %v2056 = vadd.f32 0.0, %v2055
  %v2057 = vpop.f32.mrf.mxu0
  %2058 = vmatprep.mubr.bf16.mxu0 %v1161
  %2059 = vmatmul.mubr.bf16.gmra.mxu0 %v1160
  %v2060 = vpop.f32.mrf.mxu0
  %v2061 = vadd.f32 0.0, %v2060
  %v2062 = vpop.f32.mrf.mxu0
  %v2063 = vpop.f32.mrf.mxu0
  %v2064 = vadd.f32 0.0, %v2063
  %v2065 = vpop.f32.mrf.mxu0
  %2066 = vmatprep.mubr.bf16.mxu0 %v1163
  %2067 = vmatmul.mubr.bf16.gmra.mxu0 %v1162
  %v2068 = vpop.f32.mrf.mxu0
  %v2069 = vadd.f32 0.0, %v2068
  %v2070 = vpop.f32.mrf.mxu0
  %v2071 = vpop.f32.mrf.mxu0
  %v2072 = vadd.f32 0.0, %v2071
  %v2073 = vpop.f32.mrf.mxu0
  %2074 = vmatprep.mubr.bf16.mxu0 %v1165
  %2075 = vmatmul.mubr.bf16.gmra.mxu0 %v1164
  %v2076 = vpop.f32.mrf.mxu0
  %v2077 = vadd.f32 0.0, %v2076
  %v2078 = vpop.f32.mrf.mxu0
  %v2079 = vpop.f32.mrf.mxu0
  %v2080 = vadd.f32 0.0, %v2079
  %v2081 = vpop.f32.mrf.mxu0
  %2082 = vmatprep.mubr.bf16.mxu0 %v1167
  %2083 = vmatmul.mubr.bf16.gmra.mxu0 %v1166
  %v2084 = vpop.f32.mrf.mxu0
  %v2085 = vadd.f32 0.0, %v2084
  %v2086 = vpop.f32.mrf.mxu0
  %v2087 = vpop.f32.mrf.mxu0
  %v2088 = vadd.f32 0.0, %v2087
  %v2089 = vpop.f32.mrf.mxu0
  %2090 = vmatprep.mubr.bf16.mxu0 %v1169
  %2091 = vmatmul.mubr.bf16.gmra.mxu0 %v1168
  %v2092 = vpop.f32.mrf.mxu0
  %v2093 = vadd.f32 0.0, %v2092
  %v2094 = vpop.f32.mrf.mxu0
  %v2095 = vpop.f32.mrf.mxu0
  %v2096 = vadd.f32 0.0, %v2095
  %v2097 = vpop.f32.mrf.mxu0
  %2098 = vmatprep.mubr.bf16.mxu0 %v1171
  %2099 = vmatmul.mubr.bf16.gmra.mxu0 %v1170
  %v2100 = vpop.f32.mrf.mxu0
  %v2101 = vadd.f32 0.0, %v2100
  %v2102 = vpop.f32.mrf.mxu0
  %v2103 = vpop.f32.mrf.mxu0
  %v2104 = vadd.f32 0.0, %v2103
  %v2105 = vpop.f32.mrf.mxu0
  %2106 = vmatprep.mubr.bf16.mxu0 %v1173
  %2107 = vmatmul.mubr.bf16.gmra.mxu0 %v1172
  %v2108 = vpop.f32.mrf.mxu0
  %v2109 = vadd.f32 0.0, %v2108
  %v2110 = vpop.f32.mrf.mxu0
  %v2111 = vpop.f32.mrf.mxu0
  %v2112 = vadd.f32 0.0, %v2111
  %v2113 = vpop.f32.mrf.mxu0
  %2114 = vmatprep.mubr.bf16.mxu0 %v1175
  %2115 = vmatmul.mubr.bf16.gmra.mxu0 %v1174
  %v2116 = vpop.f32.mrf.mxu0
  %v2117 = vadd.f32 0.0, %v2116
  %v2118 = vpop.f32.mrf.mxu0
  %v2119 = vpop.f32.mrf.mxu0
  %v2120 = vadd.f32 0.0, %v2119
  %v2121 = vpop.f32.mrf.mxu0
  %2122 = vmatprep.mubr.bf16.mxu0 %v1177
  %2123 = vmatmul.mubr.bf16.gmra.mxu0 %v1176
  %v2124 = vpop.f32.mrf.mxu0
  %v2125 = vadd.f32 0.0, %v2124
  %v2126 = vpop.f32.mrf.mxu0
  %v2127 = vpop.f32.mrf.mxu0
  %v2128 = vadd.f32 0.0, %v2127
  %v2129 = vpop.f32.mrf.mxu0
  %2130 = vmatprep.mubr.bf16.mxu0 %v1179
  %2131 = vmatmul.mubr.bf16.gmra.mxu0 %v1178
  %v2132 = vpop.f32.mrf.mxu0
  %v2133 = vadd.f32 0.0, %v2132
  %v2134 = vpop.f32.mrf.mxu0
  %v2135 = vpop.f32.mrf.mxu0
  %v2136 = vadd.f32 0.0, %v2135
  %v2137 = vpop.f32.mrf.mxu0
  %2138 = vmatprep.mubr.bf16.mxu0 %v1181
  %2139 = vmatmul.mubr.bf16.gmra.mxu0 %v1180
  %v2140 = vpop.f32.mrf.mxu0
  %v2141 = vadd.f32 0.0, %v2140
  %v2142 = vpop.f32.mrf.mxu0
  %v2143 = vpop.f32.mrf.mxu0
  %v2144 = vadd.f32 0.0, %v2143
  %v2145 = vpop.f32.mrf.mxu0
  %2146 = vmatprep.mubr.bf16.mxu0 %v1183
  %2147 = vmatmul.mubr.bf16.gmra.mxu0 %v1182
  %v2148 = vpop.f32.mrf.mxu0
  %v2149 = vadd.f32 0.0, %v2148
  %v2150 = vpop.f32.mrf.mxu0
  %v2151 = vpop.f32.mrf.mxu0
  %v2152 = vadd.f32 0.0, %v2151
  %v2153 = vpop.f32.mrf.mxu0
  %2154 = vmatprep.mubr.bf16.mxu0 %v1185
  %2155 = vmatmul.mubr.bf16.gmra.mxu0 %v1184
  %v2156 = vpop.f32.mrf.mxu0
  %v2157 = vadd.f32 0.0, %v2156
  %v2158 = vpop.f32.mrf.mxu0
  %v2159 = vpop.f32.mrf.mxu0
  %v2160 = vadd.f32 0.0, %v2159
  %v2161 = vpop.f32.mrf.mxu0
  %2162 = vmatprep.mubr.bf16.mxu0 %v1187
  %2163 = vmatmul.mubr.bf16.gmra.mxu0 %v1186
  %v2164 = vpop.f32.mrf.mxu0
  %v2165 = vadd.f32 0.0, %v2164
  %v2166 = vpop.f32.mrf.mxu0
  %v2167 = vpop.f32.mrf.mxu0
  %v2168 = vadd.f32 0.0, %v2167
  %v2169 = vpop.f32.mrf.mxu0
  %2170 = vmatprep.mubr.bf16.mxu0 %v1189
  %2171 = vmatmul.mubr.bf16.gmra.mxu0 %v1188
  %v2172 = vpop.f32.mrf.mxu0
  %v2173 = vadd.f32 0.0, %v2172
  %v2174 = vpop.f32.mrf.mxu0
  %v2175 = vpop.f32.mrf.mxu0
  %v2176 = vadd.f32 0.0, %v2175
  %v2177 = vpop.f32.mrf.mxu0
  %2178 = vmatprep.mubr.bf16.mxu0 %v1191
  %2179 = vmatmul.mubr.bf16.gmra.mxu0 %v1190
  %v2180 = vpop.f32.mrf.mxu0
  %v2181 = vadd.f32 0.0, %v2180
  %v2182 = vpop.f32.mrf.mxu0
  %v2183 = vpop.f32.mrf.mxu0
  %v2184 = vadd.f32 0.0, %v2183
  %v2185 = vpop.f32.mrf.mxu0
  %2186 = vmatprep.mubr.bf16.mxu0 %v1193
  %2187 = vmatmul.mubr.bf16.gmra.mxu0 %v1192
  %v2188 = vpop.f32.mrf.mxu0
  %v2189 = vadd.f32 0.0, %v2188
  %v2190 = vpop.f32.mrf.mxu0
  %v2191 = vpop.f32.mrf.mxu0
  %v2192 = vadd.f32 0.0, %v2191
  %v2193 = vpop.f32.mrf.mxu0
  %2194 = vmatprep.mubr.bf16.mxu0 %v1195
  %2195 = vmatmul.mubr.bf16.gmra.mxu0 %v1194
  %v2196 = vpop.f32.mrf.mxu0
  %v2197 = vadd.f32 0.0, %v2196
  %v2198 = vpop.f32.mrf.mxu0
  %v2199 = vpop.f32.mrf.mxu0
  %v2200 = vadd.f32 0.0, %v2199
  %v2201 = vpop.f32.mrf.mxu0
  %2202 = vmatprep.mubr.bf16.mxu0 %v1197
  %2203 = vmatmul.mubr.bf16.gmra.mxu0 %v1196
  %v2204 = vpop.f32.mrf.mxu0
  %v2205 = vadd.f32 0.0, %v2204
  %v2206 = vpop.f32.mrf.mxu0
  %v2207 = vpop.f32.mrf.mxu0
  %v2208 = vadd.f32 0.0, %v2207
  %v2209 = vpop.f32.mrf.mxu0
  %2210 = vmatprep.mubr.bf16.mxu0 %v1199
  %2211 = vmatmul.mubr.bf16.gmra.mxu0 %v1198
  %v2212 = vpop.f32.mrf.mxu0
  %v2213 = vadd.f32 0.0, %v2212
  %v2214 = vpop.f32.mrf.mxu0
  %v2215 = vpop.f32.mrf.mxu0
  %v2216 = vadd.f32 0.0, %v2215
  %v2217 = vpop.f32.mrf.mxu0
  %2218 = vmatprep.mubr.bf16.mxu0 %v1201
  %2219 = vmatmul.mubr.bf16.gmra.mxu0 %v1200
  %v2220 = vpop.f32.mrf.mxu0
  %v2221 = vadd.f32 0.0, %v2220
  %v2222 = vpop.f32.mrf.mxu0
  %v2223 = vpop.f32.mrf.mxu0
  %v2224 = vadd.f32 0.0, %v2223
  %v2225 = vpop.f32.mrf.mxu0
  %2226 = vmatprep.mubr.bf16.mxu0 %v1203
  %2227 = vmatmul.mubr.bf16.gmra.mxu0 %v1202
  %v2228 = vpop.f32.mrf.mxu0
  %v2229 = vadd.f32 0.0, %v2228
  %v2230 = vpop.f32.mrf.mxu0
  %v2231 = vpop.f32.mrf.mxu0
  %v2232 = vadd.f32 0.0, %v2231
  %v2233 = vpop.f32.mrf.mxu0
  %2234 = vmatprep.mubr.bf16.mxu0 %v1205
  %2235 = vmatmul.mubr.bf16.gmra.mxu0 %v1204
  %v2236 = vpop.f32.mrf.mxu0
  %v2237 = vadd.f32 0.0, %v2236
  %v2238 = vpop.f32.mrf.mxu0
  %v2239 = vpop.f32.mrf.mxu0
  %v2240 = vadd.f32 0.0, %v2239
  %v2241 = vpop.f32.mrf.mxu0
  %2242 = vmatprep.mubr.bf16.mxu0 %v1207
  %2243 = vmatmul.mubr.bf16.gmra.mxu0 %v1206
  %v2244 = vpop.f32.mrf.mxu0
  %v2245 = vadd.f32 0.0, %v2244
  %v2246 = vpop.f32.mrf.mxu0
  %v2247 = vpop.f32.mrf.mxu0
  %v2248 = vadd.f32 0.0, %v2247
  %v2249 = vpop.f32.mrf.mxu0
  %2250 = vmatprep.mubr.bf16.mxu0 %v1209
  %2251 = vmatmul.mubr.bf16.gmra.mxu0 %v1208
  %v2252 = vpop.f32.mrf.mxu0
  %v2253 = vadd.f32 0.0, %v2252
  %v2254 = vpop.f32.mrf.mxu0
  %v2255 = vpop.f32.mrf.mxu0
  %v2256 = vadd.f32 0.0, %v2255
  %v2257 = vpop.f32.mrf.mxu0
  %2258 = vmatprep.mubr.bf16.mxu0 %v1211
  %2259 = vmatmul.mubr.bf16.gmra.mxu0 %v1210
  %v2260 = vpop.f32.mrf.mxu0
  %v2261 = vadd.f32 0.0, %v2260
  %v2262 = vpop.f32.mrf.mxu0
  %v2263 = vpop.f32.mrf.mxu0
  %v2264 = vadd.f32 0.0, %v2263
  %v2265 = vpop.f32.mrf.mxu0
  %2266 = vmatprep.mubr.bf16.mxu0 %v1213
  %2267 = vmatmul.mubr.bf16.gmra.mxu0 %v1212
  %v2268 = vpop.f32.mrf.mxu0
  %v2269 = vadd.f32 0.0, %v2268
  %v2270 = vpop.f32.mrf.mxu0
  %v2271 = vpop.f32.mrf.mxu0
  %v2272 = vadd.f32 0.0, %v2271
  %v2273 = vpop.f32.mrf.mxu0
  %2274 = vmatprep.mubr.bf16.mxu0 %v1215
  %2275 = vmatmul.mubr.bf16.gmra.mxu0 %v1214
  %v2276 = vpop.f32.mrf.mxu0
  %v2277 = vadd.f32 0.0, %v2276
  %v2278 = vpop.f32.mrf.mxu0
  %v2279 = vpop.f32.mrf.mxu0
  %v2280 = vadd.f32 0.0, %v2279
  %v2281 = vpop.f32.mrf.mxu0
  %2282 = vmatprep.mubr.bf16.mxu0 %v1217
  %2283 = vmatmul.mubr.bf16.gmra.mxu0 %v1216
  %v2284 = vpop.f32.mrf.mxu0
  %v2285 = vadd.f32 0.0, %v2284
  %v2286 = vpop.f32.mrf.mxu0
  %v2287 = vpop.f32.mrf.mxu0
  %v2288 = vadd.f32 0.0, %v2287
  %v2289 = vpop.f32.mrf.mxu0
  %2290 = vmatprep.mubr.bf16.mxu0 %v1219
  %2291 = vmatmul.mubr.bf16.gmra.mxu0 %v1218
  %v2292 = vpop.f32.mrf.mxu0
  %v2293 = vadd.f32 0.0, %v2292
  %v2294 = vpop.f32.mrf.mxu0
  %v2295 = vpop.f32.mrf.mxu0
  %v2296 = vadd.f32 0.0, %v2295
  %v2297 = vpop.f32.mrf.mxu0
  %2298 = vmatprep.mubr.bf16.mxu0 %v1221
  %2299 = vmatmul.mubr.bf16.gmra.mxu0 %v1220
  %v2300 = vpop.f32.mrf.mxu0
  %v2301 = vadd.f32 0.0, %v2300
  %v2302 = vpop.f32.mrf.mxu0
  %v2303 = vpop.f32.mrf.mxu0
  %v2304 = vadd.f32 0.0, %v2303
  %v2305 = vpop.f32.mrf.mxu0
  %2306 = vmatprep.mubr.bf16.mxu0 %v1223
  %2307 = vmatmul.mubr.bf16.gmra.mxu0 %v1222
  %v2308 = vpop.f32.mrf.mxu0
  %v2309 = vadd.f32 0.0, %v2308
  %v2310 = vpop.f32.mrf.mxu0
  %v2311 = vpop.f32.mrf.mxu0
  %v2312 = vadd.f32 0.0, %v2311
  %v2313 = vpop.f32.mrf.mxu0
  %2314 = vmatprep.mubr.bf16.mxu0 %v1225
  %2315 = vmatmul.mubr.bf16.gmra.mxu0 %v1224
  %v2316 = vpop.f32.mrf.mxu0
  %v2317 = vadd.f32 0.0, %v2316
  %v2318 = vpop.f32.mrf.mxu0
  %v2319 = vpop.f32.mrf.mxu0
  %v2320 = vadd.f32 0.0, %v2319
  %v2321 = vpop.f32.mrf.mxu0
  %2322 = vmatprep.mubr.bf16.mxu0 %v1227
  %2323 = vmatmul.mubr.bf16.gmra.mxu0 %v1226
  %v2324 = vpop.f32.mrf.mxu0
  %v2325 = vadd.f32 0.0, %v2324
  %v2326 = vpop.f32.mrf.mxu0
  %v2327 = vpop.f32.mrf.mxu0
  %v2328 = vadd.f32 0.0, %v2327
  %v2329 = vpop.f32.mrf.mxu0
  %2330 = vmatprep.mubr.bf16.mxu0 %v1229
  %2331 = vmatmul.mubr.bf16.gmra.mxu0 %v1228
  %v2332 = vpop.f32.mrf.mxu0
  %v2333 = vadd.f32 0.0, %v2332
  %v2334 = vpop.f32.mrf.mxu0
  %v2335 = vpop.f32.mrf.mxu0
  %v2336 = vadd.f32 0.0, %v2335
  %v2337 = vpop.f32.mrf.mxu0
  %2338 = vmatprep.mubr.bf16.mxu0 %v1231
  %2339 = vmatmul.mubr.bf16.gmra.mxu0 %v1230
  %v2340 = vpop.f32.mrf.mxu0
  %v2341 = vadd.f32 0.0, %v2340
  %v2342 = vpop.f32.mrf.mxu0
  %v2343 = vpop.f32.mrf.mxu0
  %v2344 = vadd.f32 0.0, %v2343
  %v2345 = vpop.f32.mrf.mxu0
  %2346 = vmatprep.mubr.bf16.mxu0 %v1233
  %2347 = vmatmul.mubr.bf16.gmra.mxu0 %v1232
  %v2348 = vpop.f32.mrf.mxu0
  %v2349 = vadd.f32 0.0, %v2348
  %v2350 = vpop.f32.mrf.mxu0
  %v2351 = vpop.f32.mrf.mxu0
  %v2352 = vadd.f32 0.0, %v2351
  %v2353 = vpop.f32.mrf.mxu0
  %2354 = vmatprep.mubr.bf16.mxu0 %v1235
  %2355 = vmatmul.mubr.bf16.gmra.mxu0 %v1234
  %v2356 = vpop.f32.mrf.mxu0
  %v2357 = vadd.f32 0.0, %v2356
  %v2358 = vpop.f32.mrf.mxu0
  %v2359 = vpop.f32.mrf.mxu0
  %v2360 = vadd.f32 0.0, %v2359
  %v2361 = vpop.f32.mrf.mxu0
  %2362 = vmatprep.mubr.bf16.mxu0 %v1237
  %2363 = vmatmul.mubr.bf16.gmra.mxu0 %v1236
  %v2364 = vpop.f32.mrf.mxu0
  %v2365 = vadd.f32 0.0, %v2364
  %v2366 = vpop.f32.mrf.mxu0
  %v2367 = vpop.f32.mrf.mxu0
  %v2368 = vadd.f32 0.0, %v2367
  %v2369 = vpop.f32.mrf.mxu0
  %2370 = vmatprep.mubr.bf16.mxu0 %v1239
  %2371 = vmatmul.mubr.bf16.gmra.mxu0 %v1238
  %v2372 = vpop.f32.mrf.mxu0
  %v2373 = vadd.f32 0.0, %v2372
  %v2374 = vpop.f32.mrf.mxu0
  %v2375 = vpop.f32.mrf.mxu0
  %v2376 = vadd.f32 0.0, %v2375
  %v2377 = vpop.f32.mrf.mxu0
  %2378 = vmatprep.mubr.bf16.mxu0 %v1241
  %2379 = vmatmul.mubr.bf16.gmra.mxu0 %v1240
  %v2380 = vpop.f32.mrf.mxu0
  %v2381 = vadd.f32 0.0, %v2380
  %v2382 = vpop.f32.mrf.mxu0
  %v2383 = vpop.f32.mrf.mxu0
  %v2384 = vadd.f32 0.0, %v2383
  %v2385 = vpop.f32.mrf.mxu0
  %2386 = vmatprep.mubr.bf16.mxu0 %v1243
  %2387 = vmatmul.mubr.bf16.gmra.mxu0 %v1242
  %v2388 = vpop.f32.mrf.mxu0
  %v2389 = vadd.f32 0.0, %v2388
  %v2390 = vpop.f32.mrf.mxu0
  %v2391 = vpop.f32.mrf.mxu0
  %v2392 = vadd.f32 0.0, %v2391
  %v2393 = vpop.f32.mrf.mxu0
  %2394 = vmatprep.mubr.bf16.mxu0 %v1245
  %2395 = vmatmul.mubr.bf16.gmra.mxu0 %v1244
  %v2396 = vpop.f32.mrf.mxu0
  %v2397 = vadd.f32 0.0, %v2396
  %v2398 = vpop.f32.mrf.mxu0
  %v2399 = vpop.f32.mrf.mxu0
  %v2400 = vadd.f32 0.0, %v2399
  %v2401 = vpop.f32.mrf.mxu0
  %2402 = vmatprep.mubr.bf16.mxu0 %v1247
  %2403 = vmatmul.mubr.bf16.gmra.mxu0 %v1246
  %v2404 = vpop.f32.mrf.mxu0
  %v2405 = vadd.f32 0.0, %v2404
  %v2406 = vpop.f32.mrf.mxu0
  %v2407 = vpop.f32.mrf.mxu0
  %v2408 = vadd.f32 0.0, %v2407
  %v2409 = vpop.f32.mrf.mxu0
  %2410 = vmatprep.mubr.bf16.mxu0 %v1249
  %2411 = vmatmul.mubr.bf16.gmra.mxu0 %v1248
  %v2412 = vpop.f32.mrf.mxu0
  %v2413 = vadd.f32 0.0, %v2412
  %v2414 = vpop.f32.mrf.mxu0
  %v2415 = vpop.f32.mrf.mxu0
  %v2416 = vadd.f32 0.0, %v2415
  %v2417 = vpop.f32.mrf.mxu0
  %2418 = vmatprep.mubr.bf16.mxu0 %v1251
  %2419 = vmatmul.mubr.bf16.gmra.mxu0 %v1250
  %v2420 = vpop.f32.mrf.mxu0
  %v2421 = vadd.f32 0.0, %v2420
  %v2422 = vpop.f32.mrf.mxu0
  %v2423 = vpop.f32.mrf.mxu0
  %v2424 = vadd.f32 0.0, %v2423
  %v2425 = vpop.f32.mrf.mxu0
  %2426 = vmatprep.mubr.bf16.mxu0 %v1253
  %2427 = vmatmul.mubr.bf16.gmra.mxu0 %v1252
  %v2428 = vpop.f32.mrf.mxu0
  %v2429 = vadd.f32 0.0, %v2428
  %v2430 = vpop.f32.mrf.mxu0
  %v2431 = vpop.f32.mrf.mxu0
  %v2432 = vadd.f32 0.0, %v2431
  %v2433 = vpop.f32.mrf.mxu0
  %2434 = vmatprep.mubr.bf16.mxu0 %v1255
  %2435 = vmatmul.mubr.bf16.gmra.mxu0 %v1254
  %v2436 = vpop.f32.mrf.mxu0
  %v2437 = vadd.f32 0.0, %v2436
  %v2438 = vpop.f32.mrf.mxu0
  %v2439 = vpop.f32.mrf.mxu0
  %v2440 = vadd.f32 0.0, %v2439
  %v2441 = vpop.f32.mrf.mxu0
  %2442 = vmatprep.mubr.bf16.mxu0 %v1257
  %2443 = vmatmul.mubr.bf16.gmra.mxu0 %v1256
  %v2444 = vpop.f32.mrf.mxu0
  %v2445 = vadd.f32 0.0, %v2444
  %v2446 = vpop.f32.mrf.mxu0
  %v2447 = vpop.f32.mrf.mxu0
  %v2448 = vadd.f32 0.0, %v2447
  %v2449 = vpop.f32.mrf.mxu0
  %2450 = vmatprep.mubr.bf16.mxu0 %v1259
  %2451 = vmatmul.mubr.bf16.gmra.mxu0 %v1258
  %v2452 = vpop.f32.mrf.mxu0
  %v2453 = vadd.f32 0.0, %v2452
  %v2454 = vpop.f32.mrf.mxu0
  %v2455 = vpop.f32.mrf.mxu0
  %v2456 = vadd.f32 0.0, %v2455
  %v2457 = vpop.f32.mrf.mxu0
  %2458 = vmatprep.mubr.bf16.mxu0 %v1261
  %2459 = vmatmul.mubr.bf16.gmra.mxu0 %v1260
  %v2460 = vpop.f32.mrf.mxu0
  %v2461 = vadd.f32 0.0, %v2460
  %v2462 = vpop.f32.mrf.mxu0
  %v2463 = vpop.f32.mrf.mxu0
  %v2464 = vadd.f32 0.0, %v2463
  %v2465 = vpop.f32.mrf.mxu0
  %2466 = vmatprep.mubr.bf16.mxu0 %v1263
  %2467 = vmatmul.mubr.bf16.gmra.mxu0 %v1262
  %v2468 = vpop.f32.mrf.mxu0
  %v2469 = vadd.f32 0.0, %v2468
  %v2470 = vpop.f32.mrf.mxu0
  %v2471 = vpop.f32.mrf.mxu0
  %v2472 = vadd.f32 0.0, %v2471
  %v2473 = vpop.f32.mrf.mxu0
  %2474 = vmatprep.mubr.bf16.mxu0 %v1265
  %2475 = vmatmul.mubr.bf16.gmra.mxu0 %v1264
  %v2476 = vpop.f32.mrf.mxu0
  %v2477 = vadd.f32 0.0, %v2476
  %v2478 = vpop.f32.mrf.mxu0
  %v2479 = vpop.f32.mrf.mxu0
  %v2480 = vadd.f32 0.0, %v2479
  %v2481 = vpop.f32.mrf.mxu0
  %2482 = vmatprep.mubr.bf16.mxu0 %v1267
  %2483 = vmatmul.mubr.bf16.gmra.mxu0 %v1266
  %v2484 = vpop.f32.mrf.mxu0
  %v2485 = vadd.f32 0.0, %v2484
  %v2486 = vpop.f32.mrf.mxu0
  %v2487 = vpop.f32.mrf.mxu0
  %v2488 = vadd.f32 0.0, %v2487
  %v2489 = vpop.f32.mrf.mxu0
  %2490 = vmatprep.mubr.bf16.mxu0 %v1269
  %2491 = vmatmul.mubr.bf16.gmra.mxu0 %v1268
  %v2492 = vpop.f32.mrf.mxu0
  %v2493 = vadd.f32 0.0, %v2492
  %v2494 = vpop.f32.mrf.mxu0
  %v2495 = vpop.f32.mrf.mxu0
  %v2496 = vadd.f32 0.0, %v2495
  %v2497 = vpop.f32.mrf.mxu0
  %2498 = vmatprep.mubr.bf16.mxu0 %v1271
  %2499 = vmatmul.mubr.bf16.gmra.mxu0 %v1270
  %v2500 = vpop.f32.mrf.mxu0
  %v2501 = vadd.f32 0.0, %v2500
  %v2502 = vpop.f32.mrf.mxu0
  %v2503 = vpop.f32.mrf.mxu0
  %v2504 = vadd.f32 0.0, %v2503
  %v2505 = vpop.f32.mrf.mxu0
  %2506 = vmatprep.mubr.bf16.mxu0 %v1273
  %2507 = vmatmul.mubr.bf16.gmra.mxu0 %v1272
  %v2508 = vpop.f32.mrf.mxu0
  %v2509 = vadd.f32 0.0, %v2508
  %v2510 = vpop.f32.mrf.mxu0
  %v2511 = vpop.f32.mrf.mxu0
  %v2512 = vadd.f32 0.0, %v2511
  %v2513 = vpop.f32.mrf.mxu0
  %2514 = vmatprep.mubr.bf16.mxu0 %v1275
  %2515 = vmatmul.mubr.bf16.gmra.mxu0 %v1274
  %v2516 = vpop.f32.mrf.mxu0
  %v2517 = vadd.f32 0.0, %v2516
  %v2518 = vpop.f32.mrf.mxu0
  %v2519 = vpop.f32.mrf.mxu0
  %v2520 = vadd.f32 0.0, %v2519
  %v2521 = vpop.f32.mrf.mxu0
  %2522 = vmatprep.mubr.bf16.mxu0 %v1277
  %2523 = vmatmul.mubr.bf16.gmra.mxu0 %v1276
  %v2524 = vpop.f32.mrf.mxu0
  %v2525 = vadd.f32 0.0, %v2524
  %v2526 = vpop.f32.mrf.mxu0
  %v2527 = vpop.f32.mrf.mxu0
  %v2528 = vadd.f32 0.0, %v2527
  %v2529 = vpop.f32.mrf.mxu0
  %2530 = vmatprep.mubr.bf16.mxu0 %v1279
  %2531 = vmatmul.mubr.bf16.gmra.mxu0 %v1278
  %v2532 = vpop.f32.mrf.mxu0
  %v2533 = vadd.f32 0.0, %v2532
  %v2534 = vpop.f32.mrf.mxu0
  %v2535 = vpop.f32.mrf.mxu0
  %v2536 = vadd.f32 0.0, %v2535
  %v2537 = vpop.f32.mrf.mxu0
  %2538 = vmatprep.mubr.bf16.mxu0 %v1281
  %2539 = vmatmul.mubr.bf16.gmra.mxu0 %v1280
  %v2540 = vpop.f32.mrf.mxu0
  %v2541 = vadd.f32 0.0, %v2540
  %v2542 = vpop.f32.mrf.mxu0
  %v2543 = vpop.f32.mrf.mxu0
  %v2544 = vadd.f32 0.0, %v2543
  %v2545 = vpop.f32.mrf.mxu0
  %2546 = vmatprep.mubr.bf16.mxu0 %v1283
  %2547 = vmatmul.mubr.bf16.gmra.mxu0 %v1282
  %v2548 = vpop.f32.mrf.mxu0
  %v2549 = vadd.f32 0.0, %v2548
  %v2550 = vpop.f32.mrf.mxu0
  %v2551 = vpop.f32.mrf.mxu0
  %v2552 = vadd.f32 0.0, %v2551
  %v2553 = vpop.f32.mrf.mxu0
  %2554 = vmatprep.mubr.bf16.mxu0 %v1285
  %2555 = vmatmul.mubr.bf16.gmra.mxu0 %v1284
  %v2556 = vpop.f32.mrf.mxu0
  %v2557 = vadd.f32 0.0, %v2556
  %v2558 = vpop.f32.mrf.mxu0
  %v2559 = vpop.f32.mrf.mxu0
  %v2560 = vadd.f32 0.0, %v2559
  %v2561 = vpop.f32.mrf.mxu0
  %2562 = vmatprep.mubr.bf16.mxu0 %v1287
  %2563 = vmatmul.mubr.bf16.gmra.mxu0 %v1286
  %v2564 = vpop.f32.mrf.mxu0
  %v2565 = vadd.f32 0.0, %v2564
  %v2566 = vpop.f32.mrf.mxu0
  %v2567 = vpop.f32.mrf.mxu0
  %v2568 = vadd.f32 0.0, %v2567
  %v2569 = vpop.f32.mrf.mxu0
  %2570 = vmatprep.mubr.bf16.mxu0 %v1289
  %2571 = vmatmul.mubr.bf16.gmra.mxu0 %v1288
  %v2572 = vpop.f32.mrf.mxu0
  %v2573 = vadd.f32 0.0, %v2572
  %v2574 = vpop.f32.mrf.mxu0
  %v2575 = vpop.f32.mrf.mxu0
  %v2576 = vadd.f32 0.0, %v2575
  %v2577 = vpop.f32.mrf.mxu0
  %2578 = vmatprep.mubr.bf16.mxu0 %v1291
  %2579 = vmatmul.mubr.bf16.gmra.mxu0 %v1290
  %v2580 = vpop.f32.mrf.mxu0
  %v2581 = vadd.f32 0.0, %v2580
  %v2582 = vpop.f32.mrf.mxu0
  %v2583 = vpop.f32.mrf.mxu0
  %v2584 = vadd.f32 0.0, %v2583
  %v2585 = vpop.f32.mrf.mxu0
  %2586 = vmatprep.mubr.bf16.mxu0 %v1293
  %2587 = vmatmul.mubr.bf16.gmra.mxu0 %v1292
  %v2588 = vpop.f32.mrf.mxu0
  %v2589 = vadd.f32 0.0, %v2588
  %v2590 = vpop.f32.mrf.mxu0
  %v2591 = vpop.f32.mrf.mxu0
  %v2592 = vadd.f32 0.0, %v2591
  %v2593 = vpop.f32.mrf.mxu0
  %2594 = vmatprep.mubr.bf16.mxu0 %v1295
  %2595 = vmatmul.mubr.bf16.gmra.mxu0 %v1294
  %v2596 = vpop.f32.mrf.mxu0
  %v2597 = vadd.f32 0.0, %v2596
  %v2598 = vpop.f32.mrf.mxu0
  %v2599 = vpop.f32.mrf.mxu0
  %v2600 = vadd.f32 0.0, %v2599
  %v2601 = vpop.f32.mrf.mxu0
  %2602 = vmatprep.mubr.bf16.mxu0 %v1297
  %2603 = vmatmul.mubr.bf16.gmra.mxu0 %v1296
  %v2604 = vpop.f32.mrf.mxu0
  %v2605 = vadd.f32 0.0, %v2604
  %v2606 = vpop.f32.mrf.mxu0
  %v2607 = vpop.f32.mrf.mxu0
  %v2608 = vadd.f32 0.0, %v2607
  %v2609 = vpop.f32.mrf.mxu0
  %2610 = vmatprep.mubr.bf16.mxu0 %v1299
  %2611 = vmatmul.mubr.bf16.gmra.mxu0 %v1298
  %v2612 = vpop.f32.mrf.mxu0
  %v2613 = vadd.f32 0.0, %v2612
  %v2614 = vpop.f32.mrf.mxu0
  %v2615 = vpop.f32.mrf.mxu0
  %v2616 = vadd.f32 0.0, %v2615
  %v2617 = vpop.f32.mrf.mxu0
  %2618 = vmatprep.mubr.bf16.mxu0 %v1301
  %2619 = vmatmul.mubr.bf16.gmra.mxu0 %v1300
  %v2620 = vpop.f32.mrf.mxu0
  %v2621 = vadd.f32 0.0, %v2620
  %v2622 = vpop.f32.mrf.mxu0
  %v2623 = vpop.f32.mrf.mxu0
  %v2624 = vadd.f32 0.0, %v2623
  %v2625 = vpop.f32.mrf.mxu0
  %2626 = vmatprep.mubr.bf16.mxu0 %v1303
  %2627 = vmatmul.mubr.bf16.gmra.mxu0 %v1302
  %v2628 = vpop.f32.mrf.mxu0
  %v2629 = vadd.f32 0.0, %v2628
  %v2630 = vpop.f32.mrf.mxu0
  %v2631 = vpop.f32.mrf.mxu0
  %v2632 = vadd.f32 0.0, %v2631
  %v2633 = vpop.f32.mrf.mxu0
  %2634 = vmatprep.mubr.bf16.mxu0 %v1305
  %2635 = vmatmul.mubr.bf16.gmra.mxu0 %v1304
  %v2636 = vpop.f32.mrf.mxu0
  %v2637 = vadd.f32 0.0, %v2636
  %v2638 = vpop.f32.mrf.mxu0
  %v2639 = vpop.f32.mrf.mxu0
  %v2640 = vadd.f32 0.0, %v2639
  %v2641 = vpop.f32.mrf.mxu0
  %2642 = vmatprep.mubr.bf16.mxu0 %v1307
  %2643 = vmatmul.mubr.bf16.gmra.mxu0 %v1306
  %v2644 = vpop.f32.mrf.mxu0
  %v2645 = vadd.f32 0.0, %v2644
  %v2646 = vpop.f32.mrf.mxu0
  %v2647 = vpop.f32.mrf.mxu0
  %v2648 = vadd.f32 0.0, %v2647
  %v2649 = vpop.f32.mrf.mxu0
  %2650 = vmatprep.mubr.bf16.mxu0 %v1309
  %2651 = vmatmul.mubr.bf16.gmra.mxu0 %v1308
  %v2652 = vpop.f32.mrf.mxu0
  %v2653 = vadd.f32 0.0, %v2652
  %v2654 = vpop.f32.mrf.mxu0
  %v2655 = vpop.f32.mrf.mxu0
  %v2656 = vadd.f32 0.0, %v2655
  %v2657 = vpop.f32.mrf.mxu0
  %2658 = vmatprep.mubr.bf16.mxu0 %v1311
  %2659 = vmatmul.mubr.bf16.gmra.mxu0 %v1310
  %v2660 = vpop.f32.mrf.mxu0
  %v2661 = vadd.f32 0.0, %v2660
  %v2662 = vpop.f32.mrf.mxu0
  %v2663 = vpop.f32.mrf.mxu0
  %v2664 = vadd.f32 0.0, %v2663
  %v2665 = vpop.f32.mrf.mxu0
  %2666 = vmatprep.mubr.bf16.mxu0 %v1313
  %2667 = vmatmul.mubr.bf16.gmra.mxu0 %v1312
  %v2668 = vpop.f32.mrf.mxu0
  %v2669 = vadd.f32 0.0, %v2668
  %v2670 = vpop.f32.mrf.mxu0
  %v2671 = vpop.f32.mrf.mxu0
  %v2672 = vadd.f32 0.0, %v2671
  %v2673 = vpop.f32.mrf.mxu0
  %2674 = vmatprep.mubr.bf16.mxu0 %v1315
  %2675 = vmatmul.mubr.bf16.gmra.mxu0 %v1314
  %v2676 = vpop.f32.mrf.mxu0
  %v2677 = vadd.f32 0.0, %v2676
  %v2678 = vpop.f32.mrf.mxu0
  %v2679 = vpop.f32.mrf.mxu0
  %v2680 = vadd.f32 0.0, %v2679
  %v2681 = vpop.f32.mrf.mxu0
  %2682 = vmatprep.mubr.bf16.mxu0 %v1317
  %2683 = vmatmul.mubr.bf16.gmra.mxu0 %v1316
  %v2684 = vpop.f32.mrf.mxu0
  %v2685 = vadd.f32 0.0, %v2684
  %v2686 = vpop.f32.mrf.mxu0
  %v2687 = vpop.f32.mrf.mxu0
  %v2688 = vadd.f32 0.0, %v2687
  %v2689 = vpop.f32.mrf.mxu0
  %2690 = vmatprep.mubr.bf16.mxu0 %v1319
  %2691 = vmatmul.mubr.bf16.gmra.mxu0 %v1318
  %v2692 = vpop.f32.mrf.mxu0
  %v2693 = vadd.f32 0.0, %v2692
  %v2694 = vpop.f32.mrf.mxu0
  %v2695 = vpop.f32.mrf.mxu0
  %v2696 = vadd.f32 0.0, %v2695
  %v2697 = vpop.f32.mrf.mxu0
  %2698 = vmatprep.mubr.bf16.mxu0 %v1321
  %2699 = vmatmul.mubr.bf16.gmra.mxu0 %v1320
  %v2700 = vpop.f32.mrf.mxu0
  %v2701 = vadd.f32 0.0, %v2700
  %v2702 = vpop.f32.mrf.mxu0
  %v2703 = vpop.f32.mrf.mxu0
  %v2704 = vadd.f32 0.0, %v2703
  %v2705 = vpop.f32.mrf.mxu0
  %2706 = vmatprep.mubr.bf16.mxu0 %v1323
  %2707 = vmatmul.mubr.bf16.gmra.mxu0 %v1322
  %v2708 = vpop.f32.mrf.mxu0
  %v2709 = vadd.f32 0.0, %v2708
  %v2710 = vpop.f32.mrf.mxu0
  %v2711 = vpop.f32.mrf.mxu0
  %v2712 = vadd.f32 0.0, %v2711
  %v2713 = vpop.f32.mrf.mxu0
  %2714 = vmatprep.mubr.bf16.mxu0 %v1325
  %2715 = vmatmul.mubr.bf16.gmra.mxu0 %v1324
  %v2716 = vpop.f32.mrf.mxu0
  %v2717 = vadd.f32 0.0, %v2716
  %v2718 = vpop.f32.mrf.mxu0
  %v2719 = vpop.f32.mrf.mxu0
  %v2720 = vadd.f32 0.0, %v2719
  %v2721 = vpop.f32.mrf.mxu0
  %2722 = vmatprep.mubr.bf16.mxu0 %v1327
  %2723 = vmatmul.mubr.bf16.gmra.mxu0 %v1326
  %v2724 = vpop.f32.mrf.mxu0
  %v2725 = vadd.f32 0.0, %v2724
  %v2726 = vpop.f32.mrf.mxu0
  %v2727 = vpop.f32.mrf.mxu0
  %v2728 = vadd.f32 0.0, %v2727
  %v2729 = vpop.f32.mrf.mxu0
  %2730 = vmatprep.mubr.bf16.mxu0 %v1329
  %2731 = vmatmul.mubr.bf16.gmra.mxu0 %v1328
  %v2732 = vpop.f32.mrf.mxu0
  %v2733 = vadd.f32 0.0, %v2732
  %v2734 = vpop.f32.mrf.mxu0
  %v2735 = vpop.f32.mrf.mxu0
  %v2736 = vadd.f32 0.0, %v2735
  %v2737 = vpop.f32.mrf.mxu0
  %2738 = vdwg.mxu0
  %v2739 = vld [vmem:[%s2] sm:$0x1]
  %v2741 = vlaneseq
  %v2742 = vshrl.u32 %v2741, 7
  %v2743 = vsub.s32 0, %v2742
  %v2744 = vrot.slane %v2739, %v2743
  %v2746 = vmul.f32 %v1717, %v2744
  %v2747 = vmul.f32 %v1720, %v2744
  %v2748 = vmul.f32 %v1725, %v2744
  %v2749 = vmul.f32 %v1728, %v2744
  %v2750 = vmul.f32 %v1733, %v2744
  %v2751 = vmul.f32 %v1736, %v2744
  %v2752 = vmul.f32 %v1741, %v2744
  %v2753 = vmul.f32 %v1744, %v2744
  %v2754 = vmul.f32 %v1749, %v2744
  %v2755 = vmul.f32 %v1752, %v2744
  %v2756 = vmul.f32 %v1757, %v2744
  %v2757 = vmul.f32 %v1760, %v2744
  %v2758 = vmul.f32 %v1765, %v2744
  %v2759 = vmul.f32 %v1768, %v2744
  %v2760 = vmul.f32 %v1773, %v2744
  %v2761 = vmul.f32 %v1776, %v2744
  %v2762 = vmul.f32 %v1781, %v2744
  %v2763 = vmul.f32 %v1784, %v2744
  %v2764 = vmul.f32 %v1789, %v2744
  %v2765 = vmul.f32 %v1792, %v2744
  %v2766 = vmul.f32 %v1797, %v2744
  %v2767 = vmul.f32 %v1800, %v2744
  %v2768 = vmul.f32 %v1805, %v2744
  %v2769 = vmul.f32 %v1808, %v2744
  %v2770 = vmul.f32 %v1813, %v2744
  %v2771 = vmul.f32 %v1816, %v2744
  %v2772 = vmul.f32 %v1821, %v2744
  %v2773 = vmul.f32 %v1824, %v2744
  %v2774 = vmul.f32 %v1829, %v2744
  %v2775 = vmul.f32 %v1832, %v2744
  %v2776 = vmul.f32 %v1837, %v2744
  %v2777 = vmul.f32 %v1840, %v2744
  %v2778 = vmul.f32 %v1845, %v2744
  %v2779 = vmul.f32 %v1848, %v2744
  %v2780 = vmul.f32 %v1853, %v2744
  %v2781 = vmul.f32 %v1856, %v2744
  %v2782 = vmul.f32 %v1861, %v2744
  %v2783 = vmul.f32 %v1864, %v2744
  %v2784 = vmul.f32 %v1869, %v2744
  %v2785 = vmul.f32 %v1872, %v2744
  %v2786 = vmul.f32 %v1877, %v2744
  %v2787 = vmul.f32 %v1880, %v2744
  %v2788 = vmul.f32 %v1885, %v2744
  %v2789 = vmul.f32 %v1888, %v2744
  %v2790 = vmul.f32 %v1893, %v2744
  %v2791 = vmul.f32 %v1896, %v2744
  %v2792 = vmul.f32 %v1901, %v2744
  %v2793 = vmul.f32 %v1904, %v2744
  %v2794 = vmul.f32 %v1909, %v2744
  %v2795 = vmul.f32 %v1912, %v2744
  %v2796 = vmul.f32 %v1917, %v2744
  %v2797 = vmul.f32 %v1920, %v2744
  %v2798 = vmul.f32 %v1925, %v2744
  %v2799 = vmul.f32 %v1928, %v2744
  %v2800 = vmul.f32 %v1933, %v2744
  %v2801 = vmul.f32 %v1936, %v2744
  %v2802 = vmul.f32 %v1941, %v2744
  %v2803 = vmul.f32 %v1944, %v2744
  %v2804 = vmul.f32 %v1949, %v2744
  %v2805 = vmul.f32 %v1952, %v2744
  %v2806 = vmul.f32 %v1957, %v2744
  %v2807 = vmul.f32 %v1960, %v2744
  %v2808 = vmul.f32 %v1965, %v2744
  %v2809 = vmul.f32 %v1968, %v2744
  %v2810 = vmul.f32 %v1973, %v2744
  %v2811 = vmul.f32 %v1976, %v2744
  %v2812 = vmul.f32 %v1981, %v2744
  %v2813 = vmul.f32 %v1984, %v2744
  %v2814 = vmul.f32 %v1989, %v2744
  %v2815 = vmul.f32 %v1992, %v2744
  %v2816 = vmul.f32 %v1997, %v2744
  %v2817 = vmul.f32 %v2000, %v2744
  %v2818 = vmul.f32 %v2005, %v2744
  %v2819 = vmul.f32 %v2008, %v2744
  %v2820 = vmul.f32 %v2013, %v2744
  %v2821 = vmul.f32 %v2016, %v2744
  %v2822 = vmul.f32 %v2021, %v2744
  %v2823 = vmul.f32 %v2024, %v2744
  %v2824 = vmul.f32 %v2029, %v2744
  %v2825 = vmul.f32 %v2032, %v2744
  %v2826 = vmul.f32 %v2037, %v2744
  %v2827 = vmul.f32 %v2040, %v2744
  %v2828 = vmul.f32 %v2045, %v2744
  %v2829 = vmul.f32 %v2048, %v2744
  %v2830 = vmul.f32 %v2053, %v2744
  %v2831 = vmul.f32 %v2056, %v2744
  %v2832 = vmul.f32 %v2061, %v2744
  %v2833 = vmul.f32 %v2064, %v2744
  %v2834 = vmul.f32 %v2069, %v2744
  %v2835 = vmul.f32 %v2072, %v2744
  %v2836 = vmul.f32 %v2077, %v2744
  %v2837 = vmul.f32 %v2080, %v2744
  %v2838 = vmul.f32 %v2085, %v2744
  %v2839 = vmul.f32 %v2088, %v2744
  %v2840 = vmul.f32 %v2093, %v2744
  %v2841 = vmul.f32 %v2096, %v2744
  %v2842 = vmul.f32 %v2101, %v2744
  %v2843 = vmul.f32 %v2104, %v2744
  %v2844 = vmul.f32 %v2109, %v2744
  %v2845 = vmul.f32 %v2112, %v2744
  %v2846 = vmul.f32 %v2117, %v2744
  %v2847 = vmul.f32 %v2120, %v2744
  %v2848 = vmul.f32 %v2125, %v2744
  %v2849 = vmul.f32 %v2128, %v2744
  %v2850 = vmul.f32 %v2133, %v2744
  %v2851 = vmul.f32 %v2136, %v2744
  %v2852 = vmul.f32 %v2141, %v2744
  %v2853 = vmul.f32 %v2144, %v2744
  %v2854 = vmul.f32 %v2149, %v2744
  %v2855 = vmul.f32 %v2152, %v2744
  %v2856 = vmul.f32 %v2157, %v2744
  %v2857 = vmul.f32 %v2160, %v2744
  %v2858 = vmul.f32 %v2165, %v2744
  %v2859 = vmul.f32 %v2168, %v2744
  %v2860 = vmul.f32 %v2173, %v2744
  %v2861 = vmul.f32 %v2176, %v2744
  %v2862 = vmul.f32 %v2181, %v2744
  %v2863 = vmul.f32 %v2184, %v2744
  %v2864 = vmul.f32 %v2189, %v2744
  %v2865 = vmul.f32 %v2192, %v2744
  %v2866 = vmul.f32 %v2197, %v2744
  %v2867 = vmul.f32 %v2200, %v2744
  %v2868 = vmul.f32 %v2205, %v2744
  %v2869 = vmul.f32 %v2208, %v2744
  %v2870 = vmul.f32 %v2213, %v2744
  %v2871 = vmul.f32 %v2216, %v2744
  %v2872 = vmul.f32 %v2221, %v2744
  %v2873 = vmul.f32 %v2224, %v2744
  %v2874 = vmul.f32 %v2229, %v2744
  %v2875 = vmul.f32 %v2232, %v2744
  %v2876 = vmul.f32 %v2237, %v2744
  %v2877 = vmul.f32 %v2240, %v2744
  %v2878 = vmul.f32 %v2245, %v2744
  %v2879 = vmul.f32 %v2248, %v2744
  %v2880 = vmul.f32 %v2253, %v2744
  %v2881 = vmul.f32 %v2256, %v2744
  %v2882 = vmul.f32 %v2261, %v2744
  %v2883 = vmul.f32 %v2264, %v2744
  %v2884 = vmul.f32 %v2269, %v2744
  %v2885 = vmul.f32 %v2272, %v2744
  %v2886 = vmul.f32 %v2277, %v2744
  %v2887 = vmul.f32 %v2280, %v2744
  %v2888 = vmul.f32 %v2285, %v2744
  %v2889 = vmul.f32 %v2288, %v2744
  %v2890 = vmul.f32 %v2293, %v2744
  %v2891 = vmul.f32 %v2296, %v2744
  %v2892 = vmul.f32 %v2301, %v2744
  %v2893 = vmul.f32 %v2304, %v2744
  %v2894 = vmul.f32 %v2309, %v2744
  %v2895 = vmul.f32 %v2312, %v2744
  %v2896 = vmul.f32 %v2317, %v2744
  %v2897 = vmul.f32 %v2320, %v2744
  %v2898 = vmul.f32 %v2325, %v2744
  %v2899 = vmul.f32 %v2328, %v2744
  %v2900 = vmul.f32 %v2333, %v2744
  %v2901 = vmul.f32 %v2336, %v2744
  %v2902 = vmul.f32 %v2341, %v2744
  %v2903 = vmul.f32 %v2344, %v2744
  %v2904 = vmul.f32 %v2349, %v2744
  %v2905 = vmul.f32 %v2352, %v2744
  %v2906 = vmul.f32 %v2357, %v2744
  %v2907 = vmul.f32 %v2360, %v2744
  %v2908 = vmul.f32 %v2365, %v2744
  %v2909 = vmul.f32 %v2368, %v2744
  %v2910 = vmul.f32 %v2373, %v2744
  %v2911 = vmul.f32 %v2376, %v2744
  %v2912 = vmul.f32 %v2381, %v2744
  %v2913 = vmul.f32 %v2384, %v2744
  %v2914 = vmul.f32 %v2389, %v2744
  %v2915 = vmul.f32 %v2392, %v2744
  %v2916 = vmul.f32 %v2397, %v2744
  %v2917 = vmul.f32 %v2400, %v2744
  %v2918 = vmul.f32 %v2405, %v2744
  %v2919 = vmul.f32 %v2408, %v2744
  %v2920 = vmul.f32 %v2413, %v2744
  %v2921 = vmul.f32 %v2416, %v2744
  %v2922 = vmul.f32 %v2421, %v2744
  %v2923 = vmul.f32 %v2424, %v2744
  %v2924 = vmul.f32 %v2429, %v2744
  %v2925 = vmul.f32 %v2432, %v2744
  %v2926 = vmul.f32 %v2437, %v2744
  %v2927 = vmul.f32 %v2440, %v2744
  %v2928 = vmul.f32 %v2445, %v2744
  %v2929 = vmul.f32 %v2448, %v2744
  %v2930 = vmul.f32 %v2453, %v2744
  %v2931 = vmul.f32 %v2456, %v2744
  %v2932 = vmul.f32 %v2461, %v2744
  %v2933 = vmul.f32 %v2464, %v2744
  %v2934 = vmul.f32 %v2469, %v2744
  %v2935 = vmul.f32 %v2472, %v2744
  %v2936 = vmul.f32 %v2477, %v2744
  %v2937 = vmul.f32 %v2480, %v2744
  %v2938 = vmul.f32 %v2485, %v2744
  %v2939 = vmul.f32 %v2488, %v2744
  %v2940 = vmul.f32 %v2493, %v2744
  %v2941 = vmul.f32 %v2496, %v2744
  %v2942 = vmul.f32 %v2501, %v2744
  %v2943 = vmul.f32 %v2504, %v2744
  %v2944 = vmul.f32 %v2509, %v2744
  %v2945 = vmul.f32 %v2512, %v2744
  %v2946 = vmul.f32 %v2517, %v2744
  %v2947 = vmul.f32 %v2520, %v2744
  %v2948 = vmul.f32 %v2525, %v2744
  %v2949 = vmul.f32 %v2528, %v2744
  %v2950 = vmul.f32 %v2533, %v2744
  %v2951 = vmul.f32 %v2536, %v2744
  %v2952 = vmul.f32 %v2541, %v2744
  %v2953 = vmul.f32 %v2544, %v2744
  %v2954 = vmul.f32 %v2549, %v2744
  %v2955 = vmul.f32 %v2552, %v2744
  %v2956 = vmul.f32 %v2557, %v2744
  %v2957 = vmul.f32 %v2560, %v2744
  %v2958 = vmul.f32 %v2565, %v2744
  %v2959 = vmul.f32 %v2568, %v2744
  %v2960 = vmul.f32 %v2573, %v2744
  %v2961 = vmul.f32 %v2576, %v2744
  %v2962 = vmul.f32 %v2581, %v2744
  %v2963 = vmul.f32 %v2584, %v2744
  %v2964 = vmul.f32 %v2589, %v2744
  %v2965 = vmul.f32 %v2592, %v2744
  %v2966 = vmul.f32 %v2597, %v2744
  %v2967 = vmul.f32 %v2600, %v2744
  %v2968 = vmul.f32 %v2605, %v2744
  %v2969 = vmul.f32 %v2608, %v2744
  %v2970 = vmul.f32 %v2613, %v2744
  %v2971 = vmul.f32 %v2616, %v2744
  %v2972 = vmul.f32 %v2621, %v2744
  %v2973 = vmul.f32 %v2624, %v2744
  %v2974 = vmul.f32 %v2629, %v2744
  %v2975 = vmul.f32 %v2632, %v2744
  %v2976 = vmul.f32 %v2637, %v2744
  %v2977 = vmul.f32 %v2640, %v2744
  %v2978 = vmul.f32 %v2645, %v2744
  %v2979 = vmul.f32 %v2648, %v2744
  %v2980 = vmul.f32 %v2653, %v2744
  %v2981 = vmul.f32 %v2656, %v2744
  %v2982 = vmul.f32 %v2661, %v2744
  %v2983 = vmul.f32 %v2664, %v2744
  %v2984 = vmul.f32 %v2669, %v2744
  %v2985 = vmul.f32 %v2672, %v2744
  %v2986 = vmul.f32 %v2677, %v2744
  %v2987 = vmul.f32 %v2680, %v2744
  %v2988 = vmul.f32 %v2685, %v2744
  %v2989 = vmul.f32 %v2688, %v2744
  %v2990 = vmul.f32 %v2693, %v2744
  %v2991 = vmul.f32 %v2696, %v2744
  %v2992 = vmul.f32 %v2701, %v2744
  %v2993 = vmul.f32 %v2704, %v2744
  %v2994 = vmul.f32 %v2709, %v2744
  %v2995 = vmul.f32 %v2712, %v2744
  %v2996 = vmul.f32 %v2717, %v2744
  %v2997 = vmul.f32 %v2720, %v2744
  %v2998 = vmul.f32 %v2725, %v2744
  %v2999 = vmul.f32 %v2728, %v2744
  %v3000 = vmul.f32 %v2733, %v2744
  %v3001 = vmul.f32 %v2736, %v2744
  %v3002 = vld [vmem:[%s3] sm:$0x1]
  %v3004 = vlaneseq
  %v3005 = vshrl.u32 %v3004, 7
  %v3006 = vsub.s32 0, %v3005
  %v3007 = vrot.slane %v3002, %v3006
  %v3009 = vadd.f32 %v2746, %v3007
  %v3010 = vadd.f32 %v2747, %v3007
  %v3011 = vadd.f32 %v2748, %v3007
  %v3012 = vadd.f32 %v2749, %v3007
  %v3013 = vadd.f32 %v2750, %v3007
  %v3014 = vadd.f32 %v2751, %v3007
  %v3015 = vadd.f32 %v2752, %v3007
  %v3016 = vadd.f32 %v2753, %v3007
  %v3017 = vadd.f32 %v2754, %v3007
  %v3018 = vadd.f32 %v2755, %v3007
  %v3019 = vadd.f32 %v2756, %v3007
  %v3020 = vadd.f32 %v2757, %v3007
  %v3021 = vadd.f32 %v2758, %v3007
  %v3022 = vadd.f32 %v2759, %v3007
  %v3023 = vadd.f32 %v2760, %v3007
  %v3024 = vadd.f32 %v2761, %v3007
  %v3025 = vadd.f32 %v2762, %v3007
  %v3026 = vadd.f32 %v2763, %v3007
  %v3027 = vadd.f32 %v2764, %v3007
  %v3028 = vadd.f32 %v2765, %v3007
  %v3029 = vadd.f32 %v2766, %v3007
  %v3030 = vadd.f32 %v2767, %v3007
  %v3031 = vadd.f32 %v2768, %v3007
  %v3032 = vadd.f32 %v2769, %v3007
  %v3033 = vadd.f32 %v2770, %v3007
  %v3034 = vadd.f32 %v2771, %v3007
  %v3035 = vadd.f32 %v2772, %v3007
  %v3036 = vadd.f32 %v2773, %v3007
  %v3037 = vadd.f32 %v2774, %v3007
  %v3038 = vadd.f32 %v2775, %v3007
  %v3039 = vadd.f32 %v2776, %v3007
  %v3040 = vadd.f32 %v2777, %v3007
  %v3041 = vadd.f32 %v2778, %v3007
  %v3042 = vadd.f32 %v2779, %v3007
  %v3043 = vadd.f32 %v2780, %v3007
  %v3044 = vadd.f32 %v2781, %v3007
  %v3045 = vadd.f32 %v2782, %v3007
  %v3046 = vadd.f32 %v2783, %v3007
  %v3047 = vadd.f32 %v2784, %v3007
  %v3048 = vadd.f32 %v2785, %v3007
  %v3049 = vadd.f32 %v2786, %v3007
  %v3050 = vadd.f32 %v2787, %v3007
  %v3051 = vadd.f32 %v2788, %v3007
  %v3052 = vadd.f32 %v2789, %v3007
  %v3053 = vadd.f32 %v2790, %v3007
  %v3054 = vadd.f32 %v2791, %v3007
  %v3055 = vadd.f32 %v2792, %v3007
  %v3056 = vadd.f32 %v2793, %v3007
  %v3057 = vadd.f32 %v2794, %v3007
  %v3058 = vadd.f32 %v2795, %v3007
  %v3059 = vadd.f32 %v2796, %v3007
  %v3060 = vadd.f32 %v2797, %v3007
  %v3061 = vadd.f32 %v2798, %v3007
  %v3062 = vadd.f32 %v2799, %v3007
  %v3063 = vadd.f32 %v2800, %v3007
  %v3064 = vadd.f32 %v2801, %v3007
  %v3065 = vadd.f32 %v2802, %v3007
  %v3066 = vadd.f32 %v2803, %v3007
  %v3067 = vadd.f32 %v2804, %v3007
  %v3068 = vadd.f32 %v2805, %v3007
  %v3069 = vadd.f32 %v2806, %v3007
  %v3070 = vadd.f32 %v2807, %v3007
  %v3071 = vadd.f32 %v2808, %v3007
  %v3072 = vadd.f32 %v2809, %v3007
  %v3073 = vadd.f32 %v2810, %v3007
  %v3074 = vadd.f32 %v2811, %v3007
  %v3075 = vadd.f32 %v2812, %v3007
  %v3076 = vadd.f32 %v2813, %v3007
  %v3077 = vadd.f32 %v2814, %v3007
  %v3078 = vadd.f32 %v2815, %v3007
  %v3079 = vadd.f32 %v2816, %v3007
  %v3080 = vadd.f32 %v2817, %v3007
  %v3081 = vadd.f32 %v2818, %v3007
  %v3082 = vadd.f32 %v2819, %v3007
  %v3083 = vadd.f32 %v2820, %v3007
  %v3084 = vadd.f32 %v2821, %v3007
  %v3085 = vadd.f32 %v2822, %v3007
  %v3086 = vadd.f32 %v2823, %v3007
  %v3087 = vadd.f32 %v2824, %v3007
  %v3088 = vadd.f32 %v2825, %v3007
  %v3089 = vadd.f32 %v2826, %v3007
  %v3090 = vadd.f32 %v2827, %v3007
  %v3091 = vadd.f32 %v2828, %v3007
  %v3092 = vadd.f32 %v2829, %v3007
  %v3093 = vadd.f32 %v2830, %v3007
  %v3094 = vadd.f32 %v2831, %v3007
  %v3095 = vadd.f32 %v2832, %v3007
  %v3096 = vadd.f32 %v2833, %v3007
  %v3097 = vadd.f32 %v2834, %v3007
  %v3098 = vadd.f32 %v2835, %v3007
  %v3099 = vadd.f32 %v2836, %v3007
  %v3100 = vadd.f32 %v2837, %v3007
  %v3101 = vadd.f32 %v2838, %v3007
  %v3102 = vadd.f32 %v2839, %v3007
  %v3103 = vadd.f32 %v2840, %v3007
  %v3104 = vadd.f32 %v2841, %v3007
  %v3105 = vadd.f32 %v2842, %v3007
  %v3106 = vadd.f32 %v2843, %v3007
  %v3107 = vadd.f32 %v2844, %v3007
  %v3108 = vadd.f32 %v2845, %v3007
  %v3109 = vadd.f32 %v2846, %v3007
  %v3110 = vadd.f32 %v2847, %v3007
  %v3111 = vadd.f32 %v2848, %v3007
  %v3112 = vadd.f32 %v2849, %v3007
  %v3113 = vadd.f32 %v2850, %v3007
  %v3114 = vadd.f32 %v2851, %v3007
  %v3115 = vadd.f32 %v2852, %v3007
  %v3116 = vadd.f32 %v2853, %v3007
  %v3117 = vadd.f32 %v2854, %v3007
  %v3118 = vadd.f32 %v2855, %v3007
  %v3119 = vadd.f32 %v2856, %v3007
  %v3120 = vadd.f32 %v2857, %v3007
  %v3121 = vadd.f32 %v2858, %v3007
  %v3122 = vadd.f32 %v2859, %v3007
  %v3123 = vadd.f32 %v2860, %v3007
  %v3124 = vadd.f32 %v2861, %v3007
  %v3125 = vadd.f32 %v2862, %v3007
  %v3126 = vadd.f32 %v2863, %v3007
  %v3127 = vadd.f32 %v2864, %v3007
  %v3128 = vadd.f32 %v2865, %v3007
  %v3129 = vadd.f32 %v2866, %v3007
  %v3130 = vadd.f32 %v2867, %v3007
  %v3131 = vadd.f32 %v2868, %v3007
  %v3132 = vadd.f32 %v2869, %v3007
  %v3133 = vadd.f32 %v2870, %v3007
  %v3134 = vadd.f32 %v2871, %v3007
  %v3135 = vadd.f32 %v2872, %v3007
  %v3136 = vadd.f32 %v2873, %v3007
  %v3137 = vadd.f32 %v2874, %v3007
  %v3138 = vadd.f32 %v2875, %v3007
  %v3139 = vadd.f32 %v2876, %v3007
  %v3140 = vadd.f32 %v2877, %v3007
  %v3141 = vadd.f32 %v2878, %v3007
  %v3142 = vadd.f32 %v2879, %v3007
  %v3143 = vadd.f32 %v2880, %v3007
  %v3144 = vadd.f32 %v2881, %v3007
  %v3145 = vadd.f32 %v2882, %v3007
  %v3146 = vadd.f32 %v2883, %v3007
  %v3147 = vadd.f32 %v2884, %v3007
  %v3148 = vadd.f32 %v2885, %v3007
  %v3149 = vadd.f32 %v2886, %v3007
  %v3150 = vadd.f32 %v2887, %v3007
  %v3151 = vadd.f32 %v2888, %v3007
  %v3152 = vadd.f32 %v2889, %v3007
  %v3153 = vadd.f32 %v2890, %v3007
  %v3154 = vadd.f32 %v2891, %v3007
  %v3155 = vadd.f32 %v2892, %v3007
  %v3156 = vadd.f32 %v2893, %v3007
  %v3157 = vadd.f32 %v2894, %v3007
  %v3158 = vadd.f32 %v2895, %v3007
  %v3159 = vadd.f32 %v2896, %v3007
  %v3160 = vadd.f32 %v2897, %v3007
  %v3161 = vadd.f32 %v2898, %v3007
  %v3162 = vadd.f32 %v2899, %v3007
  %v3163 = vadd.f32 %v2900, %v3007
  %v3164 = vadd.f32 %v2901, %v3007
  %v3165 = vadd.f32 %v2902, %v3007
  %v3166 = vadd.f32 %v2903, %v3007
  %v3167 = vadd.f32 %v2904, %v3007
  %v3168 = vadd.f32 %v2905, %v3007
  %v3169 = vadd.f32 %v2906, %v3007
  %v3170 = vadd.f32 %v2907, %v3007
  %v3171 = vadd.f32 %v2908, %v3007
  %v3172 = vadd.f32 %v2909, %v3007
  %v3173 = vadd.f32 %v2910, %v3007
  %v3174 = vadd.f32 %v2911, %v3007
  %v3175 = vadd.f32 %v2912, %v3007
  %v3176 = vadd.f32 %v2913, %v3007
  %v3177 = vadd.f32 %v2914, %v3007
  %v3178 = vadd.f32 %v2915, %v3007
  %v3179 = vadd.f32 %v2916, %v3007
  %v3180 = vadd.f32 %v2917, %v3007
  %v3181 = vadd.f32 %v2918, %v3007
  %v3182 = vadd.f32 %v2919, %v3007
  %v3183 = vadd.f32 %v2920, %v3007
  %v3184 = vadd.f32 %v2921, %v3007
  %v3185 = vadd.f32 %v2922, %v3007
  %v3186 = vadd.f32 %v2923, %v3007
  %v3187 = vadd.f32 %v2924, %v3007
  %v3188 = vadd.f32 %v2925, %v3007
  %v3189 = vadd.f32 %v2926, %v3007
  %v3190 = vadd.f32 %v2927, %v3007
  %v3191 = vadd.f32 %v2928, %v3007
  %v3192 = vadd.f32 %v2929, %v3007
  %v3193 = vadd.f32 %v2930, %v3007
  %v3194 = vadd.f32 %v2931, %v3007
  %v3195 = vadd.f32 %v2932, %v3007
  %v3196 = vadd.f32 %v2933, %v3007
  %v3197 = vadd.f32 %v2934, %v3007
  %v3198 = vadd.f32 %v2935, %v3007
  %v3199 = vadd.f32 %v2936, %v3007
  %v3200 = vadd.f32 %v2937, %v3007
  %v3201 = vadd.f32 %v2938, %v3007
  %v3202 = vadd.f32 %v2939, %v3007
  %v3203 = vadd.f32 %v2940, %v3007
  %v3204 = vadd.f32 %v2941, %v3007
  %v3205 = vadd.f32 %v2942, %v3007
  %v3206 = vadd.f32 %v2943, %v3007
  %v3207 = vadd.f32 %v2944, %v3007
  %v3208 = vadd.f32 %v2945, %v3007
  %v3209 = vadd.f32 %v2946, %v3007
  %v3210 = vadd.f32 %v2947, %v3007
  %v3211 = vadd.f32 %v2948, %v3007
  %v3212 = vadd.f32 %v2949, %v3007
  %v3213 = vadd.f32 %v2950, %v3007
  %v3214 = vadd.f32 %v2951, %v3007
  %v3215 = vadd.f32 %v2952, %v3007
  %v3216 = vadd.f32 %v2953, %v3007
  %v3217 = vadd.f32 %v2954, %v3007
  %v3218 = vadd.f32 %v2955, %v3007
  %v3219 = vadd.f32 %v2956, %v3007
  %v3220 = vadd.f32 %v2957, %v3007
  %v3221 = vadd.f32 %v2958, %v3007
  %v3222 = vadd.f32 %v2959, %v3007
  %v3223 = vadd.f32 %v2960, %v3007
  %v3224 = vadd.f32 %v2961, %v3007
  %v3225 = vadd.f32 %v2962, %v3007
  %v3226 = vadd.f32 %v2963, %v3007
  %v3227 = vadd.f32 %v2964, %v3007
  %v3228 = vadd.f32 %v2965, %v3007
  %v3229 = vadd.f32 %v2966, %v3007
  %v3230 = vadd.f32 %v2967, %v3007
  %v3231 = vadd.f32 %v2968, %v3007
  %v3232 = vadd.f32 %v2969, %v3007
  %v3233 = vadd.f32 %v2970, %v3007
  %v3234 = vadd.f32 %v2971, %v3007
  %v3235 = vadd.f32 %v2972, %v3007
  %v3236 = vadd.f32 %v2973, %v3007
  %v3237 = vadd.f32 %v2974, %v3007
  %v3238 = vadd.f32 %v2975, %v3007
  %v3239 = vadd.f32 %v2976, %v3007
  %v3240 = vadd.f32 %v2977, %v3007
  %v3241 = vadd.f32 %v2978, %v3007
  %v3242 = vadd.f32 %v2979, %v3007
  %v3243 = vadd.f32 %v2980, %v3007
  %v3244 = vadd.f32 %v2981, %v3007
  %v3245 = vadd.f32 %v2982, %v3007
  %v3246 = vadd.f32 %v2983, %v3007
  %v3247 = vadd.f32 %v2984, %v3007
  %v3248 = vadd.f32 %v2985, %v3007
  %v3249 = vadd.f32 %v2986, %v3007
  %v3250 = vadd.f32 %v2987, %v3007
  %v3251 = vadd.f32 %v2988, %v3007
  %v3252 = vadd.f32 %v2989, %v3007
  %v3253 = vadd.f32 %v2990, %v3007
  %v3254 = vadd.f32 %v2991, %v3007
  %v3255 = vadd.f32 %v2992, %v3007
  %v3256 = vadd.f32 %v2993, %v3007
  %v3257 = vadd.f32 %v2994, %v3007
  %v3258 = vadd.f32 %v2995, %v3007
  %v3259 = vadd.f32 %v2996, %v3007
  %v3260 = vadd.f32 %v2997, %v3007
  %v3261 = vadd.f32 %v2998, %v3007
  %v3262 = vadd.f32 %v2999, %v3007
  %v3263 = vadd.f32 %v3000, %v3007
  %v3264 = vadd.f32 %v3001, %v3007
  %v3265 = vmax.f32 %v3009, 0.0
  %v3266 = vmax.f32 %v3010, 0.0
  %v3267 = vmax.f32 %v3011, 0.0
  %v3268 = vmax.f32 %v3012, 0.0
  %v3269 = vmax.f32 %v3013, 0.0
  %v3270 = vmax.f32 %v3014, 0.0
  %v3271 = vmax.f32 %v3015, 0.0
  %v3272 = vmax.f32 %v3016, 0.0
  %v3273 = vmax.f32 %v3017, 0.0
  %v3274 = vmax.f32 %v3018, 0.0
  %v3275 = vmax.f32 %v3019, 0.0
  %v3276 = vmax.f32 %v3020, 0.0
  %v3277 = vmax.f32 %v3021, 0.0
  %v3278 = vmax.f32 %v3022, 0.0
  %v3279 = vmax.f32 %v3023, 0.0
  %v3280 = vmax.f32 %v3024, 0.0
  %v3281 = vmax.f32 %v3025, 0.0
  %v3282 = vmax.f32 %v3026, 0.0
  %v3283 = vmax.f32 %v3027, 0.0
  %v3284 = vmax.f32 %v3028, 0.0
  %v3285 = vmax.f32 %v3029, 0.0
  %v3286 = vmax.f32 %v3030, 0.0
  %v3287 = vmax.f32 %v3031, 0.0
  %v3288 = vmax.f32 %v3032, 0.0
  %v3289 = vmax.f32 %v3033, 0.0
  %v3290 = vmax.f32 %v3034, 0.0
  %v3291 = vmax.f32 %v3035, 0.0
  %v3292 = vmax.f32 %v3036, 0.0
  %v3293 = vmax.f32 %v3037, 0.0
  %v3294 = vmax.f32 %v3038, 0.0
  %v3295 = vmax.f32 %v3039, 0.0
  %v3296 = vmax.f32 %v3040, 0.0
  %v3297 = vmax.f32 %v3041, 0.0
  %v3298 = vmax.f32 %v3042, 0.0
  %v3299 = vmax.f32 %v3043, 0.0
  %v3300 = vmax.f32 %v3044, 0.0
  %v3301 = vmax.f32 %v3045, 0.0
  %v3302 = vmax.f32 %v3046, 0.0
  %v3303 = vmax.f32 %v3047, 0.0
  %v3304 = vmax.f32 %v3048, 0.0
  %v3305 = vmax.f32 %v3049, 0.0
  %v3306 = vmax.f32 %v3050, 0.0
  %v3307 = vmax.f32 %v3051, 0.0
  %v3308 = vmax.f32 %v3052, 0.0
  %v3309 = vmax.f32 %v3053, 0.0
  %v3310 = vmax.f32 %v3054, 0.0
  %v3311 = vmax.f32 %v3055, 0.0
  %v3312 = vmax.f32 %v3056, 0.0
  %v3313 = vmax.f32 %v3057, 0.0
  %v3314 = vmax.f32 %v3058, 0.0
  %v3315 = vmax.f32 %v3059, 0.0
  %v3316 = vmax.f32 %v3060, 0.0
  %v3317 = vmax.f32 %v3061, 0.0
  %v3318 = vmax.f32 %v3062, 0.0
  %v3319 = vmax.f32 %v3063, 0.0
  %v3320 = vmax.f32 %v3064, 0.0
  %v3321 = vmax.f32 %v3065, 0.0
  %v3322 = vmax.f32 %v3066, 0.0
  %v3323 = vmax.f32 %v3067, 0.0
  %v3324 = vmax.f32 %v3068, 0.0
  %v3325 = vmax.f32 %v3069, 0.0
  %v3326 = vmax.f32 %v3070, 0.0
  %v3327 = vmax.f32 %v3071, 0.0
  %v3328 = vmax.f32 %v3072, 0.0
  %v3329 = vmax.f32 %v3073, 0.0
  %v3330 = vmax.f32 %v3074, 0.0
  %v3331 = vmax.f32 %v3075, 0.0
  %v3332 = vmax.f32 %v3076, 0.0
  %v3333 = vmax.f32 %v3077, 0.0
  %v3334 = vmax.f32 %v3078, 0.0
  %v3335 = vmax.f32 %v3079, 0.0
  %v3336 = vmax.f32 %v3080, 0.0
  %v3337 = vmax.f32 %v3081, 0.0
  %v3338 = vmax.f32 %v3082, 0.0
  %v3339 = vmax.f32 %v3083, 0.0
  %v3340 = vmax.f32 %v3084, 0.0
  %v3341 = vmax.f32 %v3085, 0.0
  %v3342 = vmax.f32 %v3086, 0.0
  %v3343 = vmax.f32 %v3087, 0.0
  %v3344 = vmax.f32 %v3088, 0.0
  %v3345 = vmax.f32 %v3089, 0.0
  %v3346 = vmax.f32 %v3090, 0.0
  %v3347 = vmax.f32 %v3091, 0.0
  %v3348 = vmax.f32 %v3092, 0.0
  %v3349 = vmax.f32 %v3093, 0.0
  %v3350 = vmax.f32 %v3094, 0.0
  %v3351 = vmax.f32 %v3095, 0.0
  %v3352 = vmax.f32 %v3096, 0.0
  %v3353 = vmax.f32 %v3097, 0.0
  %v3354 = vmax.f32 %v3098, 0.0
  %v3355 = vmax.f32 %v3099, 0.0
  %v3356 = vmax.f32 %v3100, 0.0
  %v3357 = vmax.f32 %v3101, 0.0
  %v3358 = vmax.f32 %v3102, 0.0
  %v3359 = vmax.f32 %v3103, 0.0
  %v3360 = vmax.f32 %v3104, 0.0
  %v3361 = vmax.f32 %v3105, 0.0
  %v3362 = vmax.f32 %v3106, 0.0
  %v3363 = vmax.f32 %v3107, 0.0
  %v3364 = vmax.f32 %v3108, 0.0
  %v3365 = vmax.f32 %v3109, 0.0
  %v3366 = vmax.f32 %v3110, 0.0
  %v3367 = vmax.f32 %v3111, 0.0
  %v3368 = vmax.f32 %v3112, 0.0
  %v3369 = vmax.f32 %v3113, 0.0
  %v3370 = vmax.f32 %v3114, 0.0
  %v3371 = vmax.f32 %v3115, 0.0
  %v3372 = vmax.f32 %v3116, 0.0
  %v3373 = vmax.f32 %v3117, 0.0
  %v3374 = vmax.f32 %v3118, 0.0
  %v3375 = vmax.f32 %v3119, 0.0
  %v3376 = vmax.f32 %v3120, 0.0
  %v3377 = vmax.f32 %v3121, 0.0
  %v3378 = vmax.f32 %v3122, 0.0
  %v3379 = vmax.f32 %v3123, 0.0
  %v3380 = vmax.f32 %v3124, 0.0
  %v3381 = vmax.f32 %v3125, 0.0
  %v3382 = vmax.f32 %v3126, 0.0
  %v3383 = vmax.f32 %v3127, 0.0
  %v3384 = vmax.f32 %v3128, 0.0
  %v3385 = vmax.f32 %v3129, 0.0
  %v3386 = vmax.f32 %v3130, 0.0
  %v3387 = vmax.f32 %v3131, 0.0
  %v3388 = vmax.f32 %v3132, 0.0
  %v3389 = vmax.f32 %v3133, 0.0
  %v3390 = vmax.f32 %v3134, 0.0
  %v3391 = vmax.f32 %v3135, 0.0
  %v3392 = vmax.f32 %v3136, 0.0
  %v3393 = vmax.f32 %v3137, 0.0
  %v3394 = vmax.f32 %v3138, 0.0
  %v3395 = vmax.f32 %v3139, 0.0
  %v3396 = vmax.f32 %v3140, 0.0
  %v3397 = vmax.f32 %v3141, 0.0
  %v3398 = vmax.f32 %v3142, 0.0
  %v3399 = vmax.f32 %v3143, 0.0
  %v3400 = vmax.f32 %v3144, 0.0
  %v3401 = vmax.f32 %v3145, 0.0
  %v3402 = vmax.f32 %v3146, 0.0
  %v3403 = vmax.f32 %v3147, 0.0
  %v3404 = vmax.f32 %v3148, 0.0
  %v3405 = vmax.f32 %v3149, 0.0
  %v3406 = vmax.f32 %v3150, 0.0
  %v3407 = vmax.f32 %v3151, 0.0
  %v3408 = vmax.f32 %v3152, 0.0
  %v3409 = vmax.f32 %v3153, 0.0
  %v3410 = vmax.f32 %v3154, 0.0
  %v3411 = vmax.f32 %v3155, 0.0
  %v3412 = vmax.f32 %v3156, 0.0
  %v3413 = vmax.f32 %v3157, 0.0
  %v3414 = vmax.f32 %v3158, 0.0
  %v3415 = vmax.f32 %v3159, 0.0
  %v3416 = vmax.f32 %v3160, 0.0
  %v3417 = vmax.f32 %v3161, 0.0
  %v3418 = vmax.f32 %v3162, 0.0
  %v3419 = vmax.f32 %v3163, 0.0
  %v3420 = vmax.f32 %v3164, 0.0
  %v3421 = vmax.f32 %v3165, 0.0
  %v3422 = vmax.f32 %v3166, 0.0
  %v3423 = vmax.f32 %v3167, 0.0
  %v3424 = vmax.f32 %v3168, 0.0
  %v3425 = vmax.f32 %v3169, 0.0
  %v3426 = vmax.f32 %v3170, 0.0
  %v3427 = vmax.f32 %v3171, 0.0
  %v3428 = vmax.f32 %v3172, 0.0
  %v3429 = vmax.f32 %v3173, 0.0
  %v3430 = vmax.f32 %v3174, 0.0
  %v3431 = vmax.f32 %v3175, 0.0
  %v3432 = vmax.f32 %v3176, 0.0
  %v3433 = vmax.f32 %v3177, 0.0
  %v3434 = vmax.f32 %v3178, 0.0
  %v3435 = vmax.f32 %v3179, 0.0
  %v3436 = vmax.f32 %v3180, 0.0
  %v3437 = vmax.f32 %v3181, 0.0
  %v3438 = vmax.f32 %v3182, 0.0
  %v3439 = vmax.f32 %v3183, 0.0
  %v3440 = vmax.f32 %v3184, 0.0
  %v3441 = vmax.f32 %v3185, 0.0
  %v3442 = vmax.f32 %v3186, 0.0
  %v3443 = vmax.f32 %v3187, 0.0
  %v3444 = vmax.f32 %v3188, 0.0
  %v3445 = vmax.f32 %v3189, 0.0
  %v3446 = vmax.f32 %v3190, 0.0
  %v3447 = vmax.f32 %v3191, 0.0
  %v3448 = vmax.f32 %v3192, 0.0
  %v3449 = vmax.f32 %v3193, 0.0
  %v3450 = vmax.f32 %v3194, 0.0
  %v3451 = vmax.f32 %v3195, 0.0
  %v3452 = vmax.f32 %v3196, 0.0
  %v3453 = vmax.f32 %v3197, 0.0
  %v3454 = vmax.f32 %v3198, 0.0
  %v3455 = vmax.f32 %v3199, 0.0
  %v3456 = vmax.f32 %v3200, 0.0
  %v3457 = vmax.f32 %v3201, 0.0
  %v3458 = vmax.f32 %v3202, 0.0
  %v3459 = vmax.f32 %v3203, 0.0
  %v3460 = vmax.f32 %v3204, 0.0
  %v3461 = vmax.f32 %v3205, 0.0
  %v3462 = vmax.f32 %v3206, 0.0
  %v3463 = vmax.f32 %v3207, 0.0
  %v3464 = vmax.f32 %v3208, 0.0
  %v3465 = vmax.f32 %v3209, 0.0
  %v3466 = vmax.f32 %v3210, 0.0
  %v3467 = vmax.f32 %v3211, 0.0
  %v3468 = vmax.f32 %v3212, 0.0
  %v3469 = vmax.f32 %v3213, 0.0
  %v3470 = vmax.f32 %v3214, 0.0
  %v3471 = vmax.f32 %v3215, 0.0
  %v3472 = vmax.f32 %v3216, 0.0
  %v3473 = vmax.f32 %v3217, 0.0
  %v3474 = vmax.f32 %v3218, 0.0
  %v3475 = vmax.f32 %v3219, 0.0
  %v3476 = vmax.f32 %v3220, 0.0
  %v3477 = vmax.f32 %v3221, 0.0
  %v3478 = vmax.f32 %v3222, 0.0
  %v3479 = vmax.f32 %v3223, 0.0
  %v3480 = vmax.f32 %v3224, 0.0
  %v3481 = vmax.f32 %v3225, 0.0
  %v3482 = vmax.f32 %v3226, 0.0
  %v3483 = vmax.f32 %v3227, 0.0
  %v3484 = vmax.f32 %v3228, 0.0
  %v3485 = vmax.f32 %v3229, 0.0
  %v3486 = vmax.f32 %v3230, 0.0
  %v3487 = vmax.f32 %v3231, 0.0
  %v3488 = vmax.f32 %v3232, 0.0
  %v3489 = vmax.f32 %v3233, 0.0
  %v3490 = vmax.f32 %v3234, 0.0
  %v3491 = vmax.f32 %v3235, 0.0
  %v3492 = vmax.f32 %v3236, 0.0
  %v3493 = vmax.f32 %v3237, 0.0
  %v3494 = vmax.f32 %v3238, 0.0
  %v3495 = vmax.f32 %v3239, 0.0
  %v3496 = vmax.f32 %v3240, 0.0
  %v3497 = vmax.f32 %v3241, 0.0
  %v3498 = vmax.f32 %v3242, 0.0
  %v3499 = vmax.f32 %v3243, 0.0
  %v3500 = vmax.f32 %v3244, 0.0
  %v3501 = vmax.f32 %v3245, 0.0
  %v3502 = vmax.f32 %v3246, 0.0
  %v3503 = vmax.f32 %v3247, 0.0
  %v3504 = vmax.f32 %v3248, 0.0
  %v3505 = vmax.f32 %v3249, 0.0
  %v3506 = vmax.f32 %v3250, 0.0
  %v3507 = vmax.f32 %v3251, 0.0
  %v3508 = vmax.f32 %v3252, 0.0
  %v3509 = vmax.f32 %v3253, 0.0
  %v3510 = vmax.f32 %v3254, 0.0
  %v3511 = vmax.f32 %v3255, 0.0
  %v3512 = vmax.f32 %v3256, 0.0
  %v3513 = vmax.f32 %v3257, 0.0
  %v3514 = vmax.f32 %v3258, 0.0
  %v3515 = vmax.f32 %v3259, 0.0
  %v3516 = vmax.f32 %v3260, 0.0
  %v3517 = vmax.f32 %v3261, 0.0
  %v3518 = vmax.f32 %v3262, 0.0
  %v3519 = vmax.f32 %v3263, 0.0
  %v3520 = vmax.f32 %v3264, 0.0
  %v3521 = vpack.c.bf16 %v3266, %v3265
  %v3522 = vpack.c.bf16 %v3268, %v3267
  %v3523 = vpack.c.bf16 %v3270, %v3269
  %v3524 = vpack.c.bf16 %v3272, %v3271
  %v3525 = vpack.c.bf16 %v3274, %v3273
  %v3526 = vpack.c.bf16 %v3276, %v3275
  %v3527 = vpack.c.bf16 %v3278, %v3277
  %v3528 = vpack.c.bf16 %v3280, %v3279
  %v3529 = vpack.c.bf16 %v3282, %v3281
  %v3530 = vpack.c.bf16 %v3284, %v3283
  %v3531 = vpack.c.bf16 %v3286, %v3285
  %v3532 = vpack.c.bf16 %v3288, %v3287
  %v3533 = vpack.c.bf16 %v3290, %v3289
  %v3534 = vpack.c.bf16 %v3292, %v3291
  %v3535 = vpack.c.bf16 %v3294, %v3293
  %v3536 = vpack.c.bf16 %v3296, %v3295
  %v3537 = vpack.c.bf16 %v3298, %v3297
  %v3538 = vpack.c.bf16 %v3300, %v3299
  %v3539 = vpack.c.bf16 %v3302, %v3301
  %v3540 = vpack.c.bf16 %v3304, %v3303
  %v3541 = vpack.c.bf16 %v3306, %v3305
  %v3542 = vpack.c.bf16 %v3308, %v3307
  %v3543 = vpack.c.bf16 %v3310, %v3309
  %v3544 = vpack.c.bf16 %v3312, %v3311
  %v3545 = vpack.c.bf16 %v3314, %v3313
  %v3546 = vpack.c.bf16 %v3316, %v3315
  %v3547 = vpack.c.bf16 %v3318, %v3317
  %v3548 = vpack.c.bf16 %v3320, %v3319
  %v3549 = vpack.c.bf16 %v3322, %v3321
  %v3550 = vpack.c.bf16 %v3324, %v3323
  %v3551 = vpack.c.bf16 %v3326, %v3325
  %v3552 = vpack.c.bf16 %v3328, %v3327
  %v3553 = vpack.c.bf16 %v3330, %v3329
  %v3554 = vpack.c.bf16 %v3332, %v3331
  %v3555 = vpack.c.bf16 %v3334, %v3333
  %v3556 = vpack.c.bf16 %v3336, %v3335
  %v3557 = vpack.c.bf16 %v3338, %v3337
  %v3558 = vpack.c.bf16 %v3340, %v3339
  %v3559 = vpack.c.bf16 %v3342, %v3341
  %v3560 = vpack.c.bf16 %v3344, %v3343
  %v3561 = vpack.c.bf16 %v3346, %v3345
  %v3562 = vpack.c.bf16 %v3348, %v3347
  %v3563 = vpack.c.bf16 %v3350, %v3349
  %v3564 = vpack.c.bf16 %v3352, %v3351
  %v3565 = vpack.c.bf16 %v3354, %v3353
  %v3566 = vpack.c.bf16 %v3356, %v3355
  %v3567 = vpack.c.bf16 %v3358, %v3357
  %v3568 = vpack.c.bf16 %v3360, %v3359
  %v3569 = vpack.c.bf16 %v3362, %v3361
  %v3570 = vpack.c.bf16 %v3364, %v3363
  %v3571 = vpack.c.bf16 %v3366, %v3365
  %v3572 = vpack.c.bf16 %v3368, %v3367
  %v3573 = vpack.c.bf16 %v3370, %v3369
  %v3574 = vpack.c.bf16 %v3372, %v3371
  %v3575 = vpack.c.bf16 %v3374, %v3373
  %v3576 = vpack.c.bf16 %v3376, %v3375
  %v3577 = vpack.c.bf16 %v3378, %v3377
  %v3578 = vpack.c.bf16 %v3380, %v3379
  %v3579 = vpack.c.bf16 %v3382, %v3381
  %v3580 = vpack.c.bf16 %v3384, %v3383
  %v3581 = vpack.c.bf16 %v3386, %v3385
  %v3582 = vpack.c.bf16 %v3388, %v3387
  %v3583 = vpack.c.bf16 %v3390, %v3389
  %v3584 = vpack.c.bf16 %v3392, %v3391
  %v3585 = vpack.c.bf16 %v3394, %v3393
  %v3586 = vpack.c.bf16 %v3396, %v3395
  %v3587 = vpack.c.bf16 %v3398, %v3397
  %v3588 = vpack.c.bf16 %v3400, %v3399
  %v3589 = vpack.c.bf16 %v3402, %v3401
  %v3590 = vpack.c.bf16 %v3404, %v3403
  %v3591 = vpack.c.bf16 %v3406, %v3405
  %v3592 = vpack.c.bf16 %v3408, %v3407
  %v3593 = vpack.c.bf16 %v3410, %v3409
  %v3594 = vpack.c.bf16 %v3412, %v3411
  %v3595 = vpack.c.bf16 %v3414, %v3413
  %v3596 = vpack.c.bf16 %v3416, %v3415
  %v3597 = vpack.c.bf16 %v3418, %v3417
  %v3598 = vpack.c.bf16 %v3420, %v3419
  %v3599 = vpack.c.bf16 %v3422, %v3421
  %v3600 = vpack.c.bf16 %v3424, %v3423
  %v3601 = vpack.c.bf16 %v3426, %v3425
  %v3602 = vpack.c.bf16 %v3428, %v3427
  %v3603 = vpack.c.bf16 %v3430, %v3429
  %v3604 = vpack.c.bf16 %v3432, %v3431
  %v3605 = vpack.c.bf16 %v3434, %v3433
  %v3606 = vpack.c.bf16 %v3436, %v3435
  %v3607 = vpack.c.bf16 %v3438, %v3437
  %v3608 = vpack.c.bf16 %v3440, %v3439
  %v3609 = vpack.c.bf16 %v3442, %v3441
  %v3610 = vpack.c.bf16 %v3444, %v3443
  %v3611 = vpack.c.bf16 %v3446, %v3445
  %v3612 = vpack.c.bf16 %v3448, %v3447
  %v3613 = vpack.c.bf16 %v3450, %v3449
  %v3614 = vpack.c.bf16 %v3452, %v3451
  %v3615 = vpack.c.bf16 %v3454, %v3453
  %v3616 = vpack.c.bf16 %v3456, %v3455
  %v3617 = vpack.c.bf16 %v3458, %v3457
  %v3618 = vpack.c.bf16 %v3460, %v3459
  %v3619 = vpack.c.bf16 %v3462, %v3461
  %v3620 = vpack.c.bf16 %v3464, %v3463
  %v3621 = vpack.c.bf16 %v3466, %v3465
  %v3622 = vpack.c.bf16 %v3468, %v3467
  %v3623 = vpack.c.bf16 %v3470, %v3469
  %v3624 = vpack.c.bf16 %v3472, %v3471
  %v3625 = vpack.c.bf16 %v3474, %v3473
  %v3626 = vpack.c.bf16 %v3476, %v3475
  %v3627 = vpack.c.bf16 %v3478, %v3477
  %v3628 = vpack.c.bf16 %v3480, %v3479
  %v3629 = vpack.c.bf16 %v3482, %v3481
  %v3630 = vpack.c.bf16 %v3484, %v3483
  %v3631 = vpack.c.bf16 %v3486, %v3485
  %v3632 = vpack.c.bf16 %v3488, %v3487
  %v3633 = vpack.c.bf16 %v3490, %v3489
  %v3634 = vpack.c.bf16 %v3492, %v3491
  %v3635 = vpack.c.bf16 %v3494, %v3493
  %v3636 = vpack.c.bf16 %v3496, %v3495
  %v3637 = vpack.c.bf16 %v3498, %v3497
  %v3638 = vpack.c.bf16 %v3500, %v3499
  %v3639 = vpack.c.bf16 %v3502, %v3501
  %v3640 = vpack.c.bf16 %v3504, %v3503
  %v3641 = vpack.c.bf16 %v3506, %v3505
  %v3642 = vpack.c.bf16 %v3508, %v3507
  %v3643 = vpack.c.bf16 %v3510, %v3509
  %v3644 = vpack.c.bf16 %v3512, %v3511
  %v3645 = vpack.c.bf16 %v3514, %v3513
  %v3646 = vpack.c.bf16 %v3516, %v3515
  %v3647 = vpack.c.bf16 %v3518, %v3517
  %v3648 = vpack.c.bf16 %v3520, %v3519
  %v3777 = vunpack.c.l.b16 %v3521
  %v3778 = vunpack.c.h.b16 %v3521
  %v3779 = vunpack.c.l.b16 %v3522
  %v3780 = vunpack.c.h.b16 %v3522
  %v3781 = vunpack.c.l.b16 %v3523
  %v3782 = vunpack.c.h.b16 %v3523
  %v3783 = vunpack.c.l.b16 %v3524
  %v3784 = vunpack.c.h.b16 %v3524
  %v3785 = vunpack.c.l.b16 %v3525
  %v3786 = vunpack.c.h.b16 %v3525
  %v3787 = vunpack.c.l.b16 %v3526
  %v3788 = vunpack.c.h.b16 %v3526
  %v3789 = vunpack.c.l.b16 %v3527
  %v3790 = vunpack.c.h.b16 %v3527
  %v3791 = vunpack.c.l.b16 %v3528
  %v3792 = vunpack.c.h.b16 %v3528
  %v3793 = vunpack.c.l.b16 %v3529
  %v3794 = vunpack.c.h.b16 %v3529
  %v3795 = vunpack.c.l.b16 %v3530
  %v3796 = vunpack.c.h.b16 %v3530
  %v3797 = vunpack.c.l.b16 %v3531
  %v3798 = vunpack.c.h.b16 %v3531
  %v3799 = vunpack.c.l.b16 %v3532
  %v3800 = vunpack.c.h.b16 %v3532
  %v3801 = vunpack.c.l.b16 %v3533
  %v3802 = vunpack.c.h.b16 %v3533
  %v3803 = vunpack.c.l.b16 %v3534
  %v3804 = vunpack.c.h.b16 %v3534
  %v3805 = vunpack.c.l.b16 %v3535
  %v3806 = vunpack.c.h.b16 %v3535
  %v3807 = vunpack.c.l.b16 %v3536
  %v3808 = vunpack.c.h.b16 %v3536
  %v3809 = vunpack.c.l.b16 %v3537
  %v3810 = vunpack.c.h.b16 %v3537
  %v3811 = vunpack.c.l.b16 %v3538
  %v3812 = vunpack.c.h.b16 %v3538
  %v3813 = vunpack.c.l.b16 %v3539
  %v3814 = vunpack.c.h.b16 %v3539
  %v3815 = vunpack.c.l.b16 %v3540
  %v3816 = vunpack.c.h.b16 %v3540
  %v3817 = vunpack.c.l.b16 %v3541
  %v3818 = vunpack.c.h.b16 %v3541
  %v3819 = vunpack.c.l.b16 %v3542
  %v3820 = vunpack.c.h.b16 %v3542
  %v3821 = vunpack.c.l.b16 %v3543
  %v3822 = vunpack.c.h.b16 %v3543
  %v3823 = vunpack.c.l.b16 %v3544
  %v3824 = vunpack.c.h.b16 %v3544
  %v3825 = vunpack.c.l.b16 %v3545
  %v3826 = vunpack.c.h.b16 %v3545
  %v3827 = vunpack.c.l.b16 %v3546
  %v3828 = vunpack.c.h.b16 %v3546
  %v3829 = vunpack.c.l.b16 %v3547
  %v3830 = vunpack.c.h.b16 %v3547
  %v3831 = vunpack.c.l.b16 %v3548
  %v3832 = vunpack.c.h.b16 %v3548
  %v3833 = vunpack.c.l.b16 %v3549
  %v3834 = vunpack.c.h.b16 %v3549
  %v3835 = vunpack.c.l.b16 %v3550
  %v3836 = vunpack.c.h.b16 %v3550
  %v3837 = vunpack.c.l.b16 %v3551
  %v3838 = vunpack.c.h.b16 %v3551
  %v3839 = vunpack.c.l.b16 %v3552
  %v3840 = vunpack.c.h.b16 %v3552
  %v3841 = vunpack.c.l.b16 %v3553
  %v3842 = vunpack.c.h.b16 %v3553
  %v3843 = vunpack.c.l.b16 %v3554
  %v3844 = vunpack.c.h.b16 %v3554
  %v3845 = vunpack.c.l.b16 %v3555
  %v3846 = vunpack.c.h.b16 %v3555
  %v3847 = vunpack.c.l.b16 %v3556
  %v3848 = vunpack.c.h.b16 %v3556
  %v3849 = vunpack.c.l.b16 %v3557
  %v3850 = vunpack.c.h.b16 %v3557
  %v3851 = vunpack.c.l.b16 %v3558
  %v3852 = vunpack.c.h.b16 %v3558
  %v3853 = vunpack.c.l.b16 %v3559
  %v3854 = vunpack.c.h.b16 %v3559
  %v3855 = vunpack.c.l.b16 %v3560
  %v3856 = vunpack.c.h.b16 %v3560
  %v3857 = vunpack.c.l.b16 %v3561
  %v3858 = vunpack.c.h.b16 %v3561
  %v3859 = vunpack.c.l.b16 %v3562
  %v3860 = vunpack.c.h.b16 %v3562
  %v3861 = vunpack.c.l.b16 %v3563
  %v3862 = vunpack.c.h.b16 %v3563
  %v3863 = vunpack.c.l.b16 %v3564
  %v3864 = vunpack.c.h.b16 %v3564
  %v3865 = vunpack.c.l.b16 %v3565
  %v3866 = vunpack.c.h.b16 %v3565
  %v3867 = vunpack.c.l.b16 %v3566
  %v3868 = vunpack.c.h.b16 %v3566
  %v3869 = vunpack.c.l.b16 %v3567
  %v3870 = vunpack.c.h.b16 %v3567
  %v3871 = vunpack.c.l.b16 %v3568
  %v3872 = vunpack.c.h.b16 %v3568
  %v3873 = vunpack.c.l.b16 %v3569
  %v3874 = vunpack.c.h.b16 %v3569
  %v3875 = vunpack.c.l.b16 %v3570
  %v3876 = vunpack.c.h.b16 %v3570
  %v3877 = vunpack.c.l.b16 %v3571
  %v3878 = vunpack.c.h.b16 %v3571
  %v3879 = vunpack.c.l.b16 %v3572
  %v3880 = vunpack.c.h.b16 %v3572
  %v3881 = vunpack.c.l.b16 %v3573
  %v3882 = vunpack.c.h.b16 %v3573
  %v3883 = vunpack.c.l.b16 %v3574
  %v3884 = vunpack.c.h.b16 %v3574
  %v3885 = vunpack.c.l.b16 %v3575
  %v3886 = vunpack.c.h.b16 %v3575
  %v3887 = vunpack.c.l.b16 %v3576
  %v3888 = vunpack.c.h.b16 %v3576
  %v3889 = vunpack.c.l.b16 %v3577
  %v3890 = vunpack.c.h.b16 %v3577
  %v3891 = vunpack.c.l.b16 %v3578
  %v3892 = vunpack.c.h.b16 %v3578
  %v3893 = vunpack.c.l.b16 %v3579
  %v3894 = vunpack.c.h.b16 %v3579
  %v3895 = vunpack.c.l.b16 %v3580
  %v3896 = vunpack.c.h.b16 %v3580
  %v3897 = vunpack.c.l.b16 %v3581
  %v3898 = vunpack.c.h.b16 %v3581
  %v3899 = vunpack.c.l.b16 %v3582
  %v3900 = vunpack.c.h.b16 %v3582
  %v3901 = vunpack.c.l.b16 %v3583
  %v3902 = vunpack.c.h.b16 %v3583
  %v3903 = vunpack.c.l.b16 %v3584
  %v3904 = vunpack.c.h.b16 %v3584
  %v3905 = vunpack.c.l.b16 %v3585
  %v3906 = vunpack.c.h.b16 %v3585
  %v3907 = vunpack.c.l.b16 %v3586
  %v3908 = vunpack.c.h.b16 %v3586
  %v3909 = vunpack.c.l.b16 %v3587
  %v3910 = vunpack.c.h.b16 %v3587
  %v3911 = vunpack.c.l.b16 %v3588
  %v3912 = vunpack.c.h.b16 %v3588
  %v3913 = vunpack.c.l.b16 %v3589
  %v3914 = vunpack.c.h.b16 %v3589
  %v3915 = vunpack.c.l.b16 %v3590
  %v3916 = vunpack.c.h.b16 %v3590
  %v3917 = vunpack.c.l.b16 %v3591
  %v3918 = vunpack.c.h.b16 %v3591
  %v3919 = vunpack.c.l.b16 %v3592
  %v3920 = vunpack.c.h.b16 %v3592
  %v3921 = vunpack.c.l.b16 %v3593
  %v3922 = vunpack.c.h.b16 %v3593
  %v3923 = vunpack.c.l.b16 %v3594
  %v3924 = vunpack.c.h.b16 %v3594
  %v3925 = vunpack.c.l.b16 %v3595
  %v3926 = vunpack.c.h.b16 %v3595
  %v3927 = vunpack.c.l.b16 %v3596
  %v3928 = vunpack.c.h.b16 %v3596
  %v3929 = vunpack.c.l.b16 %v3597
  %v3930 = vunpack.c.h.b16 %v3597
  %v3931 = vunpack.c.l.b16 %v3598
  %v3932 = vunpack.c.h.b16 %v3598
  %v3933 = vunpack.c.l.b16 %v3599
  %v3934 = vunpack.c.h.b16 %v3599
  %v3935 = vunpack.c.l.b16 %v3600
  %v3936 = vunpack.c.h.b16 %v3600
  %v3937 = vunpack.c.l.b16 %v3601
  %v3938 = vunpack.c.h.b16 %v3601
  %v3939 = vunpack.c.l.b16 %v3602
  %v3940 = vunpack.c.h.b16 %v3602
  %v3941 = vunpack.c.l.b16 %v3603
  %v3942 = vunpack.c.h.b16 %v3603
  %v3943 = vunpack.c.l.b16 %v3604
  %v3944 = vunpack.c.h.b16 %v3604
  %v3945 = vunpack.c.l.b16 %v3605
  %v3946 = vunpack.c.h.b16 %v3605
  %v3947 = vunpack.c.l.b16 %v3606
  %v3948 = vunpack.c.h.b16 %v3606
  %v3949 = vunpack.c.l.b16 %v3607
  %v3950 = vunpack.c.h.b16 %v3607
  %v3951 = vunpack.c.l.b16 %v3608
  %v3952 = vunpack.c.h.b16 %v3608
  %v3953 = vunpack.c.l.b16 %v3609
  %v3954 = vunpack.c.h.b16 %v3609
  %v3955 = vunpack.c.l.b16 %v3610
  %v3956 = vunpack.c.h.b16 %v3610
  %v3957 = vunpack.c.l.b16 %v3611
  %v3958 = vunpack.c.h.b16 %v3611
  %v3959 = vunpack.c.l.b16 %v3612
  %v3960 = vunpack.c.h.b16 %v3612
  %v3961 = vunpack.c.l.b16 %v3613
  %v3962 = vunpack.c.h.b16 %v3613
  %v3963 = vunpack.c.l.b16 %v3614
  %v3964 = vunpack.c.h.b16 %v3614
  %v3965 = vunpack.c.l.b16 %v3615
  %v3966 = vunpack.c.h.b16 %v3615
  %v3967 = vunpack.c.l.b16 %v3616
  %v3968 = vunpack.c.h.b16 %v3616
  %v3969 = vunpack.c.l.b16 %v3617
  %v3970 = vunpack.c.h.b16 %v3617
  %v3971 = vunpack.c.l.b16 %v3618
  %v3972 = vunpack.c.h.b16 %v3618
  %v3973 = vunpack.c.l.b16 %v3619
  %v3974 = vunpack.c.h.b16 %v3619
  %v3975 = vunpack.c.l.b16 %v3620
  %v3976 = vunpack.c.h.b16 %v3620
  %v3977 = vunpack.c.l.b16 %v3621
  %v3978 = vunpack.c.h.b16 %v3621
  %v3979 = vunpack.c.l.b16 %v3622
  %v3980 = vunpack.c.h.b16 %v3622
  %v3981 = vunpack.c.l.b16 %v3623
  %v3982 = vunpack.c.h.b16 %v3623
  %v3983 = vunpack.c.l.b16 %v3624
  %v3984 = vunpack.c.h.b16 %v3624
  %v3985 = vunpack.c.l.b16 %v3625
  %v3986 = vunpack.c.h.b16 %v3625
  %v3987 = vunpack.c.l.b16 %v3626
  %v3988 = vunpack.c.h.b16 %v3626
  %v3989 = vunpack.c.l.b16 %v3627
  %v3990 = vunpack.c.h.b16 %v3627
  %v3991 = vunpack.c.l.b16 %v3628
  %v3992 = vunpack.c.h.b16 %v3628
  %v3993 = vunpack.c.l.b16 %v3629
  %v3994 = vunpack.c.h.b16 %v3629
  %v3995 = vunpack.c.l.b16 %v3630
  %v3996 = vunpack.c.h.b16 %v3630
  %v3997 = vunpack.c.l.b16 %v3631
  %v3998 = vunpack.c.h.b16 %v3631
  %v3999 = vunpack.c.l.b16 %v3632
  %v4000 = vunpack.c.h.b16 %v3632
  %v4001 = vunpack.c.l.b16 %v3633
  %v4002 = vunpack.c.h.b16 %v3633
  %v4003 = vunpack.c.l.b16 %v3634
  %v4004 = vunpack.c.h.b16 %v3634
  %v4005 = vunpack.c.l.b16 %v3635
  %v4006 = vunpack.c.h.b16 %v3635
  %v4007 = vunpack.c.l.b16 %v3636
  %v4008 = vunpack.c.h.b16 %v3636
  %v4009 = vunpack.c.l.b16 %v3637
  %v4010 = vunpack.c.h.b16 %v3637
  %v4011 = vunpack.c.l.b16 %v3638
  %v4012 = vunpack.c.h.b16 %v3638
  %v4013 = vunpack.c.l.b16 %v3639
  %v4014 = vunpack.c.h.b16 %v3639
  %v4015 = vunpack.c.l.b16 %v3640
  %v4016 = vunpack.c.h.b16 %v3640
  %v4017 = vunpack.c.l.b16 %v3641
  %v4018 = vunpack.c.h.b16 %v3641
  %v4019 = vunpack.c.l.b16 %v3642
  %v4020 = vunpack.c.h.b16 %v3642
  %v4021 = vunpack.c.l.b16 %v3643
  %v4022 = vunpack.c.h.b16 %v3643
  %v4023 = vunpack.c.l.b16 %v3644
  %v4024 = vunpack.c.h.b16 %v3644
  %v4025 = vunpack.c.l.b16 %v3645
  %v4026 = vunpack.c.h.b16 %v3645
  %v4027 = vunpack.c.l.b16 %v3646
  %v4028 = vunpack.c.h.b16 %v3646
  %v4029 = vunpack.c.l.b16 %v3647
  %v4030 = vunpack.c.h.b16 %v3647
  %v4031 = vunpack.c.l.b16 %v3648
  %v4032 = vunpack.c.h.b16 %v3648
  %v4033 = vpack.c.b16 %v3777, %v3777
  %v4034 = vpack.c.b16 %v3778, %v3778
  %v4035 = vpack.c.b16 %v3779, %v3779
  %v4036 = vpack.c.b16 %v3780, %v3780
  %v4037 = vpack.c.b16 %v3781, %v3781
  %v4038 = vpack.c.b16 %v3782, %v3782
  %v4039 = vpack.c.b16 %v3783, %v3783
  %v4040 = vpack.c.b16 %v3784, %v3784
  %v4041 = vpack.c.b16 %v3785, %v3785
  %v4042 = vpack.c.b16 %v3786, %v3786
  %v4043 = vpack.c.b16 %v3787, %v3787
  %v4044 = vpack.c.b16 %v3788, %v3788
  %v4045 = vpack.c.b16 %v3789, %v3789
  %v4046 = vpack.c.b16 %v3790, %v3790
  %v4047 = vpack.c.b16 %v3791, %v3791
  %v4048 = vpack.c.b16 %v3792, %v3792
  %v4049 = vpack.c.b16 %v3793, %v3793
  %v4050 = vpack.c.b16 %v3794, %v3794
  %v4051 = vpack.c.b16 %v3795, %v3795
  %v4052 = vpack.c.b16 %v3796, %v3796
  %v4053 = vpack.c.b16 %v3797, %v3797
  %v4054 = vpack.c.b16 %v3798, %v3798
  %v4055 = vpack.c.b16 %v3799, %v3799
  %v4056 = vpack.c.b16 %v3800, %v3800
  %v4057 = vpack.c.b16 %v3801, %v3801
  %v4058 = vpack.c.b16 %v3802, %v3802
  %v4059 = vpack.c.b16 %v3803, %v3803
  %v4060 = vpack.c.b16 %v3804, %v3804
  %v4061 = vpack.c.b16 %v3805, %v3805
  %v4062 = vpack.c.b16 %v3806, %v3806
  %v4063 = vpack.c.b16 %v3807, %v3807
  %v4064 = vpack.c.b16 %v3808, %v3808
  %v4065 = vpack.c.b16 %v3809, %v3809
  %v4066 = vpack.c.b16 %v3810, %v3810
  %v4067 = vpack.c.b16 %v3811, %v3811
  %v4068 = vpack.c.b16 %v3812, %v3812
  %v4069 = vpack.c.b16 %v3813, %v3813
  %v4070 = vpack.c.b16 %v3814, %v3814
  %v4071 = vpack.c.b16 %v3815, %v3815
  %v4072 = vpack.c.b16 %v3816, %v3816
  %v4073 = vpack.c.b16 %v3817, %v3817
  %v4074 = vpack.c.b16 %v3818, %v3818
  %v4075 = vpack.c.b16 %v3819, %v3819
  %v4076 = vpack.c.b16 %v3820, %v3820
  %v4077 = vpack.c.b16 %v3821, %v3821
  %v4078 = vpack.c.b16 %v3822, %v3822
  %v4079 = vpack.c.b16 %v3823, %v3823
  %v4080 = vpack.c.b16 %v3824, %v3824
  %v4081 = vpack.c.b16 %v3825, %v3825
  %v4082 = vpack.c.b16 %v3826, %v3826
  %v4083 = vpack.c.b16 %v3827, %v3827
  %v4084 = vpack.c.b16 %v3828, %v3828
  %v4085 = vpack.c.b16 %v3829, %v3829
  %v4086 = vpack.c.b16 %v3830, %v3830
  %v4087 = vpack.c.b16 %v3831, %v3831
  %v4088 = vpack.c.b16 %v3832, %v3832
  %v4089 = vpack.c.b16 %v3833, %v3833
  %v4090 = vpack.c.b16 %v3834, %v3834
  %v4091 = vpack.c.b16 %v3835, %v3835
  %v4092 = vpack.c.b16 %v3836, %v3836
  %v4093 = vpack.c.b16 %v3837, %v3837
  %v4094 = vpack.c.b16 %v3838, %v3838
  %v4095 = vpack.c.b16 %v3839, %v3839
  %v4096 = vpack.c.b16 %v3840, %v3840
  %v4097 = vpack.c.b16 %v3841, %v3841
  %v4098 = vpack.c.b16 %v3842, %v3842
  %v4099 = vpack.c.b16 %v3843, %v3843
  %v4100 = vpack.c.b16 %v3844, %v3844
  %v4101 = vpack.c.b16 %v3845, %v3845
  %v4102 = vpack.c.b16 %v3846, %v3846
  %v4103 = vpack.c.b16 %v3847, %v3847
  %v4104 = vpack.c.b16 %v3848, %v3848
  %v4105 = vpack.c.b16 %v3849, %v3849
  %v4106 = vpack.c.b16 %v3850, %v3850
  %v4107 = vpack.c.b16 %v3851, %v3851
  %v4108 = vpack.c.b16 %v3852, %v3852
  %v4109 = vpack.c.b16 %v3853, %v3853
  %v4110 = vpack.c.b16 %v3854, %v3854
  %v4111 = vpack.c.b16 %v3855, %v3855
  %v4112 = vpack.c.b16 %v3856, %v3856
  %v4113 = vpack.c.b16 %v3857, %v3857
  %v4114 = vpack.c.b16 %v3858, %v3858
  %v4115 = vpack.c.b16 %v3859, %v3859
  %v4116 = vpack.c.b16 %v3860, %v3860
  %v4117 = vpack.c.b16 %v3861, %v3861
  %v4118 = vpack.c.b16 %v3862, %v3862
  %v4119 = vpack.c.b16 %v3863, %v3863
  %v4120 = vpack.c.b16 %v3864, %v3864
  %v4121 = vpack.c.b16 %v3865, %v3865
  %v4122 = vpack.c.b16 %v3866, %v3866
  %v4123 = vpack.c.b16 %v3867, %v3867
  %v4124 = vpack.c.b16 %v3868, %v3868
  %v4125 = vpack.c.b16 %v3869, %v3869
  %v4126 = vpack.c.b16 %v3870, %v3870
  %v4127 = vpack.c.b16 %v3871, %v3871
  %v4128 = vpack.c.b16 %v3872, %v3872
  %v4129 = vpack.c.b16 %v3873, %v3873
  %v4130 = vpack.c.b16 %v3874, %v3874
  %v4131 = vpack.c.b16 %v3875, %v3875
  %v4132 = vpack.c.b16 %v3876, %v3876
  %v4133 = vpack.c.b16 %v3877, %v3877
  %v4134 = vpack.c.b16 %v3878, %v3878
  %v4135 = vpack.c.b16 %v3879, %v3879
  %v4136 = vpack.c.b16 %v3880, %v3880
  %v4137 = vpack.c.b16 %v3881, %v3881
  %v4138 = vpack.c.b16 %v3882, %v3882
  %v4139 = vpack.c.b16 %v3883, %v3883
  %v4140 = vpack.c.b16 %v3884, %v3884
  %v4141 = vpack.c.b16 %v3885, %v3885
  %v4142 = vpack.c.b16 %v3886, %v3886
  %v4143 = vpack.c.b16 %v3887, %v3887
  %v4144 = vpack.c.b16 %v3888, %v3888
  %v4145 = vpack.c.b16 %v3889, %v3889
  %v4146 = vpack.c.b16 %v3890, %v3890
  %v4147 = vpack.c.b16 %v3891, %v3891
  %v4148 = vpack.c.b16 %v3892, %v3892
  %v4149 = vpack.c.b16 %v3893, %v3893
  %v4150 = vpack.c.b16 %v3894, %v3894
  %v4151 = vpack.c.b16 %v3895, %v3895
  %v4152 = vpack.c.b16 %v3896, %v3896
  %v4153 = vpack.c.b16 %v3897, %v3897
  %v4154 = vpack.c.b16 %v3898, %v3898
  %v4155 = vpack.c.b16 %v3899, %v3899
  %v4156 = vpack.c.b16 %v3900, %v3900
  %v4157 = vpack.c.b16 %v3901, %v3901
  %v4158 = vpack.c.b16 %v3902, %v3902
  %v4159 = vpack.c.b16 %v3903, %v3903
  %v4160 = vpack.c.b16 %v3904, %v3904
  %v4161 = vpack.c.b16 %v3905, %v3905
  %v4162 = vpack.c.b16 %v3906, %v3906
  %v4163 = vpack.c.b16 %v3907, %v3907
  %v4164 = vpack.c.b16 %v3908, %v3908
  %v4165 = vpack.c.b16 %v3909, %v3909
  %v4166 = vpack.c.b16 %v3910, %v3910
  %v4167 = vpack.c.b16 %v3911, %v3911
  %v4168 = vpack.c.b16 %v3912, %v3912
  %v4169 = vpack.c.b16 %v3913, %v3913
  %v4170 = vpack.c.b16 %v3914, %v3914
  %v4171 = vpack.c.b16 %v3915, %v3915
  %v4172 = vpack.c.b16 %v3916, %v3916
  %v4173 = vpack.c.b16 %v3917, %v3917
  %v4174 = vpack.c.b16 %v3918, %v3918
  %v4175 = vpack.c.b16 %v3919, %v3919
  %v4176 = vpack.c.b16 %v3920, %v3920
  %v4177 = vpack.c.b16 %v3921, %v3921
  %v4178 = vpack.c.b16 %v3922, %v3922
  %v4179 = vpack.c.b16 %v3923, %v3923
  %v4180 = vpack.c.b16 %v3924, %v3924
  %v4181 = vpack.c.b16 %v3925, %v3925
  %v4182 = vpack.c.b16 %v3926, %v3926
  %v4183 = vpack.c.b16 %v3927, %v3927
  %v4184 = vpack.c.b16 %v3928, %v3928
  %v4185 = vpack.c.b16 %v3929, %v3929
  %v4186 = vpack.c.b16 %v3930, %v3930
  %v4187 = vpack.c.b16 %v3931, %v3931
  %v4188 = vpack.c.b16 %v3932, %v3932
  %v4189 = vpack.c.b16 %v3933, %v3933
  %v4190 = vpack.c.b16 %v3934, %v3934
  %v4191 = vpack.c.b16 %v3935, %v3935
  %v4192 = vpack.c.b16 %v3936, %v3936
  %v4193 = vpack.c.b16 %v3937, %v3937
  %v4194 = vpack.c.b16 %v3938, %v3938
  %v4195 = vpack.c.b16 %v3939, %v3939
  %v4196 = vpack.c.b16 %v3940, %v3940
  %v4197 = vpack.c.b16 %v3941, %v3941
  %v4198 = vpack.c.b16 %v3942, %v3942
  %v4199 = vpack.c.b16 %v3943, %v3943
  %v4200 = vpack.c.b16 %v3944, %v3944
  %v4201 = vpack.c.b16 %v3945, %v3945
  %v4202 = vpack.c.b16 %v3946, %v3946
  %v4203 = vpack.c.b16 %v3947, %v3947
  %v4204 = vpack.c.b16 %v3948, %v3948
  %v4205 = vpack.c.b16 %v3949, %v3949
  %v4206 = vpack.c.b16 %v3950, %v3950
  %v4207 = vpack.c.b16 %v3951, %v3951
  %v4208 = vpack.c.b16 %v3952, %v3952
  %v4209 = vpack.c.b16 %v3953, %v3953
  %v4210 = vpack.c.b16 %v3954, %v3954
  %v4211 = vpack.c.b16 %v3955, %v3955
  %v4212 = vpack.c.b16 %v3956, %v3956
  %v4213 = vpack.c.b16 %v3957, %v3957
  %v4214 = vpack.c.b16 %v3958, %v3958
  %v4215 = vpack.c.b16 %v3959, %v3959
  %v4216 = vpack.c.b16 %v3960, %v3960
  %v4217 = vpack.c.b16 %v3961, %v3961
  %v4218 = vpack.c.b16 %v3962, %v3962
  %v4219 = vpack.c.b16 %v3963, %v3963
  %v4220 = vpack.c.b16 %v3964, %v3964
  %v4221 = vpack.c.b16 %v3965, %v3965
  %v4222 = vpack.c.b16 %v3966, %v3966
  %v4223 = vpack.c.b16 %v3967, %v3967
  %v4224 = vpack.c.b16 %v3968, %v3968
  %v4225 = vpack.c.b16 %v3969, %v3969
  %v4226 = vpack.c.b16 %v3970, %v3970
  %v4227 = vpack.c.b16 %v3971, %v3971
  %v4228 = vpack.c.b16 %v3972, %v3972
  %v4229 = vpack.c.b16 %v3973, %v3973
  %v4230 = vpack.c.b16 %v3974, %v3974
  %v4231 = vpack.c.b16 %v3975, %v3975
  %v4232 = vpack.c.b16 %v3976, %v3976
  %v4233 = vpack.c.b16 %v3977, %v3977
  %v4234 = vpack.c.b16 %v3978, %v3978
  %v4235 = vpack.c.b16 %v3979, %v3979
  %v4236 = vpack.c.b16 %v3980, %v3980
  %v4237 = vpack.c.b16 %v3981, %v3981
  %v4238 = vpack.c.b16 %v3982, %v3982
  %v4239 = vpack.c.b16 %v3983, %v3983
  %v4240 = vpack.c.b16 %v3984, %v3984
  %v4241 = vpack.c.b16 %v3985, %v3985
  %v4242 = vpack.c.b16 %v3986, %v3986
  %v4243 = vpack.c.b16 %v3987, %v3987
  %v4244 = vpack.c.b16 %v3988, %v3988
  %v4245 = vpack.c.b16 %v3989, %v3989
  %v4246 = vpack.c.b16 %v3990, %v3990
  %v4247 = vpack.c.b16 %v3991, %v3991
  %v4248 = vpack.c.b16 %v3992, %v3992
  %v4249 = vpack.c.b16 %v3993, %v3993
  %v4250 = vpack.c.b16 %v3994, %v3994
  %v4251 = vpack.c.b16 %v3995, %v3995
  %v4252 = vpack.c.b16 %v3996, %v3996
  %v4253 = vpack.c.b16 %v3997, %v3997
  %v4254 = vpack.c.b16 %v3998, %v3998
  %v4255 = vpack.c.b16 %v3999, %v3999
  %v4256 = vpack.c.b16 %v4000, %v4000
  %v4257 = vpack.c.b16 %v4001, %v4001
  %v4258 = vpack.c.b16 %v4002, %v4002
  %v4259 = vpack.c.b16 %v4003, %v4003
  %v4260 = vpack.c.b16 %v4004, %v4004
  %v4261 = vpack.c.b16 %v4005, %v4005
  %v4262 = vpack.c.b16 %v4006, %v4006
  %v4263 = vpack.c.b16 %v4007, %v4007
  %v4264 = vpack.c.b16 %v4008, %v4008
  %v4265 = vpack.c.b16 %v4009, %v4009
  %v4266 = vpack.c.b16 %v4010, %v4010
  %v4267 = vpack.c.b16 %v4011, %v4011
  %v4268 = vpack.c.b16 %v4012, %v4012
  %v4269 = vpack.c.b16 %v4013, %v4013
  %v4270 = vpack.c.b16 %v4014, %v4014
  %v4271 = vpack.c.b16 %v4015, %v4015
  %v4272 = vpack.c.b16 %v4016, %v4016
  %v4273 = vpack.c.b16 %v4017, %v4017
  %v4274 = vpack.c.b16 %v4018, %v4018
  %v4275 = vpack.c.b16 %v4019, %v4019
  %v4276 = vpack.c.b16 %v4020, %v4020
  %v4277 = vpack.c.b16 %v4021, %v4021
  %v4278 = vpack.c.b16 %v4022, %v4022
  %v4279 = vpack.c.b16 %v4023, %v4023
  %v4280 = vpack.c.b16 %v4024, %v4024
  %v4281 = vpack.c.b16 %v4025, %v4025
  %v4282 = vpack.c.b16 %v4026, %v4026
  %v4283 = vpack.c.b16 %v4027, %v4027
  %v4284 = vpack.c.b16 %v4028, %v4028
  %v4285 = vpack.c.b16 %v4029, %v4029
  %v4286 = vpack.c.b16 %v4030, %v4030
  %v4287 = vpack.c.b16 %v4031, %v4031
  %v4288 = vpack.c.b16 %v4032, %v4032
  %vm4545 = vcmask 519168
  %4546 = vst.msk [vmem:[%s4] sm:$0xf] %vm4545, %v4033
  %4547 = vst.msk [vmem:[%s4 + $0x4] sm:$0xf] %vm4545, %v4034
  %4548 = vst.msk [vmem:[%s4 + $0x8] sm:$0xf] %vm4545, %v4035
  %4549 = vst.msk [vmem:[%s4 + $0xc] sm:$0xf] %vm4545, %v4036
  %4550 = vst.msk [vmem:[%s4 + $0x10] sm:$0xf] %vm4545, %v4037
  %4551 = vst.msk [vmem:[%s4 + $0x14] sm:$0xf] %vm4545, %v4038
  %4552 = vst.msk [vmem:[%s4 + $0x18] sm:$0xf] %vm4545, %v4039
  %4553 = vst.msk [vmem:[%s4 + $0x1c] sm:$0xf] %vm4545, %v4040
  %4554 = vst.msk [vmem:[%s4 + $0x20] sm:$0xf] %vm4545, %v4041
  %4555 = vst.msk [vmem:[%s4 + $0x24] sm:$0xf] %vm4545, %v4042
  %4556 = vst.msk [vmem:[%s4 + $0x28] sm:$0xf] %vm4545, %v4043
  %4557 = vst.msk [vmem:[%s4 + $0x2c] sm:$0xf] %vm4545, %v4044
  %4558 = vst.msk [vmem:[%s4 + $0x30] sm:$0xf] %vm4545, %v4045
  %4559 = vst.msk [vmem:[%s4 + $0x34] sm:$0xf] %vm4545, %v4046
  %4560 = vst.msk [vmem:[%s4 + $0x38] sm:$0xf] %vm4545, %v4047
  %4561 = vst.msk [vmem:[%s4 + $0x3c] sm:$0xf] %vm4545, %v4048
  %4562 = vst.msk [vmem:[%s4 + $0x40] sm:$0xf] %vm4545, %v4049
  %4563 = vst.msk [vmem:[%s4 + $0x44] sm:$0xf] %vm4545, %v4050
  %4564 = vst.msk [vmem:[%s4 + $0x48] sm:$0xf] %vm4545, %v4051
  %4565 = vst.msk [vmem:[%s4 + $0x4c] sm:$0xf] %vm4545, %v4052
  %4566 = vst.msk [vmem:[%s4 + $0x50] sm:$0xf] %vm4545, %v4053
  %4567 = vst.msk [vmem:[%s4 + $0x54] sm:$0xf] %vm4545, %v4054
  %4568 = vst.msk [vmem:[%s4 + $0x58] sm:$0xf] %vm4545, %v4055
  %4569 = vst.msk [vmem:[%s4 + $0x5c] sm:$0xf] %vm4545, %v4056
  %4570 = vst.msk [vmem:[%s4 + $0x60] sm:$0xf] %vm4545, %v4057
  %4571 = vst.msk [vmem:[%s4 + $0x64] sm:$0xf] %vm4545, %v4058
  %4572 = vst.msk [vmem:[%s4 + $0x68] sm:$0xf] %vm4545, %v4059
  %4573 = vst.msk [vmem:[%s4 + $0x6c] sm:$0xf] %vm4545, %v4060
  %4574 = vst.msk [vmem:[%s4 + $0x70] sm:$0xf] %vm4545, %v4061
  %4575 = vst.msk [vmem:[%s4 + $0x74] sm:$0xf] %vm4545, %v4062
  %4576 = vst.msk [vmem:[%s4 + $0x78] sm:$0xf] %vm4545, %v4063
  %4577 = vst.msk [vmem:[%s4 + $0x7c] sm:$0xf] %vm4545, %v4064
  %4578 = vst.msk [vmem:[%s4 + $0x80] sm:$0xf] %vm4545, %v4065
  %4579 = vst.msk [vmem:[%s4 + $0x84] sm:$0xf] %vm4545, %v4066
  %4580 = vst.msk [vmem:[%s4 + $0x88] sm:$0xf] %vm4545, %v4067
  %4581 = vst.msk [vmem:[%s4 + $0x8c] sm:$0xf] %vm4545, %v4068
  %4582 = vst.msk [vmem:[%s4 + $0x90] sm:$0xf] %vm4545, %v4069
  %4583 = vst.msk [vmem:[%s4 + $0x94] sm:$0xf] %vm4545, %v4070
  %4584 = vst.msk [vmem:[%s4 + $0x98] sm:$0xf] %vm4545, %v4071
  %4585 = vst.msk [vmem:[%s4 + $0x9c] sm:$0xf] %vm4545, %v4072
  %4586 = vst.msk [vmem:[%s4 + $0xa0] sm:$0xf] %vm4545, %v4073
  %4587 = vst.msk [vmem:[%s4 + $0xa4] sm:$0xf] %vm4545, %v4074
  %4588 = vst.msk [vmem:[%s4 + $0xa8] sm:$0xf] %vm4545, %v4075
  %4589 = vst.msk [vmem:[%s4 + $0xac] sm:$0xf] %vm4545, %v4076
  %4590 = vst.msk [vmem:[%s4 + $0xb0] sm:$0xf] %vm4545, %v4077
  %4591 = vst.msk [vmem:[%s4 + $0xb4] sm:$0xf] %vm4545, %v4078
  %4592 = vst.msk [vmem:[%s4 + $0xb8] sm:$0xf] %vm4545, %v4079
  %4593 = vst.msk [vmem:[%s4 + $0xbc] sm:$0xf] %vm4545, %v4080
  %4594 = vst.msk [vmem:[%s4 + $0xc0] sm:$0xf] %vm4545, %v4081
  %4595 = vst.msk [vmem:[%s4 + $0xc4] sm:$0xf] %vm4545, %v4082
  %4596 = vst.msk [vmem:[%s4 + $0xc8] sm:$0xf] %vm4545, %v4083
  %4597 = vst.msk [vmem:[%s4 + $0xcc] sm:$0xf] %vm4545, %v4084
  %4598 = vst.msk [vmem:[%s4 + $0xd0] sm:$0xf] %vm4545, %v4085
  %4599 = vst.msk [vmem:[%s4 + $0xd4] sm:$0xf] %vm4545, %v4086
  %4600 = vst.msk [vmem:[%s4 + $0xd8] sm:$0xf] %vm4545, %v4087
  %4601 = vst.msk [vmem:[%s4 + $0xdc] sm:$0xf] %vm4545, %v4088
  %4602 = vst.msk [vmem:[%s4 + $0xe0] sm:$0xf] %vm4545, %v4089
  %4603 = vst.msk [vmem:[%s4 + $0xe4] sm:$0xf] %vm4545, %v4090
  %4604 = vst.msk [vmem:[%s4 + $0xe8] sm:$0xf] %vm4545, %v4091
  %4605 = vst.msk [vmem:[%s4 + $0xec] sm:$0xf] %vm4545, %v4092
  %4606 = vst.msk [vmem:[%s4 + $0xf0] sm:$0xf] %vm4545, %v4093
  %4607 = vst.msk [vmem:[%s4 + $0xf4] sm:$0xf] %vm4545, %v4094
  %4608 = vst.msk [vmem:[%s4 + $0xf8] sm:$0xf] %vm4545, %v4095
  %4609 = vst.msk [vmem:[%s4 + $0xfc] sm:$0xf] %vm4545, %v4096
  %4610 = vst.msk [vmem:[%s4 + $0x100] sm:$0xf] %vm4545, %v4097
  %4611 = vst.msk [vmem:[%s4 + $0x104] sm:$0xf] %vm4545, %v4098
  %4612 = vst.msk [vmem:[%s4 + $0x108] sm:$0xf] %vm4545, %v4099
  %4613 = vst.msk [vmem:[%s4 + $0x10c] sm:$0xf] %vm4545, %v4100
  %4614 = vst.msk [vmem:[%s4 + $0x110] sm:$0xf] %vm4545, %v4101
  %4615 = vst.msk [vmem:[%s4 + $0x114] sm:$0xf] %vm4545, %v4102
  %4616 = vst.msk [vmem:[%s4 + $0x118] sm:$0xf] %vm4545, %v4103
  %4617 = vst.msk [vmem:[%s4 + $0x11c] sm:$0xf] %vm4545, %v4104
  %4618 = vst.msk [vmem:[%s4 + $0x120] sm:$0xf] %vm4545, %v4105
  %4619 = vst.msk [vmem:[%s4 + $0x124] sm:$0xf] %vm4545, %v4106
  %4620 = vst.msk [vmem:[%s4 + $0x128] sm:$0xf] %vm4545, %v4107
  %4621 = vst.msk [vmem:[%s4 + $0x12c] sm:$0xf] %vm4545, %v4108
  %4622 = vst.msk [vmem:[%s4 + $0x130] sm:$0xf] %vm4545, %v4109
  %4623 = vst.msk [vmem:[%s4 + $0x134] sm:$0xf] %vm4545, %v4110
  %4624 = vst.msk [vmem:[%s4 + $0x138] sm:$0xf] %vm4545, %v4111
  %4625 = vst.msk [vmem:[%s4 + $0x13c] sm:$0xf] %vm4545, %v4112
  %4626 = vst.msk [vmem:[%s4 + $0x140] sm:$0xf] %vm4545, %v4113
  %4627 = vst.msk [vmem:[%s4 + $0x144] sm:$0xf] %vm4545, %v4114
  %4628 = vst.msk [vmem:[%s4 + $0x148] sm:$0xf] %vm4545, %v4115
  %4629 = vst.msk [vmem:[%s4 + $0x14c] sm:$0xf] %vm4545, %v4116
  %4630 = vst.msk [vmem:[%s4 + $0x150] sm:$0xf] %vm4545, %v4117
  %4631 = vst.msk [vmem:[%s4 + $0x154] sm:$0xf] %vm4545, %v4118
  %4632 = vst.msk [vmem:[%s4 + $0x158] sm:$0xf] %vm4545, %v4119
  %4633 = vst.msk [vmem:[%s4 + $0x15c] sm:$0xf] %vm4545, %v4120
  %4634 = vst.msk [vmem:[%s4 + $0x160] sm:$0xf] %vm4545, %v4121
  %4635 = vst.msk [vmem:[%s4 + $0x164] sm:$0xf] %vm4545, %v4122
  %4636 = vst.msk [vmem:[%s4 + $0x168] sm:$0xf] %vm4545, %v4123
  %4637 = vst.msk [vmem:[%s4 + $0x16c] sm:$0xf] %vm4545, %v4124
  %4638 = vst.msk [vmem:[%s4 + $0x170] sm:$0xf] %vm4545, %v4125
  %4639 = vst.msk [vmem:[%s4 + $0x174] sm:$0xf] %vm4545, %v4126
  %4640 = vst.msk [vmem:[%s4 + $0x178] sm:$0xf] %vm4545, %v4127
  %4641 = vst.msk [vmem:[%s4 + $0x17c] sm:$0xf] %vm4545, %v4128
  %4642 = vst.msk [vmem:[%s4 + $0x180] sm:$0xf] %vm4545, %v4129
  %4643 = vst.msk [vmem:[%s4 + $0x184] sm:$0xf] %vm4545, %v4130
  %4644 = vst.msk [vmem:[%s4 + $0x188] sm:$0xf] %vm4545, %v4131
  %4645 = vst.msk [vmem:[%s4 + $0x18c] sm:$0xf] %vm4545, %v4132
  %4646 = vst.msk [vmem:[%s4 + $0x190] sm:$0xf] %vm4545, %v4133
  %4647 = vst.msk [vmem:[%s4 + $0x194] sm:$0xf] %vm4545, %v4134
  %4648 = vst.msk [vmem:[%s4 + $0x198] sm:$0xf] %vm4545, %v4135
  %4649 = vst.msk [vmem:[%s4 + $0x19c] sm:$0xf] %vm4545, %v4136
  %4650 = vst.msk [vmem:[%s4 + $0x1a0] sm:$0xf] %vm4545, %v4137
  %4651 = vst.msk [vmem:[%s4 + $0x1a4] sm:$0xf] %vm4545, %v4138
  %4652 = vst.msk [vmem:[%s4 + $0x1a8] sm:$0xf] %vm4545, %v4139
  %4653 = vst.msk [vmem:[%s4 + $0x1ac] sm:$0xf] %vm4545, %v4140
  %4654 = vst.msk [vmem:[%s4 + $0x1b0] sm:$0xf] %vm4545, %v4141
  %4655 = vst.msk [vmem:[%s4 + $0x1b4] sm:$0xf] %vm4545, %v4142
  %4656 = vst.msk [vmem:[%s4 + $0x1b8] sm:$0xf] %vm4545, %v4143
  %4657 = vst.msk [vmem:[%s4 + $0x1bc] sm:$0xf] %vm4545, %v4144
  %4658 = vst.msk [vmem:[%s4 + $0x1c0] sm:$0xf] %vm4545, %v4145
  %4659 = vst.msk [vmem:[%s4 + $0x1c4] sm:$0xf] %vm4545, %v4146
  %4660 = vst.msk [vmem:[%s4 + $0x1c8] sm:$0xf] %vm4545, %v4147
  %4661 = vst.msk [vmem:[%s4 + $0x1cc] sm:$0xf] %vm4545, %v4148
  %4662 = vst.msk [vmem:[%s4 + $0x1d0] sm:$0xf] %vm4545, %v4149
  %4663 = vst.msk [vmem:[%s4 + $0x1d4] sm:$0xf] %vm4545, %v4150
  %4664 = vst.msk [vmem:[%s4 + $0x1d8] sm:$0xf] %vm4545, %v4151
  %4665 = vst.msk [vmem:[%s4 + $0x1dc] sm:$0xf] %vm4545, %v4152
  %4666 = vst.msk [vmem:[%s4 + $0x1e0] sm:$0xf] %vm4545, %v4153
  %4667 = vst.msk [vmem:[%s4 + $0x1e4] sm:$0xf] %vm4545, %v4154
  %4668 = vst.msk [vmem:[%s4 + $0x1e8] sm:$0xf] %vm4545, %v4155
  %4669 = vst.msk [vmem:[%s4 + $0x1ec] sm:$0xf] %vm4545, %v4156
  %4670 = vst.msk [vmem:[%s4 + $0x1f0] sm:$0xf] %vm4545, %v4157
  %4671 = vst.msk [vmem:[%s4 + $0x1f4] sm:$0xf] %vm4545, %v4158
  %4672 = vst.msk [vmem:[%s4 + $0x1f8] sm:$0xf] %vm4545, %v4159
  %4673 = vst.msk [vmem:[%s4 + $0x1fc] sm:$0xf] %vm4545, %v4160
  %4674 = vst.msk [vmem:[%s4 + $0x200] sm:$0xf] %vm4545, %v4161
  %4675 = vst.msk [vmem:[%s4 + $0x204] sm:$0xf] %vm4545, %v4162
  %4676 = vst.msk [vmem:[%s4 + $0x208] sm:$0xf] %vm4545, %v4163
  %4677 = vst.msk [vmem:[%s4 + $0x20c] sm:$0xf] %vm4545, %v4164
  %4678 = vst.msk [vmem:[%s4 + $0x210] sm:$0xf] %vm4545, %v4165
  %4679 = vst.msk [vmem:[%s4 + $0x214] sm:$0xf] %vm4545, %v4166
  %4680 = vst.msk [vmem:[%s4 + $0x218] sm:$0xf] %vm4545, %v4167
  %4681 = vst.msk [vmem:[%s4 + $0x21c] sm:$0xf] %vm4545, %v4168
  %4682 = vst.msk [vmem:[%s4 + $0x220] sm:$0xf] %vm4545, %v4169
  %4683 = vst.msk [vmem:[%s4 + $0x224] sm:$0xf] %vm4545, %v4170
  %4684 = vst.msk [vmem:[%s4 + $0x228] sm:$0xf] %vm4545, %v4171
  %4685 = vst.msk [vmem:[%s4 + $0x22c] sm:$0xf] %vm4545, %v4172
  %4686 = vst.msk [vmem:[%s4 + $0x230] sm:$0xf] %vm4545, %v4173
  %4687 = vst.msk [vmem:[%s4 + $0x234] sm:$0xf] %vm4545, %v4174
  %4688 = vst.msk [vmem:[%s4 + $0x238] sm:$0xf] %vm4545, %v4175
  %4689 = vst.msk [vmem:[%s4 + $0x23c] sm:$0xf] %vm4545, %v4176
  %4690 = vst.msk [vmem:[%s4 + $0x240] sm:$0xf] %vm4545, %v4177
  %4691 = vst.msk [vmem:[%s4 + $0x244] sm:$0xf] %vm4545, %v4178
  %4692 = vst.msk [vmem:[%s4 + $0x248] sm:$0xf] %vm4545, %v4179
  %4693 = vst.msk [vmem:[%s4 + $0x24c] sm:$0xf] %vm4545, %v4180
  %4694 = vst.msk [vmem:[%s4 + $0x250] sm:$0xf] %vm4545, %v4181
  %4695 = vst.msk [vmem:[%s4 + $0x254] sm:$0xf] %vm4545, %v4182
  %4696 = vst.msk [vmem:[%s4 + $0x258] sm:$0xf] %vm4545, %v4183
  %4697 = vst.msk [vmem:[%s4 + $0x25c] sm:$0xf] %vm4545, %v4184
  %4698 = vst.msk [vmem:[%s4 + $0x260] sm:$0xf] %vm4545, %v4185
  %4699 = vst.msk [vmem:[%s4 + $0x264] sm:$0xf] %vm4545, %v4186
  %4700 = vst.msk [vmem:[%s4 + $0x268] sm:$0xf] %vm4545, %v4187
  %4701 = vst.msk [vmem:[%s4 + $0x26c] sm:$0xf] %vm4545, %v4188
  %4702 = vst.msk [vmem:[%s4 + $0x270] sm:$0xf] %vm4545, %v4189
  %4703 = vst.msk [vmem:[%s4 + $0x274] sm:$0xf] %vm4545, %v4190
  %4704 = vst.msk [vmem:[%s4 + $0x278] sm:$0xf] %vm4545, %v4191
  %4705 = vst.msk [vmem:[%s4 + $0x27c] sm:$0xf] %vm4545, %v4192
  %4706 = vst.msk [vmem:[%s4 + $0x280] sm:$0xf] %vm4545, %v4193
  %4707 = vst.msk [vmem:[%s4 + $0x284] sm:$0xf] %vm4545, %v4194
  %4708 = vst.msk [vmem:[%s4 + $0x288] sm:$0xf] %vm4545, %v4195
  %4709 = vst.msk [vmem:[%s4 + $0x28c] sm:$0xf] %vm4545, %v4196
  %4710 = vst.msk [vmem:[%s4 + $0x290] sm:$0xf] %vm4545, %v4197
  %4711 = vst.msk [vmem:[%s4 + $0x294] sm:$0xf] %vm4545, %v4198
  %4712 = vst.msk [vmem:[%s4 + $0x298] sm:$0xf] %vm4545, %v4199
  %4713 = vst.msk [vmem:[%s4 + $0x29c] sm:$0xf] %vm4545, %v4200
  %4714 = vst.msk [vmem:[%s4 + $0x2a0] sm:$0xf] %vm4545, %v4201
  %4715 = vst.msk [vmem:[%s4 + $0x2a4] sm:$0xf] %vm4545, %v4202
  %4716 = vst.msk [vmem:[%s4 + $0x2a8] sm:$0xf] %vm4545, %v4203
  %4717 = vst.msk [vmem:[%s4 + $0x2ac] sm:$0xf] %vm4545, %v4204
  %4718 = vst.msk [vmem:[%s4 + $0x2b0] sm:$0xf] %vm4545, %v4205
  %4719 = vst.msk [vmem:[%s4 + $0x2b4] sm:$0xf] %vm4545, %v4206
  %4720 = vst.msk [vmem:[%s4 + $0x2b8] sm:$0xf] %vm4545, %v4207
  %4721 = vst.msk [vmem:[%s4 + $0x2bc] sm:$0xf] %vm4545, %v4208
  %4722 = vst.msk [vmem:[%s4 + $0x2c0] sm:$0xf] %vm4545, %v4209
  %4723 = vst.msk [vmem:[%s4 + $0x2c4] sm:$0xf] %vm4545, %v4210
  %4724 = vst.msk [vmem:[%s4 + $0x2c8] sm:$0xf] %vm4545, %v4211
  %4725 = vst.msk [vmem:[%s4 + $0x2cc] sm:$0xf] %vm4545, %v4212
  %4726 = vst.msk [vmem:[%s4 + $0x2d0] sm:$0xf] %vm4545, %v4213
  %4727 = vst.msk [vmem:[%s4 + $0x2d4] sm:$0xf] %vm4545, %v4214
  %4728 = vst.msk [vmem:[%s4 + $0x2d8] sm:$0xf] %vm4545, %v4215
  %4729 = vst.msk [vmem:[%s4 + $0x2dc] sm:$0xf] %vm4545, %v4216
  %4730 = vst.msk [vmem:[%s4 + $0x2e0] sm:$0xf] %vm4545, %v4217
  %4731 = vst.msk [vmem:[%s4 + $0x2e4] sm:$0xf] %vm4545, %v4218
  %4732 = vst.msk [vmem:[%s4 + $0x2e8] sm:$0xf] %vm4545, %v4219
  %4733 = vst.msk [vmem:[%s4 + $0x2ec] sm:$0xf] %vm4545, %v4220
  %4734 = vst.msk [vmem:[%s4 + $0x2f0] sm:$0xf] %vm4545, %v4221
  %4735 = vst.msk [vmem:[%s4 + $0x2f4] sm:$0xf] %vm4545, %v4222
  %4736 = vst.msk [vmem:[%s4 + $0x2f8] sm:$0xf] %vm4545, %v4223
  %4737 = vst.msk [vmem:[%s4 + $0x2fc] sm:$0xf] %vm4545, %v4224
  %4738 = vst.msk [vmem:[%s4 + $0x300] sm:$0xf] %vm4545, %v4225
  %4739 = vst.msk [vmem:[%s4 + $0x304] sm:$0xf] %vm4545, %v4226
  %4740 = vst.msk [vmem:[%s4 + $0x308] sm:$0xf] %vm4545, %v4227
  %4741 = vst.msk [vmem:[%s4 + $0x30c] sm:$0xf] %vm4545, %v4228
  %4742 = vst.msk [vmem:[%s4 + $0x310] sm:$0xf] %vm4545, %v4229
  %4743 = vst.msk [vmem:[%s4 + $0x314] sm:$0xf] %vm4545, %v4230
  %4744 = vst.msk [vmem:[%s4 + $0x318] sm:$0xf] %vm4545, %v4231
  %4745 = vst.msk [vmem:[%s4 + $0x31c] sm:$0xf] %vm4545, %v4232
  %4746 = vst.msk [vmem:[%s4 + $0x320] sm:$0xf] %vm4545, %v4233
  %4747 = vst.msk [vmem:[%s4 + $0x324] sm:$0xf] %vm4545, %v4234
  %4748 = vst.msk [vmem:[%s4 + $0x328] sm:$0xf] %vm4545, %v4235
  %4749 = vst.msk [vmem:[%s4 + $0x32c] sm:$0xf] %vm4545, %v4236
  %4750 = vst.msk [vmem:[%s4 + $0x330] sm:$0xf] %vm4545, %v4237
  %4751 = vst.msk [vmem:[%s4 + $0x334] sm:$0xf] %vm4545, %v4238
  %4752 = vst.msk [vmem:[%s4 + $0x338] sm:$0xf] %vm4545, %v4239
  %4753 = vst.msk [vmem:[%s4 + $0x33c] sm:$0xf] %vm4545, %v4240
  %4754 = vst.msk [vmem:[%s4 + $0x340] sm:$0xf] %vm4545, %v4241
  %4755 = vst.msk [vmem:[%s4 + $0x344] sm:$0xf] %vm4545, %v4242
  %4756 = vst.msk [vmem:[%s4 + $0x348] sm:$0xf] %vm4545, %v4243
  %4757 = vst.msk [vmem:[%s4 + $0x34c] sm:$0xf] %vm4545, %v4244
  %4758 = vst.msk [vmem:[%s4 + $0x350] sm:$0xf] %vm4545, %v4245
  %4759 = vst.msk [vmem:[%s4 + $0x354] sm:$0xf] %vm4545, %v4246
  %4760 = vst.msk [vmem:[%s4 + $0x358] sm:$0xf] %vm4545, %v4247
  %4761 = vst.msk [vmem:[%s4 + $0x35c] sm:$0xf] %vm4545, %v4248
  %4762 = vst.msk [vmem:[%s4 + $0x360] sm:$0xf] %vm4545, %v4249
  %4763 = vst.msk [vmem:[%s4 + $0x364] sm:$0xf] %vm4545, %v4250
  %4764 = vst.msk [vmem:[%s4 + $0x368] sm:$0xf] %vm4545, %v4251
  %4765 = vst.msk [vmem:[%s4 + $0x36c] sm:$0xf] %vm4545, %v4252
  %4766 = vst.msk [vmem:[%s4 + $0x370] sm:$0xf] %vm4545, %v4253
  %4767 = vst.msk [vmem:[%s4 + $0x374] sm:$0xf] %vm4545, %v4254
  %4768 = vst.msk [vmem:[%s4 + $0x378] sm:$0xf] %vm4545, %v4255
  %4769 = vst.msk [vmem:[%s4 + $0x37c] sm:$0xf] %vm4545, %v4256
  %4770 = vst.msk [vmem:[%s4 + $0x380] sm:$0xf] %vm4545, %v4257
  %4771 = vst.msk [vmem:[%s4 + $0x384] sm:$0xf] %vm4545, %v4258
  %4772 = vst.msk [vmem:[%s4 + $0x388] sm:$0xf] %vm4545, %v4259
  %4773 = vst.msk [vmem:[%s4 + $0x38c] sm:$0xf] %vm4545, %v4260
  %4774 = vst.msk [vmem:[%s4 + $0x390] sm:$0xf] %vm4545, %v4261
  %4775 = vst.msk [vmem:[%s4 + $0x394] sm:$0xf] %vm4545, %v4262
  %4776 = vst.msk [vmem:[%s4 + $0x398] sm:$0xf] %vm4545, %v4263
  %4777 = vst.msk [vmem:[%s4 + $0x39c] sm:$0xf] %vm4545, %v4264
  %4778 = vst.msk [vmem:[%s4 + $0x3a0] sm:$0xf] %vm4545, %v4265
  %4779 = vst.msk [vmem:[%s4 + $0x3a4] sm:$0xf] %vm4545, %v4266
  %4780 = vst.msk [vmem:[%s4 + $0x3a8] sm:$0xf] %vm4545, %v4267
  %4781 = vst.msk [vmem:[%s4 + $0x3ac] sm:$0xf] %vm4545, %v4268
  %4782 = vst.msk [vmem:[%s4 + $0x3b0] sm:$0xf] %vm4545, %v4269
  %4783 = vst.msk [vmem:[%s4 + $0x3b4] sm:$0xf] %vm4545, %v4270
  %4784 = vst.msk [vmem:[%s4 + $0x3b8] sm:$0xf] %vm4545, %v4271
  %4785 = vst.msk [vmem:[%s4 + $0x3bc] sm:$0xf] %vm4545, %v4272
  %4786 = vst.msk [vmem:[%s4 + $0x3c0] sm:$0xf] %vm4545, %v4273
  %4787 = vst.msk [vmem:[%s4 + $0x3c4] sm:$0xf] %vm4545, %v4274
  %4788 = vst.msk [vmem:[%s4 + $0x3c8] sm:$0xf] %vm4545, %v4275
  %4789 = vst.msk [vmem:[%s4 + $0x3cc] sm:$0xf] %vm4545, %v4276
  %4790 = vst.msk [vmem:[%s4 + $0x3d0] sm:$0xf] %vm4545, %v4277
  %4791 = vst.msk [vmem:[%s4 + $0x3d4] sm:$0xf] %vm4545, %v4278
  %4792 = vst.msk [vmem:[%s4 + $0x3d8] sm:$0xf] %vm4545, %v4279
  %4793 = vst.msk [vmem:[%s4 + $0x3dc] sm:$0xf] %vm4545, %v4280
  %4794 = vst.msk [vmem:[%s4 + $0x3e0] sm:$0xf] %vm4545, %v4281
  %4795 = vst.msk [vmem:[%s4 + $0x3e4] sm:$0xf] %vm4545, %v4282
  %4796 = vst.msk [vmem:[%s4 + $0x3e8] sm:$0xf] %vm4545, %v4283
  %4797 = vst.msk [vmem:[%s4 + $0x3ec] sm:$0xf] %vm4545, %v4284
  %4798 = vst.msk [vmem:[%s4 + $0x3f0] sm:$0xf] %vm4545, %v4285
  %4799 = vst.msk [vmem:[%s4 + $0x3f4] sm:$0xf] %vm4545, %v4286
  %4800 = vst.msk [vmem:[%s4 + $0x3f8] sm:$0xf] %vm4545, %v4287
  %4801 = vst.msk [vmem:[%s4 + $0x3fc] sm:$0xf] %vm4545, %v4288
  // Predicated region
  $region18: #{stem_pool.2} parent=0 // pred_check
    _
  $region19: #{stem_pool.2} parent=0 // pred_check_branch
    %4803 = sbr.rel (0) target = $region21
  $region20: #{stem_pool.2} parent=0 // pred_region
    _
  $region21: #{stem_pool.2} parent=0 // pred_fallthru
    _
  // Predicated region
  $region22: #{stem_pool.2} parent=0 // pred_check
    _
  $region23: #{stem_pool.2} parent=0 // pred_check_branch
    %4805 = sbr.rel (0) target = $region25
  $region24: #{stem_pool.2} parent=0 // pred_region
    _
  $region25: #{stem_pool.2} parent=0 // pred_fallthru
    _

// kernel: stem_pool.3
$region0: #{stem_pool.3}
  #allocation0 [shape = 'u32[]', space=smem, size = 0x4, offset = 0x4, fixed_abs, tag = 'smem constant byte address 0x4 - core index']
  #allocation1 [shape = 'u32[144,128]{1,0:T(1,128)}', space=vmem, size = 0x12000, scoped, tag = 'internal scratch']
  %s0 = inlined_call_operand.vmem [shape: bf16[9,32,1024], index: 0, kind: input, shape index: {}]
  %s1 = inlined_call_operand.vmem [shape: bf16[32,1024], index: 1, kind: output, shape index: {}]
  %s2 = sld [smem:[#allocation0]]
  $region14: #{stem_pool.3} parent=0
    _
  %s4 = ssub.s32 1, %s2
  %s5 = scalar_select 0, %s4, %s2
  // Predicated region
  $region2: #{stem_pool.3} parent=0 // pred_check
    _
  $region3: #{stem_pool.3} parent=0 // pred_check_branch
    %7 = sbr.rel (0) target = $region5
  $region4: #{stem_pool.3} parent=0 // pred_region
    _
  $region5: #{stem_pool.3} parent=0 // pred_fallthru
    _
  %v8 = vld [vmem:[%s0] sm:$0xff]
  %v9 = vld [vmem:[%s0 + $0x8] sm:$0xff]
  %v10 = vld [vmem:[%s0 + $0x10] sm:$0xff]
  %v11 = vld [vmem:[%s0 + $0x18] sm:$0xff]
  %v12 = vld [vmem:[%s0 + $0x20] sm:$0xff]
  %v13 = vld [vmem:[%s0 + $0x28] sm:$0xff]
  %v14 = vld [vmem:[%s0 + $0x30] sm:$0xff]
  %v15 = vld [vmem:[%s0 + $0x38] sm:$0xff]
  %v16 = vld [vmem:[%s0 + $0x40] sm:$0xff]
  %v17 = vld [vmem:[%s0 + $0x48] sm:$0xff]
  %v18 = vld [vmem:[%s0 + $0x50] sm:$0xff]
  %v19 = vld [vmem:[%s0 + $0x58] sm:$0xff]
  %v20 = vld [vmem:[%s0 + $0x60] sm:$0xff]
  %v21 = vld [vmem:[%s0 + $0x68] sm:$0xff]
  %v22 = vld [vmem:[%s0 + $0x70] sm:$0xff]
  %v23 = vld [vmem:[%s0 + $0x78] sm:$0xff]
  %v24 = vld [vmem:[%s0 + $0x80] sm:$0xff]
  %v25 = vld [vmem:[%s0 + $0x88] sm:$0xff]
  %v26 = vld [vmem:[%s0 + $0x90] sm:$0xff]
  %v27 = vld [vmem:[%s0 + $0x98] sm:$0xff]
  %v28 = vld [vmem:[%s0 + $0xa0] sm:$0xff]
  %v29 = vld [vmem:[%s0 + $0xa8] sm:$0xff]
  %v30 = vld [vmem:[%s0 + $0xb0] sm:$0xff]
  %v31 = vld [vmem:[%s0 + $0xb8] sm:$0xff]
  %v32 = vld [vmem:[%s0 + $0xc0] sm:$0xff]
  %v33 = vld [vmem:[%s0 + $0xc8] sm:$0xff]
  %v34 = vld [vmem:[%s0 + $0xd0] sm:$0xff]
  %v35 = vld [vmem:[%s0 + $0xd8] sm:$0xff]
  %v36 = vld [vmem:[%s0 + $0xe0] sm:$0xff]
  %v37 = vld [vmem:[%s0 + $0xe8] sm:$0xff]
  %v38 = vld [vmem:[%s0 + $0xf0] sm:$0xff]
  %v39 = vld [vmem:[%s0 + $0xf8] sm:$0xff]
  %v40 = vld [vmem:[%s0 + $0x100] sm:$0xff]
  %v41 = vld [vmem:[%s0 + $0x108] sm:$0xff]
  %v42 = vld [vmem:[%s0 + $0x110] sm:$0xff]
  %v43 = vld [vmem:[%s0 + $0x118] sm:$0xff]
  %v44 = vld [vmem:[%s0 + $0x120] sm:$0xff]
  %v45 = vld [vmem:[%s0 + $0x128] sm:$0xff]
  %v46 = vld [vmem:[%s0 + $0x130] sm:$0xff]
  %v47 = vld [vmem:[%s0 + $0x138] sm:$0xff]
  %v48 = vld [vmem:[%s0 + $0x140] sm:$0xff]
  %v49 = vld [vmem:[%s0 + $0x148] sm:$0xff]
  %v50 = vld [vmem:[%s0 + $0x150] sm:$0xff]
  %v51 = vld [vmem:[%s0 + $0x158] sm:$0xff]
  %v52 = vld [vmem:[%s0 + $0x160] sm:$0xff]
  %v53 = vld [vmem:[%s0 + $0x168] sm:$0xff]
  %v54 = vld [vmem:[%s0 + $0x170] sm:$0xff]
  %v55 = vld [vmem:[%s0 + $0x178] sm:$0xff]
  %v56 = vld [vmem:[%s0 + $0x180] sm:$0xff]
  %v57 = vld [vmem:[%s0 + $0x188] sm:$0xff]
  %v58 = vld [vmem:[%s0 + $0x190] sm:$0xff]
  %v59 = vld [vmem:[%s0 + $0x198] sm:$0xff]
  %v60 = vld [vmem:[%s0 + $0x1a0] sm:$0xff]
  %v61 = vld [vmem:[%s0 + $0x1a8] sm:$0xff]
  %v62 = vld [vmem:[%s0 + $0x1b0] sm:$0xff]
  %v63 = vld [vmem:[%s0 + $0x1b8] sm:$0xff]
  %v64 = vld [vmem:[%s0 + $0x1c0] sm:$0xff]
  %v65 = vld [vmem:[%s0 + $0x1c8] sm:$0xff]
  %v66 = vld [vmem:[%s0 + $0x1d0] sm:$0xff]
  %v67 = vld [vmem:[%s0 + $0x1d8] sm:$0xff]
  %v68 = vld [vmem:[%s0 + $0x1e0] sm:$0xff]
  %v69 = vld [vmem:[%s0 + $0x1e8] sm:$0xff]
  %v70 = vld [vmem:[%s0 + $0x1f0] sm:$0xff]
  %v71 = vld [vmem:[%s0 + $0x1f8] sm:$0xff]
  %v72 = vld [vmem:[%s0 + $0x200] sm:$0xff]
  %v73 = vld [vmem:[%s0 + $0x208] sm:$0xff]
  %v74 = vld [vmem:[%s0 + $0x210] sm:$0xff]
  %v75 = vld [vmem:[%s0 + $0x218] sm:$0xff]
  %v76 = vld [vmem:[%s0 + $0x220] sm:$0xff]
  %v77 = vld [vmem:[%s0 + $0x228] sm:$0xff]
  %v78 = vld [vmem:[%s0 + $0x230] sm:$0xff]
  %v79 = vld [vmem:[%s0 + $0x238] sm:$0xff]
  %v80 = vld [vmem:[%s0 + $0x240] sm:$0xff]
  %v81 = vld [vmem:[%s0 + $0x248] sm:$0xff]
  %v82 = vld [vmem:[%s0 + $0x250] sm:$0xff]
  %v83 = vld [vmem:[%s0 + $0x258] sm:$0xff]
  %v84 = vld [vmem:[%s0 + $0x260] sm:$0xff]
  %v85 = vld [vmem:[%s0 + $0x268] sm:$0xff]
  %v86 = vld [vmem:[%s0 + $0x270] sm:$0xff]
  %v87 = vld [vmem:[%s0 + $0x278] sm:$0xff]
  %v88 = vld [vmem:[%s0 + $0x280] sm:$0xff]
  %v89 = vld [vmem:[%s0 + $0x288] sm:$0xff]
  %v90 = vld [vmem:[%s0 + $0x290] sm:$0xff]
  %v91 = vld [vmem:[%s0 + $0x298] sm:$0xff]
  %v92 = vld [vmem:[%s0 + $0x2a0] sm:$0xff]
  %v93 = vld [vmem:[%s0 + $0x2a8] sm:$0xff]
  %v94 = vld [vmem:[%s0 + $0x2b0] sm:$0xff]
  %v95 = vld [vmem:[%s0 + $0x2b8] sm:$0xff]
  %v96 = vld [vmem:[%s0 + $0x2c0] sm:$0xff]
  %v97 = vld [vmem:[%s0 + $0x2c8] sm:$0xff]
  %v98 = vld [vmem:[%s0 + $0x2d0] sm:$0xff]
  %v99 = vld [vmem:[%s0 + $0x2d8] sm:$0xff]
  %v100 = vld [vmem:[%s0 + $0x2e0] sm:$0xff]
  %v101 = vld [vmem:[%s0 + $0x2e8] sm:$0xff]
  %v102 = vld [vmem:[%s0 + $0x2f0] sm:$0xff]
  %v103 = vld [vmem:[%s0 + $0x2f8] sm:$0xff]
  %v104 = vld [vmem:[%s0 + $0x300] sm:$0xff]
  %v105 = vld [vmem:[%s0 + $0x308] sm:$0xff]
  %v106 = vld [vmem:[%s0 + $0x310] sm:$0xff]
  %v107 = vld [vmem:[%s0 + $0x318] sm:$0xff]
  %v108 = vld [vmem:[%s0 + $0x320] sm:$0xff]
  %v109 = vld [vmem:[%s0 + $0x328] sm:$0xff]
  %v110 = vld [vmem:[%s0 + $0x330] sm:$0xff]
  %v111 = vld [vmem:[%s0 + $0x338] sm:$0xff]
  %v112 = vld [vmem:[%s0 + $0x340] sm:$0xff]
  %v113 = vld [vmem:[%s0 + $0x348] sm:$0xff]
  %v114 = vld [vmem:[%s0 + $0x350] sm:$0xff]
  %v115 = vld [vmem:[%s0 + $0x358] sm:$0xff]
  %v116 = vld [vmem:[%s0 + $0x360] sm:$0xff]
  %v117 = vld [vmem:[%s0 + $0x368] sm:$0xff]
  %v118 = vld [vmem:[%s0 + $0x370] sm:$0xff]
  %v119 = vld [vmem:[%s0 + $0x378] sm:$0xff]
  %v120 = vld [vmem:[%s0 + $0x380] sm:$0xff]
  %v121 = vld [vmem:[%s0 + $0x388] sm:$0xff]
  %v122 = vld [vmem:[%s0 + $0x390] sm:$0xff]
  %v123 = vld [vmem:[%s0 + $0x398] sm:$0xff]
  %v124 = vld [vmem:[%s0 + $0x3a0] sm:$0xff]
  %v125 = vld [vmem:[%s0 + $0x3a8] sm:$0xff]
  %v126 = vld [vmem:[%s0 + $0x3b0] sm:$0xff]
  %v127 = vld [vmem:[%s0 + $0x3b8] sm:$0xff]
  %v128 = vld [vmem:[%s0 + $0x3c0] sm:$0xff]
  %v129 = vld [vmem:[%s0 + $0x3c8] sm:$0xff]
  %v130 = vld [vmem:[%s0 + $0x3d0] sm:$0xff]
  %v131 = vld [vmem:[%s0 + $0x3d8] sm:$0xff]
  %v132 = vld [vmem:[%s0 + $0x3e0] sm:$0xff]
  %v133 = vld [vmem:[%s0 + $0x3e8] sm:$0xff]
  %v134 = vld [vmem:[%s0 + $0x3f0] sm:$0xff]
  %v135 = vld [vmem:[%s0 + $0x3f8] sm:$0xff]
  %v136 = vld [vmem:[%s0 + $0x400] sm:$0xff]
  %v137 = vld [vmem:[%s0 + $0x408] sm:$0xff]
  %v138 = vld [vmem:[%s0 + $0x410] sm:$0xff]
  %v139 = vld [vmem:[%s0 + $0x418] sm:$0xff]
  %v140 = vld [vmem:[%s0 + $0x420] sm:$0xff]
  %v141 = vld [vmem:[%s0 + $0x428] sm:$0xff]
  %v142 = vld [vmem:[%s0 + $0x430] sm:$0xff]
  %v143 = vld [vmem:[%s0 + $0x438] sm:$0xff]
  %v144 = vld [vmem:[%s0 + $0x440] sm:$0xff]
  %v145 = vld [vmem:[%s0 + $0x448] sm:$0xff]
  %v146 = vld [vmem:[%s0 + $0x450] sm:$0xff]
  %v147 = vld [vmem:[%s0 + $0x458] sm:$0xff]
  %v148 = vld [vmem:[%s0 + $0x460] sm:$0xff]
  %v149 = vld [vmem:[%s0 + $0x468] sm:$0xff]
  %v150 = vld [vmem:[%s0 + $0x470] sm:$0xff]
  %v151 = vld [vmem:[%s0 + $0x478] sm:$0xff]
  %v152 = vmax.bf16 %v8, %v24
  %v153 = vmax.bf16 %v152, %v40
  %v154 = vmax.bf16 %v153, %v56
  %v155 = vmax.bf16 %v154, %v72
  %v156 = vmax.bf16 %v155, %v88
  %v157 = vmax.bf16 %v156, %v104
  %v158 = vmax.bf16 %v157, %v120
  %v159 = vmax.bf16 %v158, %v136
  %v160 = vmax.bf16 %v9, %v25
  %v161 = vmax.bf16 %v160, %v41
  %v162 = vmax.bf16 %v161, %v57
  %v163 = vmax.bf16 %v162, %v73
  %v164 = vmax.bf16 %v163, %v89
  %v165 = vmax.bf16 %v164, %v105
  %v166 = vmax.bf16 %v165, %v121
  %v167 = vmax.bf16 %v166, %v137
  %v168 = vmax.bf16 %v10, %v26
  %v169 = vmax.bf16 %v168, %v42
  %v170 = vmax.bf16 %v169, %v58
  %v171 = vmax.bf16 %v170, %v74
  %v172 = vmax.bf16 %v171, %v90
  %v173 = vmax.bf16 %v172, %v106
  %v174 = vmax.bf16 %v173, %v122
  %v175 = vmax.bf16 %v174, %v138
  %v176 = vmax.bf16 %v11, %v27
  %v177 = vmax.bf16 %v176, %v43
  %v178 = vmax.bf16 %v177, %v59
  %v179 = vmax.bf16 %v178, %v75
  %v180 = vmax.bf16 %v179, %v91
  %v181 = vmax.bf16 %v180, %v107
  %v182 = vmax.bf16 %v181, %v123
  %v183 = vmax.bf16 %v182, %v139
  %v184 = vmax.bf16 %v12, %v28
  %v185 = vmax.bf16 %v184, %v44
  %v186 = vmax.bf16 %v185, %v60
  %v187 = vmax.bf16 %v186, %v76
  %v188 = vmax.bf16 %v187, %v92
  %v189 = vmax.bf16 %v188, %v108
  %v190 = vmax.bf16 %v189, %v124
  %v191 = vmax.bf16 %v190, %v140
  %v192 = vmax.bf16 %v13, %v29
  %v193 = vmax.bf16 %v192, %v45
  %v194 = vmax.bf16 %v193, %v61
  %v195 = vmax.bf16 %v194, %v77
  %v196 = vmax.bf16 %v195, %v93
  %v197 = vmax.bf16 %v196, %v109
  %v198 = vmax.bf16 %v197, %v125
  %v199 = vmax.bf16 %v198, %v141
  %v200 = vmax.bf16 %v14, %v30
  %v201 = vmax.bf16 %v200, %v46
  %v202 = vmax.bf16 %v201, %v62
  %v203 = vmax.bf16 %v202, %v78
  %v204 = vmax.bf16 %v203, %v94
  %v205 = vmax.bf16 %v204, %v110
  %v206 = vmax.bf16 %v205, %v126
  %v207 = vmax.bf16 %v206, %v142
  %v208 = vmax.bf16 %v15, %v31
  %v209 = vmax.bf16 %v208, %v47
  %v210 = vmax.bf16 %v209, %v63
  %v211 = vmax.bf16 %v210, %v79
  %v212 = vmax.bf16 %v211, %v95
  %v213 = vmax.bf16 %v212, %v111
  %v214 = vmax.bf16 %v213, %v127
  %v215 = vmax.bf16 %v214, %v143
  %v216 = vmax.bf16 %v16, %v32
  %v217 = vmax.bf16 %v216, %v48
  %v218 = vmax.bf16 %v217, %v64
  %v219 = vmax.bf16 %v218, %v80
  %v220 = vmax.bf16 %v219, %v96
  %v221 = vmax.bf16 %v220, %v112
  %v222 = vmax.bf16 %v221, %v128
  %v223 = vmax.bf16 %v222, %v144
  %v224 = vmax.bf16 %v17, %v33
  %v225 = vmax.bf16 %v224, %v49
  %v226 = vmax.bf16 %v225, %v65
  %v227 = vmax.bf16 %v226, %v81
  %v228 = vmax.bf16 %v227, %v97
  %v229 = vmax.bf16 %v228, %v113
  %v230 = vmax.bf16 %v229, %v129
  %v231 = vmax.bf16 %v230, %v145
  %v232 = vmax.bf16 %v18, %v34
  %v233 = vmax.bf16 %v232, %v50
  %v234 = vmax.bf16 %v233, %v66
  %v235 = vmax.bf16 %v234, %v82
  %v236 = vmax.bf16 %v235, %v98
  %v237 = vmax.bf16 %v236, %v114
  %v238 = vmax.bf16 %v237, %v130
  %v239 = vmax.bf16 %v238, %v146
  %v240 = vmax.bf16 %v19, %v35
  %v241 = vmax.bf16 %v240, %v51
  %v242 = vmax.bf16 %v241, %v67
  %v243 = vmax.bf16 %v242, %v83
  %v244 = vmax.bf16 %v243, %v99
  %v245 = vmax.bf16 %v244, %v115
  %v246 = vmax.bf16 %v245, %v131
  %v247 = vmax.bf16 %v246, %v147
  %v248 = vmax.bf16 %v20, %v36
  %v249 = vmax.bf16 %v248, %v52
  %v250 = vmax.bf16 %v249, %v68
  %v251 = vmax.bf16 %v250, %v84
  %v252 = vmax.bf16 %v251, %v100
  %v253 = vmax.bf16 %v252, %v116
  %v254 = vmax.bf16 %v253, %v132
  %v255 = vmax.bf16 %v254, %v148
  %v256 = vmax.bf16 %v21, %v37
  %v257 = vmax.bf16 %v256, %v53
  %v258 = vmax.bf16 %v257, %v69
  %v259 = vmax.bf16 %v258, %v85
  %v260 = vmax.bf16 %v259, %v101
  %v261 = vmax.bf16 %v260, %v117
  %v262 = vmax.bf16 %v261, %v133
  %v263 = vmax.bf16 %v262, %v149
  %v264 = vmax.bf16 %v22, %v38
  %v265 = vmax.bf16 %v264, %v54
  %v266 = vmax.bf16 %v265, %v70
  %v267 = vmax.bf16 %v266, %v86
  %v268 = vmax.bf16 %v267, %v102
  %v269 = vmax.bf16 %v268, %v118
  %v270 = vmax.bf16 %v269, %v134
  %v271 = vmax.bf16 %v270, %v150
  %v272 = vmax.bf16 %v23, %v39
  %v273 = vmax.bf16 %v272, %v55
  %v274 = vmax.bf16 %v273, %v71
  %v275 = vmax.bf16 %v274, %v87
  %v276 = vmax.bf16 %v275, %v103
  %v277 = vmax.bf16 %v276, %v119
  %v278 = vmax.bf16 %v277, %v135
  %v279 = vmax.bf16 %v278, %v151
  %280 = vst [vmem:[%s1] sm:$0xff] %v159
  %281 = vst [vmem:[%s1 + $0x8] sm:$0xff] %v167
  %282 = vst [vmem:[%s1 + $0x10] sm:$0xff] %v175
  %283 = vst [vmem:[%s1 + $0x18] sm:$0xff] %v183
  %284 = vst [vmem:[%s1 + $0x20] sm:$0xff] %v191
  %285 = vst [vmem:[%s1 + $0x28] sm:$0xff] %v199
  %286 = vst [vmem:[%s1 + $0x30] sm:$0xff] %v207
  %287 = vst [vmem:[%s1 + $0x38] sm:$0xff] %v215
  %288 = vst [vmem:[%s1 + $0x40] sm:$0xff] %v223
  %289 = vst [vmem:[%s1 + $0x48] sm:$0xff] %v231
  %290 = vst [vmem:[%s1 + $0x50] sm:$0xff] %v239
  %291 = vst [vmem:[%s1 + $0x58] sm:$0xff] %v247
  %292 = vst [vmem:[%s1 + $0x60] sm:$0xff] %v255
  %293 = vst [vmem:[%s1 + $0x68] sm:$0xff] %v263
  %294 = vst [vmem:[%s1 + $0x70] sm:$0xff] %v271
  %295 = vst [vmem:[%s1 + $0x78] sm:$0xff] %v279
  // Predicated region
  $region6: #{stem_pool.3} parent=0 // pred_check
    _
  $region7: #{stem_pool.3} parent=0 // pred_check_branch
    %297 = sbr.rel (0) target = $region9
  $region8: #{stem_pool.3} parent=0 // pred_region
    _
  $region9: #{stem_pool.3} parent=0 // pred_fallthru
    _
  // Predicated region
  $region10: #{stem_pool.3} parent=0 // pred_check
    _
  $region11: #{stem_pool.3} parent=0 // pred_check_branch
    %299 = sbr.rel (0) target = $region13
  $region12: #{stem_pool.3} parent=0 // pred_region
    _
  $region13: #{stem_pool.3} parent=0 // pred_fallthru
    _

</llo_original>
